<compile_context>
chip_gen: v7x
topology: tpu7x:2x2x1
jax: 0.10.0
libtpu: 0.0.40
codegen_flags: <defaults>
</compile_context>

<pallas_src>
import jax
import jax.numpy as jnp
from jax import lax
from jax.experimental import pallas as pl
from jax.experimental.pallas import tpu as pltpu


# ------------------------------ static sizes --------------------------------

KH = KW = 7
STRIDE = 2
PAD = 3
CIN = 3
C_STEM = 64                 # densenet121 stem conv output channels
C_STEM_PAD = 128            # lane-dense padding of stem channels
K_RAW = CIN * KH * KW       # 147 (im2col contraction dim)
K_PAD = 256                 # contraction dim padded to a multiple of 128
N_BACKBONE = 1000
N_BACKBONE_PAD = 1024
N_CLASSES = 17


# ----------------------------- fused Pallas kernel ---------------------------

def fused_stem_pool_head_kernel(patch_ref, ws_ref, bs_ref, pool_ref,
                                wc_ref, bc_ref, w1_ref, b1_ref,
                                w2_ref, b2_ref, w3_ref, b3_ref, o_ref):
    # Stem conv as im2col matmul: (R, 256) bf16 @ (256, 128) bf16 -> f32, +bias, ReLU.
    fm = jnp.dot(patch_ref[...], ws_ref[...], preferred_element_type=jnp.float32)
    fm = jnp.maximum(fm + bs_ref[...], 0.0)                          # (R, 128), VMEM resident

    # Global average pool as an MXU matmul with a per-batch averaging matrix
    # (avoids a cross-sublane XLU reduce and any HBM writeback of fm).
    pooled = jnp.dot(pool_ref[...], fm, preferred_element_type=jnp.float32)   # (B, 128)

    # Backbone classifier stand-in (64->1000, zero-padded to 128->1024).
    x = jnp.dot(pooled, wc_ref[...], preferred_element_type=jnp.float32) + bc_ref[...]
    # Explicit head: Linear(1000,512)+ReLU -> Linear(512,128)+ReLU -> Linear(128,17).
    x = jnp.maximum(
        jnp.dot(x, w1_ref[...], preferred_element_type=jnp.float32) + b1_ref[...], 0.0)
    x = jnp.maximum(
        jnp.dot(x, w2_ref[...], preferred_element_type=jnp.float32) + b2_ref[...], 0.0)
    logits = jnp.dot(x, w3_ref[...], preferred_element_type=jnp.float32) + b3_ref[...]

    # nn.Softmax() on a 2-D input resolves to dim=1 (the last dim here); stable softmax.
    m = jnp.max(logits, axis=-1, keepdims=True)
    e = jnp.exp(logits - m)
    o_ref[...] = e / jnp.sum(e, axis=-1, keepdims=True)


def fused_forward(patches, pool_mat, p):
    B = pool_mat.shape[0]
    args = (patches, p["w_stem"], p["b_stem"], pool_mat,
            p["wc"], p["bc"], p["w1"], p["b1"],
            p["w2"], p["b2"], p["w3"], p["b3"])
    # Whole problem is a single VMEM-resident block: ~3.4 MB of operands
    # (patches 256 KB bf16, w1 2 MB f32, rest small) + a 256 KB fm temp —
    # far below the 64 MiB (v7x) / 128 MiB (v5e/v6e) VMEM, so no grid or
    # tiling is needed and one launch covers stem + pool + head.
    return pl.pallas_call(
        fused_stem_pool_head_kernel,
        out_shape=jax.ShapeDtypeStruct((B, N_CLASSES), jnp.float32),
        compiler_params=pltpu.CompilerParams(vmem_limit_bytes=32 * 1024 * 1024),
    )(*args)


# ------------------------------ patch extraction -----------------------------

def extract_patches(images_bf16):
    """NCHW bf16 images -> (B*OH*OW, K_PAD) bf16 patch rows (lane-dense K, zero-padded)."""
    B, C, _, _ = images_bf16.shape
    patches = lax.conv_general_dilated_patches(
        images_bf16,
        filter_shape=(KH, KW),
        window_strides=(STRIDE, STRIDE),
        padding=((PAD, PAD), (PAD, PAD)),
        dimension_numbers=("NCHW", "OIHW", "NHWC"),
    )                                                    # (B, OH, OW, C*KH*KW)
    OH, OW = patches.shape[1], patches.shape[2]
    patches = patches.reshape(B * OH * OW, C * KH * KW)  # contiguous, no transpose
    patches = jnp.pad(patches, ((0, 0), (0, K_PAD - C * KH * KW)))
    return patches, OH, OW


# ------------------------------ params & forward -----------------------------

def init_params(key):
    def linear(k, fan_in, fan_out, pad_in=None, pad_out=None, w_dtype=jnp.float32):
        bound = 1.0 / jnp.sqrt(jnp.float32(fan_in))
        kw_, kb_ = jax.random.split(k)
        w = jax.random.uniform(kw_, (fan_in, fan_out), jnp.float32, -bound, bound)
        b = jax.random.uniform(kb_, (1, fan_out), jnp.float32, -bound, bound)
        pi = pad_in if pad_in is not None else fan_in
        po = pad_out if pad_out is not None else fan_out
        w = jnp.pad(w, ((0, pi - fan_in), (0, po - fan_out))).astype(w_dtype)
        b = jnp.pad(b, ((0, 0), (0, po - fan_out))).astype(jnp.float32)
        return w, b

    ks = jax.random.split(key, 5)
    p = {}
    # Stem conv as matmul: bf16 operands (f32 accumulate in kernel), lane-dense pads.
    p["w_stem"], p["b_stem"] = linear(ks[0], K_RAW, C_STEM,
                                      pad_in=K_PAD, pad_out=C_STEM_PAD,
                                      w_dtype=jnp.bfloat16)
    # Backbone classifier stand-in (64 -> 1000), zero-padded to 128 -> 1024.
    p["wc"], p["bc"] = linear(ks[1], C_STEM, N_BACKBONE,
                              pad_in=C_STEM_PAD, pad_out=N_BACKBONE_PAD)
    p["w1"], p["b1"] = linear(ks[2], N_BACKBONE, 512, pad_in=N_BACKBONE_PAD)
    p["w2"], p["b2"] = linear(ks[3], 512, 128)
    p["w3"], p["b3"] = linear(ks[4], 128, N_CLASSES)
    return p


def model_forward(images, params):
    B = images.shape[0]
    patches, OH, OW = extract_patches(images.astype(jnp.bfloat16))
    HW = OH * OW
    R = B * HW
    # Per-batch averaging matrix (B, R): pool_mat[b, r] = 1/HW if row r belongs
    # to batch b. Constant-folded at compile time (depends only on static shapes).
    row_batch = jnp.arange(R, dtype=jnp.int32) // HW
    pool_mat = (row_batch[None, :] == jnp.arange(B, dtype=jnp.int32)[:, None]
                ).astype(jnp.float32) * (1.0 / HW)
    probs = fused_forward(patches, pool_mat, params)      # (B, 17)
    # .squeeze(1) in the reference is a no-op: dim 1 has size 17 != 1.
    return probs


# ----------------------------------- main ------------------------------------

if __name__ == "__main__":
    key = jax.random.PRNGKey(0)
    k_img, k_par = jax.random.split(key)
    images = jax.random.normal(k_img, (2, 3, 32, 32), dtype=jnp.float32)  # NCHW
    params = init_params(k_par)

    out = jax.jit(model_forward)(images, params)
    out = jax.block_until_ready(out)

    assert out.shape == (2, 17), out.shape
    assert bool(jnp.all(jnp.isfinite(out)))
    row_sums = jnp.sum(out, axis=-1)
    assert bool(jnp.all(jnp.abs(row_sums - 1.0) < 1e-4)), row_sums
    print("KERNEL_OK")
</pallas_src>

<mosaic_0001>
module attributes {stable_mosaic.version = 11 : i64} {
  func.func @fused_stem_pool_head_kernel(%arg0: memref<512x256xbf16, #tpu.memory_space<vmem>>, %arg1: memref<256x128xbf16, #tpu.memory_space<vmem>>, %arg2: memref<1x128xf32, #tpu.memory_space<vmem>>, %arg3: memref<2x512xf32, #tpu.memory_space<vmem>>, %arg4: memref<128x1024xf32, #tpu.memory_space<vmem>>, %arg5: memref<1x1024xf32, #tpu.memory_space<vmem>>, %arg6: memref<1024x512xf32, #tpu.memory_space<vmem>>, %arg7: memref<1x512xf32, #tpu.memory_space<vmem>>, %arg8: memref<512x128xf32, #tpu.memory_space<vmem>>, %arg9: memref<1x128xf32, #tpu.memory_space<vmem>>, %arg10: memref<128x17xf32, #tpu.memory_space<vmem>>, %arg11: memref<1x17xf32, #tpu.memory_space<vmem>>, %arg12: memref<2x17xf32, #tpu.memory_space<vmem>>) attributes {dimension_semantics = [], scalar_prefetch = 0 : i64, scratch_operands = 0 : i64, tpu.core_type = #tpu.core_type<tc>} {
    %c0 = arith.constant 0 : index
    %c0_0 = arith.constant 0 : index
    %0 = vector.load %arg0[%c0, %c0_0] : memref<512x256xbf16, #tpu.memory_space<vmem>>, vector<512x256xbf16>
    %c0_1 = arith.constant 0 : index
    %c0_2 = arith.constant 0 : index
    %1 = vector.load %arg1[%c0_1, %c0_2] : memref<256x128xbf16, #tpu.memory_space<vmem>>, vector<256x128xbf16>
    %cst = arith.constant dense<0.000000e+00> : vector<512x128xf32>
    %2 = tpu.matmul %0, %1, %cst {dimension_numbers = #tpu.dot_dimension_numbers<[1], [0], [0], [1], [0, 0, 1, 1], [], []>} : vector<512x256xbf16>, vector<256x128xbf16>, vector<512x128xf32> -> vector<512x128xf32>
    %c0_3 = arith.constant 0 : index
    %c0_4 = arith.constant 0 : index
    %3 = vector.load %arg2[%c0_3, %c0_4] : memref<1x128xf32, #tpu.memory_space<vmem>>, vector<1x128xf32>
    %4 = vector.broadcast %3 : vector<1x128xf32> to vector<512x128xf32>
    %5 = arith.addf %2, %4 : vector<512x128xf32>
    %cst_5 = arith.constant 0.000000e+00 : f32
    %6 = vector.broadcast %cst_5 : f32 to vector<512x128xf32>
    %7 = arith.maximumf %5, %6 : vector<512x128xf32>
    %c0_6 = arith.constant 0 : index
    %c0_7 = arith.constant 0 : index
    %8 = vector.load %arg3[%c0_6, %c0_7] : memref<2x512xf32, #tpu.memory_space<vmem>>, vector<2x512xf32>
    %cst_8 = arith.constant dense<0.000000e+00> : vector<2x128xf32>
    %9 = tpu.matmul %8, %7, %cst_8 {dimension_numbers = #tpu.dot_dimension_numbers<[1], [0], [0], [1], [0, 0, 1, 1], [], []>} : vector<2x512xf32>, vector<512x128xf32>, vector<2x128xf32> -> vector<2x128xf32>
    %c0_9 = arith.constant 0 : index
    %c0_10 = arith.constant 0 : index
    %10 = vector.load %arg4[%c0_9, %c0_10] : memref<128x1024xf32, #tpu.memory_space<vmem>>, vector<128x1024xf32>
    %cst_11 = arith.constant dense<0.000000e+00> : vector<2x1024xf32>
    %11 = tpu.matmul %9, %10, %cst_11 {dimension_numbers = #tpu.dot_dimension_numbers<[1], [0], [0], [1], [0, 0, 1, 1], [], []>} : vector<2x128xf32>, vector<128x1024xf32>, vector<2x1024xf32> -> vector<2x1024xf32>
    %c0_12 = arith.constant 0 : index
    %c0_13 = arith.constant 0 : index
    %12 = vector.load %arg5[%c0_12, %c0_13] : memref<1x1024xf32, #tpu.memory_space<vmem>>, vector<1x1024xf32>
    %13 = vector.broadcast %12 : vector<1x1024xf32> to vector<2x1024xf32>
    %14 = arith.addf %11, %13 : vector<2x1024xf32>
    %c0_14 = arith.constant 0 : index
    %c0_15 = arith.constant 0 : index
    %15 = vector.load %arg6[%c0_14, %c0_15] : memref<1024x512xf32, #tpu.memory_space<vmem>>, vector<1024x512xf32>
    %cst_16 = arith.constant dense<0.000000e+00> : vector<2x512xf32>
    %16 = tpu.matmul %14, %15, %cst_16 {dimension_numbers = #tpu.dot_dimension_numbers<[1], [0], [0], [1], [0, 0, 1, 1], [], []>} : vector<2x1024xf32>, vector<1024x512xf32>, vector<2x512xf32> -> vector<2x512xf32>
    %c0_17 = arith.constant 0 : index
    %c0_18 = arith.constant 0 : index
    %17 = vector.load %arg7[%c0_17, %c0_18] : memref<1x512xf32, #tpu.memory_space<vmem>>, vector<1x512xf32>
    %18 = vector.broadcast %17 : vector<1x512xf32> to vector<2x512xf32>
    %19 = arith.addf %16, %18 : vector<2x512xf32>
    %cst_19 = arith.constant 0.000000e+00 : f32
    %20 = vector.broadcast %cst_19 : f32 to vector<2x512xf32>
    %21 = arith.maximumf %19, %20 : vector<2x512xf32>
    %c0_20 = arith.constant 0 : index
    %c0_21 = arith.constant 0 : index
    %22 = vector.load %arg8[%c0_20, %c0_21] : memref<512x128xf32, #tpu.memory_space<vmem>>, vector<512x128xf32>
    %cst_22 = arith.constant dense<0.000000e+00> : vector<2x128xf32>
    %23 = tpu.matmul %21, %22, %cst_22 {dimension_numbers = #tpu.dot_dimension_numbers<[1], [0], [0], [1], [0, 0, 1, 1], [], []>} : vector<2x512xf32>, vector<512x128xf32>, vector<2x128xf32> -> vector<2x128xf32>
    %c0_23 = arith.constant 0 : index
    %c0_24 = arith.constant 0 : index
    %24 = vector.load %arg9[%c0_23, %c0_24] : memref<1x128xf32, #tpu.memory_space<vmem>>, vector<1x128xf32>
    %25 = vector.broadcast %24 : vector<1x128xf32> to vector<2x128xf32>
    %26 = arith.addf %23, %25 : vector<2x128xf32>
    %cst_25 = arith.constant 0.000000e+00 : f32
    %27 = vector.broadcast %cst_25 : f32 to vector<2x128xf32>
    %28 = arith.maximumf %26, %27 : vector<2x128xf32>
    %c0_26 = arith.constant 0 : index
    %c0_27 = arith.constant 0 : index
    %29 = vector.load %arg10[%c0_26, %c0_27] : memref<128x17xf32, #tpu.memory_space<vmem>>, vector<128x17xf32>
    %cst_28 = arith.constant dense<0.000000e+00> : vector<2x17xf32>
    %30 = tpu.matmul %28, %29, %cst_28 {dimension_numbers = #tpu.dot_dimension_numbers<[1], [0], [0], [1], [0, 0, 1, 1], [], []>} : vector<2x128xf32>, vector<128x17xf32>, vector<2x17xf32> -> vector<2x17xf32>
    %c0_29 = arith.constant 0 : index
    %c0_30 = arith.constant 0 : index
    %31 = vector.load %arg11[%c0_29, %c0_30] : memref<1x17xf32, #tpu.memory_space<vmem>>, vector<1x17xf32>
    %32 = vector.broadcast %31 : vector<1x17xf32> to vector<2x17xf32>
    %33 = arith.addf %30, %32 : vector<2x17xf32>
    %cst_31 = arith.constant dense<0xFF800000> : vector<2xf32>
    %34 = vector.multi_reduction <maximumf>, %33, %cst_31 [1] : vector<2x17xf32> to vector<2xf32>
    %35 = vector.shape_cast %34 : vector<2xf32> to vector<2x1xf32>
    %36 = vector.broadcast %35 : vector<2x1xf32> to vector<2x17xf32>
    %37 = arith.subf %33, %36 : vector<2x17xf32>
    %38 = math.exp %37 : vector<2x17xf32>
    %cst_32 = arith.constant dense<0.000000e+00> : vector<2xf32>
    %39 = vector.multi_reduction <add>, %38, %cst_32 [1] : vector<2x17xf32> to vector<2xf32>
    %40 = vector.shape_cast %39 : vector<2xf32> to vector<2x1xf32>
    %41 = vector.broadcast %40 : vector<2x1xf32> to vector<2x17xf32>
    %42 = arith.divf %38, %41 : vector<2x17xf32>
    %c0_33 = arith.constant 0 : index
    %c0_34 = arith.constant 0 : index
    %43 = vector.load %arg12[%c0_33, %c0_34] : memref<2x17xf32, #tpu.memory_space<vmem>>, vector<2x17xf32>
    tpu.vector_store %arg12[%c0_33, %c0_34], %42 {strides = array<i32>} : memref<2x17xf32, #tpu.memory_space<vmem>>, vector<2x17xf32>,
    return
  }
}

</mosaic_0001>

<llo_original>
// kernel: model_forward.1
$region0: #{model_forward.1}
  #allocation0 [shape = 'u32[]', space=smem, size = 0x4, offset = 0x4, fixed_abs, tag = 'smem constant byte address 0x4 - core index']
  #allocation1 [shape = 'u32[144,128]{1,0:T(1,128)}', space=vmem, size = 0x12000, scoped, tag = 'internal scratch']
  %s0 = inlined_call_operand.vmem [shape: bf16[512,256], index: 0, kind: input, shape index: {}]
  %s1 = inlined_call_operand.vmem [shape: bf16[256,128], index: 1, kind: input, shape index: {}]
  %s2 = inlined_call_operand.vmem [shape: f32[1,128], index: 2, kind: input, shape index: {}]
  %s3 = inlined_call_operand.vmem [shape: f32[2,512], index: 3, kind: input, shape index: {}]
  %s4 = inlined_call_operand.vmem [shape: f32[128,1024], index: 4, kind: input, shape index: {}]
  %s5 = inlined_call_operand.vmem [shape: f32[1,1024], index: 5, kind: input, shape index: {}]
  %s6 = inlined_call_operand.vmem [shape: f32[1024,512], index: 6, kind: input, shape index: {}]
  %s7 = inlined_call_operand.vmem [shape: f32[1,512], index: 7, kind: input, shape index: {}]
  %s8 = inlined_call_operand.vmem [shape: f32[512,128], index: 8, kind: input, shape index: {}]
  %s9 = inlined_call_operand.vmem [shape: f32[1,128], index: 9, kind: input, shape index: {}]
  %s10 = inlined_call_operand.vmem [shape: f32[128,17], index: 10, kind: input, shape index: {}]
  %s11 = inlined_call_operand.vmem [shape: f32[1,17], index: 11, kind: input, shape index: {}]
  %s12 = inlined_call_operand.hbm [shape: f32[2,17], index: 12, kind: output, shape index: {}]
  %s13 = sld [smem:[#allocation0]]
  $region58: #{model_forward.1} parent=0
    _
  %s15 = ssub.s32 1, %s13
  %s16 = scalar_select 0, %s15, %s13
  $region1: #{model_forward.1} parent=0
    #allocation2 [shape = 'u8[1024]{0}', space=vmem, size = 0x400, scoped, tag = 'output window, operand 0, single buffered']
    #allocation3 [shape = 's32[1]{0}', space=sflag, size = 0x4, scoped, tag = 'scoped memory for model_forward.1']
    %17 = vsyncpa [#allocation3], 0
    // Predicated region
    $region2: #{model_forward.1} parent=1 // pred_check
      _
    $region3: #{model_forward.1} parent=1 // pred_check_branch
      %19 = sbr.rel (0) target = $region5
    $region4: #{model_forward.1} parent=1 // pred_region
      _
    $region5: #{model_forward.1} parent=1 // pred_fallthru
      _
    // Predicated region
    $region6: #{model_forward.1} parent=1 // pred_check
      _
    $region7: #{model_forward.1} parent=1 // pred_check_branch
      %21 = sbr.rel (0) target = $region9
    $region8: #{model_forward.1} parent=1 // pred_region
      _
    $region9: #{model_forward.1} parent=1 // pred_fallthru
      _
    // Predicated region
    $region10: #{model_forward.1} parent=1 // pred_check
      _
    $region11: #{model_forward.1} parent=1 // pred_check_branch
      %23 = sbr.rel (0) target = $region13
    $region12: #{model_forward.1} parent=1 // pred_region
      _
    $region13: #{model_forward.1} parent=1 // pred_fallthru
      _
    // Predicated region
    $region14: #{model_forward.1} parent=1 // pred_check
      _
    $region15: #{model_forward.1} parent=1 // pred_check_branch
      %25 = sbr.rel (0) target = $region17
    $region16: #{model_forward.1} parent=1 // pred_region
      _
    $region17: #{model_forward.1} parent=1 // pred_fallthru
      _
    // Predicated region
    $region18: #{model_forward.1} parent=1 // pred_check
      _
    $region19: #{model_forward.1} parent=1 // pred_check_branch
      %27 = sbr.rel (0) target = $region21
    $region20: #{model_forward.1} parent=1 // pred_region
      _
    $region21: #{model_forward.1} parent=1 // pred_fallthru
      _
    // Predicated region
    $region22: #{model_forward.1} parent=1 // pred_check
      _
    $region23: #{model_forward.1} parent=1 // pred_check_branch
      %29 = sbr.rel (0) target = $region25
    $region24: #{model_forward.1} parent=1 // pred_region
      _
    $region25: #{model_forward.1} parent=1 // pred_fallthru
      _
    // Predicated region
    $region26: #{model_forward.1} parent=1 // pred_check
      _
    $region27: #{model_forward.1} parent=1 // pred_check_branch
      %31 = sbr.rel (0) target = $region29
    $region28: #{model_forward.1} parent=1 // pred_region
      _
    $region29: #{model_forward.1} parent=1 // pred_fallthru
      _
    // Predicated region
    $region30: #{model_forward.1} parent=1 // pred_check
      _
    $region31: #{model_forward.1} parent=1 // pred_check_branch
      %33 = sbr.rel (0) target = $region33
    $region32: #{model_forward.1} parent=1 // pred_region
      _
    $region33: #{model_forward.1} parent=1 // pred_fallthru
      _
    // Predicated region
    $region34: #{model_forward.1} parent=1 // pred_check
      _
    $region35: #{model_forward.1} parent=1 // pred_check_branch
      %35 = sbr.rel (0) target = $region37
    $region36: #{model_forward.1} parent=1 // pred_region
      _
    $region37: #{model_forward.1} parent=1 // pred_fallthru
      _
    // Predicated region
    $region38: #{model_forward.1} parent=1 // pred_check
      _
    $region39: #{model_forward.1} parent=1 // pred_check_branch
      %37 = sbr.rel (0) target = $region41
    $region40: #{model_forward.1} parent=1 // pred_region
      _
    $region41: #{model_forward.1} parent=1 // pred_fallthru
      _
    // Predicated region
    $region42: #{model_forward.1} parent=1 // pred_check
      _
    $region43: #{model_forward.1} parent=1 // pred_check_branch
      %39 = sbr.rel (0) target = $region45
    $region44: #{model_forward.1} parent=1 // pred_region
      _
    $region45: #{model_forward.1} parent=1 // pred_fallthru
      _
    // Predicated region
    $region46: #{model_forward.1} parent=1 // pred_check
      _
    $region47: #{model_forward.1} parent=1 // pred_check_branch
      %41 = sbr.rel (0) target = $region49
    $region48: #{model_forward.1} parent=1 // pred_region
      _
    $region49: #{model_forward.1} parent=1 // pred_fallthru
      _
    %v43 = vld [vmem:[%s0] sm:$0xff]
    %v44 = vld [vmem:[%s0 + $0x8] sm:$0xff]
    %v45 = vld [vmem:[%s0 + $0x10] sm:$0xff]
    %v46 = vld [vmem:[%s0 + $0x18] sm:$0xff]
    %v47 = vld [vmem:[%s0 + $0x20] sm:$0xff]
    %v48 = vld [vmem:[%s0 + $0x28] sm:$0xff]
    %v49 = vld [vmem:[%s0 + $0x30] sm:$0xff]
    %v50 = vld [vmem:[%s0 + $0x38] sm:$0xff]
    %v51 = vld [vmem:[%s0 + $0x40] sm:$0xff]
    %v52 = vld [vmem:[%s0 + $0x48] sm:$0xff]
    %v53 = vld [vmem:[%s0 + $0x50] sm:$0xff]
    %v54 = vld [vmem:[%s0 + $0x58] sm:$0xff]
    %v55 = vld [vmem:[%s0 + $0x60] sm:$0xff]
    %v56 = vld [vmem:[%s0 + $0x68] sm:$0xff]
    %v57 = vld [vmem:[%s0 + $0x70] sm:$0xff]
    %v58 = vld [vmem:[%s0 + $0x78] sm:$0xff]
    %v59 = vld [vmem:[%s0 + $0x80] sm:$0xff]
    %v60 = vld [vmem:[%s0 + $0x88] sm:$0xff]
    %v61 = vld [vmem:[%s0 + $0x90] sm:$0xff]
    %v62 = vld [vmem:[%s0 + $0x98] sm:$0xff]
    %v63 = vld [vmem:[%s0 + $0xa0] sm:$0xff]
    %v64 = vld [vmem:[%s0 + $0xa8] sm:$0xff]
    %v65 = vld [vmem:[%s0 + $0xb0] sm:$0xff]
    %v66 = vld [vmem:[%s0 + $0xb8] sm:$0xff]
    %v67 = vld [vmem:[%s0 + $0xc0] sm:$0xff]
    %v68 = vld [vmem:[%s0 + $0xc8] sm:$0xff]
    %v69 = vld [vmem:[%s0 + $0xd0] sm:$0xff]
    %v70 = vld [vmem:[%s0 + $0xd8] sm:$0xff]
    %v71 = vld [vmem:[%s0 + $0xe0] sm:$0xff]
    %v72 = vld [vmem:[%s0 + $0xe8] sm:$0xff]
    %v73 = vld [vmem:[%s0 + $0xf0] sm:$0xff]
    %v74 = vld [vmem:[%s0 + $0xf8] sm:$0xff]
    %v75 = vld [vmem:[%s0 + $0x100] sm:$0xff]
    %v76 = vld [vmem:[%s0 + $0x108] sm:$0xff]
    %v77 = vld [vmem:[%s0 + $0x110] sm:$0xff]
    %v78 = vld [vmem:[%s0 + $0x118] sm:$0xff]
    %v79 = vld [vmem:[%s0 + $0x120] sm:$0xff]
    %v80 = vld [vmem:[%s0 + $0x128] sm:$0xff]
    %v81 = vld [vmem:[%s0 + $0x130] sm:$0xff]
    %v82 = vld [vmem:[%s0 + $0x138] sm:$0xff]
    %v83 = vld [vmem:[%s0 + $0x140] sm:$0xff]
    %v84 = vld [vmem:[%s0 + $0x148] sm:$0xff]
    %v85 = vld [vmem:[%s0 + $0x150] sm:$0xff]
    %v86 = vld [vmem:[%s0 + $0x158] sm:$0xff]
    %v87 = vld [vmem:[%s0 + $0x160] sm:$0xff]
    %v88 = vld [vmem:[%s0 + $0x168] sm:$0xff]
    %v89 = vld [vmem:[%s0 + $0x170] sm:$0xff]
    %v90 = vld [vmem:[%s0 + $0x178] sm:$0xff]
    %v91 = vld [vmem:[%s0 + $0x180] sm:$0xff]
    %v92 = vld [vmem:[%s0 + $0x188] sm:$0xff]
    %v93 = vld [vmem:[%s0 + $0x190] sm:$0xff]
    %v94 = vld [vmem:[%s0 + $0x198] sm:$0xff]
    %v95 = vld [vmem:[%s0 + $0x1a0] sm:$0xff]
    %v96 = vld [vmem:[%s0 + $0x1a8] sm:$0xff]
    %v97 = vld [vmem:[%s0 + $0x1b0] sm:$0xff]
    %v98 = vld [vmem:[%s0 + $0x1b8] sm:$0xff]
    %v99 = vld [vmem:[%s0 + $0x1c0] sm:$0xff]
    %v100 = vld [vmem:[%s0 + $0x1c8] sm:$0xff]
    %v101 = vld [vmem:[%s0 + $0x1d0] sm:$0xff]
    %v102 = vld [vmem:[%s0 + $0x1d8] sm:$0xff]
    %v103 = vld [vmem:[%s0 + $0x1e0] sm:$0xff]
    %v104 = vld [vmem:[%s0 + $0x1e8] sm:$0xff]
    %v105 = vld [vmem:[%s0 + $0x1f0] sm:$0xff]
    %v106 = vld [vmem:[%s0 + $0x1f8] sm:$0xff]
    %v107 = vld [vmem:[%s1] sm:$0xf]
    %v108 = vld [vmem:[%s1 + $0x4] sm:$0xf]
    %v109 = vld [vmem:[%s1 + $0x8] sm:$0xf]
    %v110 = vld [vmem:[%s1 + $0xc] sm:$0xf]
    %v111 = vld [vmem:[%s1 + $0x10] sm:$0xf]
    %v112 = vld [vmem:[%s1 + $0x14] sm:$0xf]
    %v113 = vld [vmem:[%s1 + $0x18] sm:$0xf]
    %v114 = vld [vmem:[%s1 + $0x1c] sm:$0xf]
    %v115 = vld [vmem:[%s1 + $0x20] sm:$0xf]
    %v116 = vld [vmem:[%s1 + $0x24] sm:$0xf]
    %v117 = vld [vmem:[%s1 + $0x28] sm:$0xf]
    %v118 = vld [vmem:[%s1 + $0x2c] sm:$0xf]
    %v119 = vld [vmem:[%s1 + $0x30] sm:$0xf]
    %v120 = vld [vmem:[%s1 + $0x34] sm:$0xf]
    %v121 = vld [vmem:[%s1 + $0x38] sm:$0xf]
    %v122 = vld [vmem:[%s1 + $0x3c] sm:$0xf]
    %v123 = vld [vmem:[%s1 + $0x40] sm:$0xf]
    %v124 = vld [vmem:[%s1 + $0x44] sm:$0xf]
    %v125 = vld [vmem:[%s1 + $0x48] sm:$0xf]
    %v126 = vld [vmem:[%s1 + $0x4c] sm:$0xf]
    %v127 = vld [vmem:[%s1 + $0x50] sm:$0xf]
    %v128 = vld [vmem:[%s1 + $0x54] sm:$0xf]
    %v129 = vld [vmem:[%s1 + $0x58] sm:$0xf]
    %v130 = vld [vmem:[%s1 + $0x5c] sm:$0xf]
    %v131 = vld [vmem:[%s1 + $0x60] sm:$0xf]
    %v132 = vld [vmem:[%s1 + $0x64] sm:$0xf]
    %v133 = vld [vmem:[%s1 + $0x68] sm:$0xf]
    %v134 = vld [vmem:[%s1 + $0x6c] sm:$0xf]
    %v135 = vld [vmem:[%s1 + $0x70] sm:$0xf]
    %v136 = vld [vmem:[%s1 + $0x74] sm:$0xf]
    %v137 = vld [vmem:[%s1 + $0x78] sm:$0xf]
    %v138 = vld [vmem:[%s1 + $0x7c] sm:$0xf]
    %v139 = vld [vmem:[%s2] sm:$0x1]
    %v141 = vlaneseq
    %v142 = vshrl.u32 %v141, 7
    %v143 = vsub.s32 0, %v142
    %v144 = vrot.slane %v139, %v143
    %v210 = vunpack.c.l.b16 %v43
    %v211 = vunpack.c.h.b16 %v43
    %v212 = vunpack.c.l.b16 %v44
    %v213 = vunpack.c.h.b16 %v44
    %v214 = vunpack.c.l.b16 %v45
    %v215 = vunpack.c.h.b16 %v45
    %v216 = vunpack.c.l.b16 %v46
    %v217 = vunpack.c.h.b16 %v46
    %v218 = vunpack.c.l.b16 %v47
    %v219 = vunpack.c.h.b16 %v47
    %v220 = vunpack.c.l.b16 %v48
    %v221 = vunpack.c.h.b16 %v48
    %v222 = vunpack.c.l.b16 %v49
    %v223 = vunpack.c.h.b16 %v49
    %v224 = vunpack.c.l.b16 %v50
    %v225 = vunpack.c.h.b16 %v50
    %v226 = vunpack.c.l.b16 %v51
    %v227 = vunpack.c.h.b16 %v51
    %v228 = vunpack.c.l.b16 %v52
    %v229 = vunpack.c.h.b16 %v52
    %v230 = vunpack.c.l.b16 %v53
    %v231 = vunpack.c.h.b16 %v53
    %v232 = vunpack.c.l.b16 %v54
    %v233 = vunpack.c.h.b16 %v54
    %v234 = vunpack.c.l.b16 %v55
    %v235 = vunpack.c.h.b16 %v55
    %v236 = vunpack.c.l.b16 %v56
    %v237 = vunpack.c.h.b16 %v56
    %v238 = vunpack.c.l.b16 %v57
    %v239 = vunpack.c.h.b16 %v57
    %v240 = vunpack.c.l.b16 %v58
    %v241 = vunpack.c.h.b16 %v58
    %v242 = vunpack.c.l.b16 %v59
    %v243 = vunpack.c.h.b16 %v59
    %v244 = vunpack.c.l.b16 %v60
    %v245 = vunpack.c.h.b16 %v60
    %v246 = vunpack.c.l.b16 %v61
    %v247 = vunpack.c.h.b16 %v61
    %v248 = vunpack.c.l.b16 %v62
    %v249 = vunpack.c.h.b16 %v62
    %v250 = vunpack.c.l.b16 %v63
    %v251 = vunpack.c.h.b16 %v63
    %v252 = vunpack.c.l.b16 %v64
    %v253 = vunpack.c.h.b16 %v64
    %v254 = vunpack.c.l.b16 %v65
    %v255 = vunpack.c.h.b16 %v65
    %v256 = vunpack.c.l.b16 %v66
    %v257 = vunpack.c.h.b16 %v66
    %v258 = vunpack.c.l.b16 %v67
    %v259 = vunpack.c.h.b16 %v67
    %v260 = vunpack.c.l.b16 %v68
    %v261 = vunpack.c.h.b16 %v68
    %v262 = vunpack.c.l.b16 %v69
    %v263 = vunpack.c.h.b16 %v69
    %v264 = vunpack.c.l.b16 %v70
    %v265 = vunpack.c.h.b16 %v70
    %v266 = vunpack.c.l.b16 %v71
    %v267 = vunpack.c.h.b16 %v71
    %v268 = vunpack.c.l.b16 %v72
    %v269 = vunpack.c.h.b16 %v72
    %v270 = vunpack.c.l.b16 %v73
    %v271 = vunpack.c.h.b16 %v73
    %v272 = vunpack.c.l.b16 %v74
    %v273 = vunpack.c.h.b16 %v74
    %v274 = vunpack.c.l.b16 %v75
    %v275 = vunpack.c.h.b16 %v75
    %v276 = vunpack.c.l.b16 %v76
    %v277 = vunpack.c.h.b16 %v76
    %v278 = vunpack.c.l.b16 %v77
    %v279 = vunpack.c.h.b16 %v77
    %v280 = vunpack.c.l.b16 %v78
    %v281 = vunpack.c.h.b16 %v78
    %v282 = vunpack.c.l.b16 %v79
    %v283 = vunpack.c.h.b16 %v79
    %v284 = vunpack.c.l.b16 %v80
    %v285 = vunpack.c.h.b16 %v80
    %v286 = vunpack.c.l.b16 %v81
    %v287 = vunpack.c.h.b16 %v81
    %v288 = vunpack.c.l.b16 %v82
    %v289 = vunpack.c.h.b16 %v82
    %v290 = vunpack.c.l.b16 %v83
    %v291 = vunpack.c.h.b16 %v83
    %v292 = vunpack.c.l.b16 %v84
    %v293 = vunpack.c.h.b16 %v84
    %v294 = vunpack.c.l.b16 %v85
    %v295 = vunpack.c.h.b16 %v85
    %v296 = vunpack.c.l.b16 %v86
    %v297 = vunpack.c.h.b16 %v86
    %v298 = vunpack.c.l.b16 %v87
    %v299 = vunpack.c.h.b16 %v87
    %v300 = vunpack.c.l.b16 %v88
    %v301 = vunpack.c.h.b16 %v88
    %v302 = vunpack.c.l.b16 %v89
    %v303 = vunpack.c.h.b16 %v89
    %v304 = vunpack.c.l.b16 %v90
    %v305 = vunpack.c.h.b16 %v90
    %v306 = vunpack.c.l.b16 %v91
    %v307 = vunpack.c.h.b16 %v91
    %v308 = vunpack.c.l.b16 %v92
    %v309 = vunpack.c.h.b16 %v92
    %v310 = vunpack.c.l.b16 %v93
    %v311 = vunpack.c.h.b16 %v93
    %v312 = vunpack.c.l.b16 %v94
    %v313 = vunpack.c.h.b16 %v94
    %v314 = vunpack.c.l.b16 %v95
    %v315 = vunpack.c.h.b16 %v95
    %v316 = vunpack.c.l.b16 %v96
    %v317 = vunpack.c.h.b16 %v96
    %v318 = vunpack.c.l.b16 %v97
    %v319 = vunpack.c.h.b16 %v97
    %v320 = vunpack.c.l.b16 %v98
    %v321 = vunpack.c.h.b16 %v98
    %v322 = vunpack.c.l.b16 %v99
    %v323 = vunpack.c.h.b16 %v99
    %v324 = vunpack.c.l.b16 %v100
    %v325 = vunpack.c.h.b16 %v100
    %v326 = vunpack.c.l.b16 %v101
    %v327 = vunpack.c.h.b16 %v101
    %v328 = vunpack.c.l.b16 %v102
    %v329 = vunpack.c.h.b16 %v102
    %v330 = vunpack.c.l.b16 %v103
    %v331 = vunpack.c.h.b16 %v103
    %v332 = vunpack.c.l.b16 %v104
    %v333 = vunpack.c.h.b16 %v104
    %v334 = vunpack.c.l.b16 %v105
    %v335 = vunpack.c.h.b16 %v105
    %v336 = vunpack.c.l.b16 %v106
    %v337 = vunpack.c.h.b16 %v106
    %v338 = vpack.c.b16 %v212, %v210
    %v339 = vpack.c.b16 %v213, %v211
    %v340 = vpack.c.b16 %v216, %v214
    %v341 = vpack.c.b16 %v217, %v215
    %v342 = vpack.c.b16 %v220, %v218
    %v343 = vpack.c.b16 %v221, %v219
    %v344 = vpack.c.b16 %v224, %v222
    %v345 = vpack.c.b16 %v225, %v223
    %v346 = vpack.c.b16 %v228, %v226
    %v347 = vpack.c.b16 %v229, %v227
    %v348 = vpack.c.b16 %v232, %v230
    %v349 = vpack.c.b16 %v233, %v231
    %v350 = vpack.c.b16 %v236, %v234
    %v351 = vpack.c.b16 %v237, %v235
    %v352 = vpack.c.b16 %v240, %v238
    %v353 = vpack.c.b16 %v241, %v239
    %v354 = vpack.c.b16 %v244, %v242
    %v355 = vpack.c.b16 %v245, %v243
    %v356 = vpack.c.b16 %v248, %v246
    %v357 = vpack.c.b16 %v249, %v247
    %v358 = vpack.c.b16 %v252, %v250
    %v359 = vpack.c.b16 %v253, %v251
    %v360 = vpack.c.b16 %v256, %v254
    %v361 = vpack.c.b16 %v257, %v255
    %v362 = vpack.c.b16 %v260, %v258
    %v363 = vpack.c.b16 %v261, %v259
    %v364 = vpack.c.b16 %v264, %v262
    %v365 = vpack.c.b16 %v265, %v263
    %v366 = vpack.c.b16 %v268, %v266
    %v367 = vpack.c.b16 %v269, %v267
    %v368 = vpack.c.b16 %v272, %v270
    %v369 = vpack.c.b16 %v273, %v271
    %v370 = vpack.c.b16 %v276, %v274
    %v371 = vpack.c.b16 %v277, %v275
    %v372 = vpack.c.b16 %v280, %v278
    %v373 = vpack.c.b16 %v281, %v279
    %v374 = vpack.c.b16 %v284, %v282
    %v375 = vpack.c.b16 %v285, %v283
    %v376 = vpack.c.b16 %v288, %v286
    %v377 = vpack.c.b16 %v289, %v287
    %v378 = vpack.c.b16 %v292, %v290
    %v379 = vpack.c.b16 %v293, %v291
    %v380 = vpack.c.b16 %v296, %v294
    %v381 = vpack.c.b16 %v297, %v295
    %v382 = vpack.c.b16 %v300, %v298
    %v383 = vpack.c.b16 %v301, %v299
    %v384 = vpack.c.b16 %v304, %v302
    %v385 = vpack.c.b16 %v305, %v303
    %v386 = vpack.c.b16 %v308, %v306
    %v387 = vpack.c.b16 %v309, %v307
    %v388 = vpack.c.b16 %v312, %v310
    %v389 = vpack.c.b16 %v313, %v311
    %v390 = vpack.c.b16 %v316, %v314
    %v391 = vpack.c.b16 %v317, %v315
    %v392 = vpack.c.b16 %v320, %v318
    %v393 = vpack.c.b16 %v321, %v319
    %v394 = vpack.c.b16 %v324, %v322
    %v395 = vpack.c.b16 %v325, %v323
    %v396 = vpack.c.b16 %v328, %v326
    %v397 = vpack.c.b16 %v329, %v327
    %v398 = vpack.c.b16 %v332, %v330
    %v399 = vpack.c.b16 %v333, %v331
    %v400 = vpack.c.b16 %v336, %v334
    %v401 = vpack.c.b16 %v337, %v335
    %v498 = vunpack.c.l.b16 %v107
    %v499 = vunpack.c.l.b16 %v108
    %v500 = vunpack.c.l.b16 %v109
    %v501 = vunpack.c.l.b16 %v110
    %v502 = vunpack.c.l.b16 %v111
    %v503 = vunpack.c.l.b16 %v112
    %v504 = vunpack.c.l.b16 %v113
    %v505 = vunpack.c.l.b16 %v114
    %v506 = vunpack.c.l.b16 %v115
    %v507 = vunpack.c.l.b16 %v116
    %v508 = vunpack.c.l.b16 %v117
    %v509 = vunpack.c.l.b16 %v118
    %v510 = vunpack.c.l.b16 %v119
    %v511 = vunpack.c.l.b16 %v120
    %v512 = vunpack.c.l.b16 %v121
    %v513 = vunpack.c.l.b16 %v122
    %v514 = vunpack.c.l.b16 %v123
    %v515 = vunpack.c.l.b16 %v124
    %v516 = vunpack.c.l.b16 %v125
    %v517 = vunpack.c.l.b16 %v126
    %v518 = vunpack.c.l.b16 %v127
    %v519 = vunpack.c.l.b16 %v128
    %v520 = vunpack.c.l.b16 %v129
    %v521 = vunpack.c.l.b16 %v130
    %v522 = vunpack.c.l.b16 %v131
    %v523 = vunpack.c.l.b16 %v132
    %v524 = vunpack.c.l.b16 %v133
    %v525 = vunpack.c.l.b16 %v134
    %v526 = vunpack.c.l.b16 %v135
    %v527 = vunpack.c.l.b16 %v136
    %v528 = vunpack.c.l.b16 %v137
    %v529 = vunpack.c.l.b16 %v138
    %v530 = vpack.c.b16 %v499, %v498
    %v531 = vpack.c.b16 %v501, %v500
    %v532 = vpack.c.b16 %v503, %v502
    %v533 = vpack.c.b16 %v505, %v504
    %v534 = vpack.c.b16 %v507, %v506
    %v535 = vpack.c.b16 %v509, %v508
    %v536 = vpack.c.b16 %v511, %v510
    %v537 = vpack.c.b16 %v513, %v512
    %v538 = vpack.c.b16 %v515, %v514
    %v539 = vpack.c.b16 %v517, %v516
    %v540 = vpack.c.b16 %v519, %v518
    %v541 = vpack.c.b16 %v521, %v520
    %v542 = vpack.c.b16 %v523, %v522
    %v543 = vpack.c.b16 %v525, %v524
    %v544 = vpack.c.b16 %v527, %v526
    %v545 = vpack.c.b16 %v529, %v528
    %562 = vmatprep.subr.bf16.mxu0 0
    %563 = vmatpush1.bf16.msra.mxu0 %v530
    %564 = vmatprep.subr.bf16.mxu0 0
    %565 = vmatpush1.bf16.msra.mxu0 %v531
    %566 = vmatprep.subr.bf16.mxu0 0
    %567 = vmatpush1.bf16.msra.mxu0 %v532
    %568 = vmatprep.subr.bf16.mxu0 0
    %569 = vmatpush1.bf16.msra.mxu0 %v533
    %570 = vmatprep.subr.bf16.mxu0 0
    %571 = vmatpush1.bf16.msra.mxu0 %v534
    %572 = vmatprep.subr.bf16.mxu0 0
    %573 = vmatpush1.bf16.msra.mxu0 %v535
    %574 = vmatprep.subr.bf16.mxu0 0
    %575 = vmatpush1.bf16.msra.mxu0 %v536
    %576 = vmatprep.subr.bf16.mxu0 0
    %577 = vmatpush1.bf16.msra.mxu0 %v537
    %578 = vmatprep.subr.bf16.mxu0 0
    %579 = vmatpush1.bf16.msra.mxu0 %v538
    %580 = vmatprep.subr.bf16.mxu0 0
    %581 = vmatpush1.bf16.msra.mxu0 %v539
    %582 = vmatprep.subr.bf16.mxu0 0
    %583 = vmatpush1.bf16.msra.mxu0 %v540
    %584 = vmatprep.subr.bf16.mxu0 0
    %585 = vmatpush1.bf16.msra.mxu0 %v541
    %586 = vmatprep.subr.bf16.mxu0 0
    %587 = vmatpush1.bf16.msra.mxu0 %v542
    %588 = vmatprep.subr.bf16.mxu0 0
    %589 = vmatpush1.bf16.msra.mxu0 %v543
    %590 = vmatprep.subr.bf16.mxu0 0
    %591 = vmatpush1.bf16.msra.mxu0 %v544
    %592 = vmatprep.subr.bf16.mxu0 0
    %593 = vmatpush1.bf16.msra.mxu0 %v545
    %594 = vmatprep.mubr.bf16.mxu0 %v339
    %595 = vmatmul.mubr.bf16.gmra.mrb[0].mxu0 %v338
    %v596 = vpop.f32.mrb[0].mxu0
    %v597 = vadd.f32 %v144, %v596
    %v598 = vpop.f32.mrb[0].mxu0
    %v599 = vpop.f32.mrb[0].mxu0
    %v600 = vadd.f32 %v144, %v599
    %v601 = vpop.f32.mrb[0].mxu0
    %602 = vmatprep.mubr.bf16.mxu0 %v341
    %603 = vmatmul.mubr.bf16.gmra.mrb[0].mxu0 %v340
    %v604 = vpop.f32.mrb[0].mxu0
    %v605 = vadd.f32 %v144, %v604
    %v606 = vpop.f32.mrb[0].mxu0
    %v607 = vpop.f32.mrb[0].mxu0
    %v608 = vadd.f32 %v144, %v607
    %v609 = vpop.f32.mrb[0].mxu0
    %610 = vmatprep.mubr.bf16.mxu0 %v343
    %611 = vmatmul.mubr.bf16.gmra.mrb[0].mxu0 %v342
    %v612 = vpop.f32.mrb[0].mxu0
    %v613 = vadd.f32 %v144, %v612
    %v614 = vpop.f32.mrb[0].mxu0
    %v615 = vpop.f32.mrb[0].mxu0
    %v616 = vadd.f32 %v144, %v615
    %v617 = vpop.f32.mrb[0].mxu0
    %618 = vmatprep.mubr.bf16.mxu0 %v345
    %619 = vmatmul.mubr.bf16.gmra.mrb[0].mxu0 %v344
    %v620 = vpop.f32.mrb[0].mxu0
    %v621 = vadd.f32 %v144, %v620
    %v622 = vpop.f32.mrb[0].mxu0
    %v623 = vpop.f32.mrb[0].mxu0
    %v624 = vadd.f32 %v144, %v623
    %v625 = vpop.f32.mrb[0].mxu0
    %626 = vmatprep.mubr.bf16.mxu0 %v347
    %627 = vmatmul.mubr.bf16.gmra.mrb[0].mxu0 %v346
    %v628 = vpop.f32.mrb[0].mxu0
    %v629 = vadd.f32 %v144, %v628
    %v630 = vpop.f32.mrb[0].mxu0
    %v631 = vpop.f32.mrb[0].mxu0
    %v632 = vadd.f32 %v144, %v631
    %v633 = vpop.f32.mrb[0].mxu0
    %634 = vmatprep.mubr.bf16.mxu0 %v349
    %635 = vmatmul.mubr.bf16.gmra.mrb[0].mxu0 %v348
    %v636 = vpop.f32.mrb[0].mxu0
    %v637 = vadd.f32 %v144, %v636
    %v638 = vpop.f32.mrb[0].mxu0
    %v639 = vpop.f32.mrb[0].mxu0
    %v640 = vadd.f32 %v144, %v639
    %v641 = vpop.f32.mrb[0].mxu0
    %642 = vmatprep.mubr.bf16.mxu0 %v351
    %643 = vmatmul.mubr.bf16.gmra.mrb[0].mxu0 %v350
    %v644 = vpop.f32.mrb[0].mxu0
    %v645 = vadd.f32 %v144, %v644
    %v646 = vpop.f32.mrb[0].mxu0
    %v647 = vpop.f32.mrb[0].mxu0
    %v648 = vadd.f32 %v144, %v647
    %v649 = vpop.f32.mrb[0].mxu0
    %650 = vmatprep.mubr.bf16.mxu0 %v353
    %651 = vmatmul.mubr.bf16.gmra.mrb[0].mxu0 %v352
    %v652 = vpop.f32.mrb[0].mxu0
    %v653 = vadd.f32 %v144, %v652
    %v654 = vpop.f32.mrb[0].mxu0
    %v655 = vpop.f32.mrb[0].mxu0
    %v656 = vadd.f32 %v144, %v655
    %v657 = vpop.f32.mrb[0].mxu0
    %658 = vmatprep.mubr.bf16.mxu0 %v355
    %659 = vmatmul.mubr.bf16.gmra.mrb[0].mxu0 %v354
    %v660 = vpop.f32.mrb[0].mxu0
    %v661 = vadd.f32 %v144, %v660
    %v662 = vpop.f32.mrb[0].mxu0
    %v663 = vpop.f32.mrb[0].mxu0
    %v664 = vadd.f32 %v144, %v663
    %v665 = vpop.f32.mrb[0].mxu0
    %666 = vmatprep.mubr.bf16.mxu0 %v357
    %667 = vmatmul.mubr.bf16.gmra.mrb[0].mxu0 %v356
    %v668 = vpop.f32.mrb[0].mxu0
    %v669 = vadd.f32 %v144, %v668
    %v670 = vpop.f32.mrb[0].mxu0
    %v671 = vpop.f32.mrb[0].mxu0
    %v672 = vadd.f32 %v144, %v671
    %v673 = vpop.f32.mrb[0].mxu0
    %674 = vmatprep.mubr.bf16.mxu0 %v359
    %675 = vmatmul.mubr.bf16.gmra.mrb[0].mxu0 %v358
    %v676 = vpop.f32.mrb[0].mxu0
    %v677 = vadd.f32 %v144, %v676
    %v678 = vpop.f32.mrb[0].mxu0
    %v679 = vpop.f32.mrb[0].mxu0
    %v680 = vadd.f32 %v144, %v679
    %v681 = vpop.f32.mrb[0].mxu0
    %682 = vmatprep.mubr.bf16.mxu0 %v361
    %683 = vmatmul.mubr.bf16.gmra.mrb[0].mxu0 %v360
    %v684 = vpop.f32.mrb[0].mxu0
    %v685 = vadd.f32 %v144, %v684
    %v686 = vpop.f32.mrb[0].mxu0
    %v687 = vpop.f32.mrb[0].mxu0
    %v688 = vadd.f32 %v144, %v687
    %v689 = vpop.f32.mrb[0].mxu0
    %690 = vmatprep.mubr.bf16.mxu0 %v363
    %691 = vmatmul.mubr.bf16.gmra.mrb[0].mxu0 %v362
    %v692 = vpop.f32.mrb[0].mxu0
    %v693 = vadd.f32 %v144, %v692
    %v694 = vpop.f32.mrb[0].mxu0
    %v695 = vpop.f32.mrb[0].mxu0
    %v696 = vadd.f32 %v144, %v695
    %v697 = vpop.f32.mrb[0].mxu0
    %698 = vmatprep.mubr.bf16.mxu0 %v365
    %699 = vmatmul.mubr.bf16.gmra.mrb[0].mxu0 %v364
    %v700 = vpop.f32.mrb[0].mxu0
    %v701 = vadd.f32 %v144, %v700
    %v702 = vpop.f32.mrb[0].mxu0
    %v703 = vpop.f32.mrb[0].mxu0
    %v704 = vadd.f32 %v144, %v703
    %v705 = vpop.f32.mrb[0].mxu0
    %706 = vmatprep.mubr.bf16.mxu0 %v367
    %707 = vmatmul.mubr.bf16.gmra.mrb[0].mxu0 %v366
    %v708 = vpop.f32.mrb[0].mxu0
    %v709 = vadd.f32 %v144, %v708
    %v710 = vpop.f32.mrb[0].mxu0
    %v711 = vpop.f32.mrb[0].mxu0
    %v712 = vadd.f32 %v144, %v711
    %v713 = vpop.f32.mrb[0].mxu0
    %714 = vmatprep.mubr.bf16.mxu0 %v369
    %715 = vmatmul.mubr.bf16.gmra.mrb[0].mxu0 %v368
    %v716 = vpop.f32.mrb[0].mxu0
    %v717 = vadd.f32 %v144, %v716
    %v718 = vpop.f32.mrb[0].mxu0
    %v719 = vpop.f32.mrb[0].mxu0
    %v720 = vadd.f32 %v144, %v719
    %v721 = vpop.f32.mrb[0].mxu0
    %722 = vmatprep.mubr.bf16.mxu0 %v371
    %723 = vmatmul.mubr.bf16.gmra.mrb[0].mxu0 %v370
    %v724 = vpop.f32.mrb[0].mxu0
    %v725 = vadd.f32 %v144, %v724
    %v726 = vpop.f32.mrb[0].mxu0
    %v727 = vpop.f32.mrb[0].mxu0
    %v728 = vadd.f32 %v144, %v727
    %v729 = vpop.f32.mrb[0].mxu0
    %730 = vmatprep.mubr.bf16.mxu0 %v373
    %731 = vmatmul.mubr.bf16.gmra.mrb[0].mxu0 %v372
    %v732 = vpop.f32.mrb[0].mxu0
    %v733 = vadd.f32 %v144, %v732
    %v734 = vpop.f32.mrb[0].mxu0
    %v735 = vpop.f32.mrb[0].mxu0
    %v736 = vadd.f32 %v144, %v735
    %v737 = vpop.f32.mrb[0].mxu0
    %738 = vmatprep.mubr.bf16.mxu0 %v375
    %739 = vmatmul.mubr.bf16.gmra.mrb[0].mxu0 %v374
    %v740 = vpop.f32.mrb[0].mxu0
    %v741 = vadd.f32 %v144, %v740
    %v742 = vpop.f32.mrb[0].mxu0
    %v743 = vpop.f32.mrb[0].mxu0
    %v744 = vadd.f32 %v144, %v743
    %v745 = vpop.f32.mrb[0].mxu0
    %746 = vmatprep.mubr.bf16.mxu0 %v377
    %747 = vmatmul.mubr.bf16.gmra.mrb[0].mxu0 %v376
    %v748 = vpop.f32.mrb[0].mxu0
    %v749 = vadd.f32 %v144, %v748
    %v750 = vpop.f32.mrb[0].mxu0
    %v751 = vpop.f32.mrb[0].mxu0
    %v752 = vadd.f32 %v144, %v751
    %v753 = vpop.f32.mrb[0].mxu0
    %754 = vmatprep.mubr.bf16.mxu0 %v379
    %755 = vmatmul.mubr.bf16.gmra.mrb[0].mxu0 %v378
    %v756 = vpop.f32.mrb[0].mxu0
    %v757 = vadd.f32 %v144, %v756
    %v758 = vpop.f32.mrb[0].mxu0
    %v759 = vpop.f32.mrb[0].mxu0
    %v760 = vadd.f32 %v144, %v759
    %v761 = vpop.f32.mrb[0].mxu0
    %762 = vmatprep.mubr.bf16.mxu0 %v381
    %763 = vmatmul.mubr.bf16.gmra.mrb[0].mxu0 %v380
    %v764 = vpop.f32.mrb[0].mxu0
    %v765 = vadd.f32 %v144, %v764
    %v766 = vpop.f32.mrb[0].mxu0
    %v767 = vpop.f32.mrb[0].mxu0
    %v768 = vadd.f32 %v144, %v767
    %v769 = vpop.f32.mrb[0].mxu0
    %770 = vmatprep.mubr.bf16.mxu0 %v383
    %771 = vmatmul.mubr.bf16.gmra.mrb[0].mxu0 %v382
    %v772 = vpop.f32.mrb[0].mxu0
    %v773 = vadd.f32 %v144, %v772
    %v774 = vpop.f32.mrb[0].mxu0
    %v775 = vpop.f32.mrb[0].mxu0
    %v776 = vadd.f32 %v144, %v775
    %v777 = vpop.f32.mrb[0].mxu0
    %778 = vmatprep.mubr.bf16.mxu0 %v385
    %779 = vmatmul.mubr.bf16.gmra.mrb[0].mxu0 %v384
    %v780 = vpop.f32.mrb[0].mxu0
    %v781 = vadd.f32 %v144, %v780
    %v782 = vpop.f32.mrb[0].mxu0
    %v783 = vpop.f32.mrb[0].mxu0
    %v784 = vadd.f32 %v144, %v783
    %v785 = vpop.f32.mrb[0].mxu0
    %786 = vmatprep.mubr.bf16.mxu0 %v387
    %787 = vmatmul.mubr.bf16.gmra.mrb[0].mxu0 %v386
    %v788 = vpop.f32.mrb[0].mxu0
    %v789 = vadd.f32 %v144, %v788
    %v790 = vpop.f32.mrb[0].mxu0
    %v791 = vpop.f32.mrb[0].mxu0
    %v792 = vadd.f32 %v144, %v791
    %v793 = vpop.f32.mrb[0].mxu0
    %794 = vmatprep.mubr.bf16.mxu0 %v389
    %795 = vmatmul.mubr.bf16.gmra.mrb[0].mxu0 %v388
    %v796 = vpop.f32.mrb[0].mxu0
    %v797 = vadd.f32 %v144, %v796
    %v798 = vpop.f32.mrb[0].mxu0
    %v799 = vpop.f32.mrb[0].mxu0
    %v800 = vadd.f32 %v144, %v799
    %v801 = vpop.f32.mrb[0].mxu0
    %802 = vmatprep.mubr.bf16.mxu0 %v391
    %803 = vmatmul.mubr.bf16.gmra.mrb[0].mxu0 %v390
    %v804 = vpop.f32.mrb[0].mxu0
    %v805 = vadd.f32 %v144, %v804
    %v806 = vpop.f32.mrb[0].mxu0
    %v807 = vpop.f32.mrb[0].mxu0
    %v808 = vadd.f32 %v144, %v807
    %v809 = vpop.f32.mrb[0].mxu0
    %810 = vmatprep.mubr.bf16.mxu0 %v393
    %811 = vmatmul.mubr.bf16.gmra.mrb[0].mxu0 %v392
    %v812 = vpop.f32.mrb[0].mxu0
    %v813 = vadd.f32 %v144, %v812
    %v814 = vpop.f32.mrb[0].mxu0
    %v815 = vpop.f32.mrb[0].mxu0
    %v816 = vadd.f32 %v144, %v815
    %v817 = vpop.f32.mrb[0].mxu0
    %818 = vmatprep.mubr.bf16.mxu0 %v395
    %819 = vmatmul.mubr.bf16.gmra.mrb[0].mxu0 %v394
    %v820 = vpop.f32.mrb[0].mxu0
    %v821 = vadd.f32 %v144, %v820
    %v822 = vpop.f32.mrb[0].mxu0
    %v823 = vpop.f32.mrb[0].mxu0
    %v824 = vadd.f32 %v144, %v823
    %v825 = vpop.f32.mrb[0].mxu0
    %826 = vmatprep.mubr.bf16.mxu0 %v397
    %827 = vmatmul.mubr.bf16.gmra.mrb[0].mxu0 %v396
    %v828 = vpop.f32.mrb[0].mxu0
    %v829 = vadd.f32 %v144, %v828
    %v830 = vpop.f32.mrb[0].mxu0
    %v831 = vpop.f32.mrb[0].mxu0
    %v832 = vadd.f32 %v144, %v831
    %v833 = vpop.f32.mrb[0].mxu0
    %834 = vmatprep.mubr.bf16.mxu0 %v399
    %835 = vmatmul.mubr.bf16.gmra.mrb[0].mxu0 %v398
    %v836 = vpop.f32.mrb[0].mxu0
    %v837 = vadd.f32 %v144, %v836
    %v838 = vpop.f32.mrb[0].mxu0
    %v839 = vpop.f32.mrb[0].mxu0
    %v840 = vadd.f32 %v144, %v839
    %v841 = vpop.f32.mrb[0].mxu0
    %842 = vmatprep.mubr.bf16.mxu0 %v401
    %843 = vmatmul.mubr.bf16.gmra.mrb[0].mxu0 %v400
    %v844 = vpop.f32.mrb[0].mxu0
    %v845 = vadd.f32 %v144, %v844
    %v846 = vpop.f32.mrb[0].mxu0
    %v847 = vpop.f32.mrb[0].mxu0
    %v848 = vadd.f32 %v144, %v847
    %v849 = vpop.f32.mrb[0].mxu0
    %850 = vdwg.mxu0
    %v851 = vmax.f32 %v597, 0.0
    %v852 = vmax.f32 %v600, 0.0
    %v853 = vmax.f32 %v605, 0.0
    %v854 = vmax.f32 %v608, 0.0
    %v855 = vmax.f32 %v613, 0.0
    %v856 = vmax.f32 %v616, 0.0
    %v857 = vmax.f32 %v621, 0.0
    %v858 = vmax.f32 %v624, 0.0
    %v859 = vmax.f32 %v629, 0.0
    %v860 = vmax.f32 %v632, 0.0
    %v861 = vmax.f32 %v637, 0.0
    %v862 = vmax.f32 %v640, 0.0
    %v863 = vmax.f32 %v645, 0.0
    %v864 = vmax.f32 %v648, 0.0
    %v865 = vmax.f32 %v653, 0.0
    %v866 = vmax.f32 %v656, 0.0
    %v867 = vmax.f32 %v661, 0.0
    %v868 = vmax.f32 %v664, 0.0
    %v869 = vmax.f32 %v669, 0.0
    %v870 = vmax.f32 %v672, 0.0
    %v871 = vmax.f32 %v677, 0.0
    %v872 = vmax.f32 %v680, 0.0
    %v873 = vmax.f32 %v685, 0.0
    %v874 = vmax.f32 %v688, 0.0
    %v875 = vmax.f32 %v693, 0.0
    %v876 = vmax.f32 %v696, 0.0
    %v877 = vmax.f32 %v701, 0.0
    %v878 = vmax.f32 %v704, 0.0
    %v879 = vmax.f32 %v709, 0.0
    %v880 = vmax.f32 %v712, 0.0
    %v881 = vmax.f32 %v717, 0.0
    %v882 = vmax.f32 %v720, 0.0
    %v883 = vmax.f32 %v725, 0.0
    %v884 = vmax.f32 %v728, 0.0
    %v885 = vmax.f32 %v733, 0.0
    %v886 = vmax.f32 %v736, 0.0
    %v887 = vmax.f32 %v741, 0.0
    %v888 = vmax.f32 %v744, 0.0
    %v889 = vmax.f32 %v749, 0.0
    %v890 = vmax.f32 %v752, 0.0
    %v891 = vmax.f32 %v757, 0.0
    %v892 = vmax.f32 %v760, 0.0
    %v893 = vmax.f32 %v765, 0.0
    %v894 = vmax.f32 %v768, 0.0
    %v895 = vmax.f32 %v773, 0.0
    %v896 = vmax.f32 %v776, 0.0
    %v897 = vmax.f32 %v781, 0.0
    %v898 = vmax.f32 %v784, 0.0
    %v899 = vmax.f32 %v789, 0.0
    %v900 = vmax.f32 %v792, 0.0
    %v901 = vmax.f32 %v797, 0.0
    %v902 = vmax.f32 %v800, 0.0
    %v903 = vmax.f32 %v805, 0.0
    %v904 = vmax.f32 %v808, 0.0
    %v905 = vmax.f32 %v813, 0.0
    %v906 = vmax.f32 %v816, 0.0
    %v907 = vmax.f32 %v821, 0.0
    %v908 = vmax.f32 %v824, 0.0
    %v909 = vmax.f32 %v829, 0.0
    %v910 = vmax.f32 %v832, 0.0
    %v911 = vmax.f32 %v837, 0.0
    %v912 = vmax.f32 %v840, 0.0
    %v913 = vmax.f32 %v845, 0.0
    %v914 = vmax.f32 %v848, 0.0
    %v915 = vld [vmem:[%s3] sm:$0xff]
    %v917 = vcombine.high %v915, %v915
    %v919 = vunpack.c.l.s4 1983009808
    %v920 = vunpack.c.0.s8 %v919
    %v921 = vlaneseq
    %v922 = vshrl.u32 %v921, 7
    %v923 = vsub.s32 %v920, %v922
    %v924 = vrot.slane %v915, %v923
    %v926 = vunpack.c.l.s4 1983009808
    %v927 = vunpack.c.0.s8 %v926
    %v928 = vlaneseq
    %v929 = vshrl.u32 %v928, 7
    %v930 = vsub.s32 %v927, %v929
    %v931 = vrot.slane %v917, %v930
    %v932 = vcombine.high %v924, %v924
    %v933 = vcombine.high %v931, %v931
    %938 = vmatprep.subr.mxu0 0.0
    %939 = vmatpush1.msra.mxu0 %v851
    %940 = vmatprep.subr.mxu0 0.0
    %941 = vmatpush1.msra.mxu0 %v852
    %942 = vmatprep.subr.mxu0 0.0
    %943 = vmatpush1.msra.mxu0 %v853
    %944 = vmatprep.subr.mxu0 0.0
    %945 = vmatpush1.msra.mxu0 %v854
    %946 = vmatprep.subr.mxu0 0.0
    %947 = vmatpush1.msra.mxu0 %v855
    %948 = vmatprep.subr.mxu0 0.0
    %949 = vmatpush1.msra.mxu0 %v856
    %950 = vmatprep.subr.mxu0 0.0
    %951 = vmatpush1.msra.mxu0 %v857
    %952 = vmatprep.subr.mxu0 0.0
    %953 = vmatpush1.msra.mxu0 %v858
    %954 = vmatprep.subr.mxu0 0.0
    %955 = vmatpush1.msra.mxu0 %v859
    %956 = vmatprep.subr.mxu0 0.0
    %957 = vmatpush1.msra.mxu0 %v860
    %958 = vmatprep.subr.mxu0 0.0
    %959 = vmatpush1.msra.mxu0 %v861
    %960 = vmatprep.subr.mxu0 0.0
    %961 = vmatpush1.msra.mxu0 %v862
    %962 = vmatprep.subr.mxu0 0.0
    %963 = vmatpush1.msra.mxu0 %v863
    %964 = vmatprep.subr.mxu0 0.0
    %965 = vmatpush1.msra.mxu0 %v864
    %966 = vmatprep.subr.mxu0 0.0
    %967 = vmatpush1.msra.mxu0 %v865
    %968 = vmatprep.subr.mxu0 0.0
    %969 = vmatpush1.msra.mxu0 %v866
    %970 = vmatprep.subr.mxu0 0.0
    %971 = vmatpush1.msra.mxu0 %v867
    %972 = vmatprep.subr.mxu0 0.0
    %973 = vmatpush1.msra.mxu0 %v868
    %974 = vmatprep.subr.mxu0 0.0
    %975 = vmatpush1.msra.mxu0 %v869
    %976 = vmatprep.subr.mxu0 0.0
    %977 = vmatpush1.msra.mxu0 %v870
    %978 = vmatprep.subr.mxu0 0.0
    %979 = vmatpush1.msra.mxu0 %v871
    %980 = vmatprep.subr.mxu0 0.0
    %981 = vmatpush1.msra.mxu0 %v872
    %982 = vmatprep.subr.mxu0 0.0
    %983 = vmatpush1.msra.mxu0 %v873
    %984 = vmatprep.subr.mxu0 0.0
    %985 = vmatpush1.msra.mxu0 %v874
    %986 = vmatprep.subr.mxu0 0.0
    %987 = vmatpush1.msra.mxu0 %v875
    %988 = vmatprep.subr.mxu0 0.0
    %989 = vmatpush1.msra.mxu0 %v876
    %990 = vmatprep.subr.mxu0 0.0
    %991 = vmatpush1.msra.mxu0 %v877
    %992 = vmatprep.subr.mxu0 0.0
    %993 = vmatpush1.msra.mxu0 %v878
    %994 = vmatprep.subr.mxu0 0.0
    %995 = vmatpush1.msra.mxu0 %v879
    %996 = vmatprep.subr.mxu0 0.0
    %997 = vmatpush1.msra.mxu0 %v880
    %998 = vmatprep.subr.mxu0 0.0
    %999 = vmatpush1.msra.mxu0 %v881
    %1000 = vmatprep.subr.mxu0 0.0
    %1001 = vmatpush1.msra.mxu0 %v882
    %1002 = vmatprep.mubr.f32.mxu0 %v932
    %1003 = vmatmul.mubr.f32.gmra.mrb[0].mxu0 %v924
    %v1004 = vpop.f32.mrb[0].mxu0
    %v1005 = vadd.f32 0.0, %v1004
    %v1006 = vpop.f32.mrb[0].mxu0
    %1007 = vdwg.mxu0
    %1008 = vmatprep.subr.mxu0 0.0
    %1009 = vmatpush1.msra.mxu0 %v883
    %1010 = vmatprep.subr.mxu0 0.0
    %1011 = vmatpush1.msra.mxu0 %v884
    %1012 = vmatprep.subr.mxu0 0.0
    %1013 = vmatpush1.msra.mxu0 %v885
    %1014 = vmatprep.subr.mxu0 0.0
    %1015 = vmatpush1.msra.mxu0 %v886
    %1016 = vmatprep.subr.mxu0 0.0
    %1017 = vmatpush1.msra.mxu0 %v887
    %1018 = vmatprep.subr.mxu0 0.0
    %1019 = vmatpush1.msra.mxu0 %v888
    %1020 = vmatprep.subr.mxu0 0.0
    %1021 = vmatpush1.msra.mxu0 %v889
    %1022 = vmatprep.subr.mxu0 0.0
    %1023 = vmatpush1.msra.mxu0 %v890
    %1024 = vmatprep.subr.mxu0 0.0
    %1025 = vmatpush1.msra.mxu0 %v891
    %1026 = vmatprep.subr.mxu0 0.0
    %1027 = vmatpush1.msra.mxu0 %v892
    %1028 = vmatprep.subr.mxu0 0.0
    %1029 = vmatpush1.msra.mxu0 %v893
    %1030 = vmatprep.subr.mxu0 0.0
    %1031 = vmatpush1.msra.mxu0 %v894
    %1032 = vmatprep.subr.mxu0 0.0
    %1033 = vmatpush1.msra.mxu0 %v895
    %1034 = vmatprep.subr.mxu0 0.0
    %1035 = vmatpush1.msra.mxu0 %v896
    %1036 = vmatprep.subr.mxu0 0.0
    %1037 = vmatpush1.msra.mxu0 %v897
    %1038 = vmatprep.subr.mxu0 0.0
    %1039 = vmatpush1.msra.mxu0 %v898
    %1040 = vmatprep.subr.mxu0 0.0
    %1041 = vmatpush1.msra.mxu0 %v899
    %1042 = vmatprep.subr.mxu0 0.0
    %1043 = vmatpush1.msra.mxu0 %v900
    %1044 = vmatprep.subr.mxu0 0.0
    %1045 = vmatpush1.msra.mxu0 %v901
    %1046 = vmatprep.subr.mxu0 0.0
    %1047 = vmatpush1.msra.mxu0 %v902
    %1048 = vmatprep.subr.mxu0 0.0
    %1049 = vmatpush1.msra.mxu0 %v903
    %1050 = vmatprep.subr.mxu0 0.0
    %1051 = vmatpush1.msra.mxu0 %v904
    %1052 = vmatprep.subr.mxu0 0.0
    %1053 = vmatpush1.msra.mxu0 %v905
    %1054 = vmatprep.subr.mxu0 0.0
    %1055 = vmatpush1.msra.mxu0 %v906
    %1056 = vmatprep.subr.mxu0 0.0
    %1057 = vmatpush1.msra.mxu0 %v907
    %1058 = vmatprep.subr.mxu0 0.0
    %1059 = vmatpush1.msra.mxu0 %v908
    %1060 = vmatprep.subr.mxu0 0.0
    %1061 = vmatpush1.msra.mxu0 %v909
    %1062 = vmatprep.subr.mxu0 0.0
    %1063 = vmatpush1.msra.mxu0 %v910
    %1064 = vmatprep.subr.mxu0 0.0
    %1065 = vmatpush1.msra.mxu0 %v911
    %1066 = vmatprep.subr.mxu0 0.0
    %1067 = vmatpush1.msra.mxu0 %v912
    %1068 = vmatprep.subr.mxu0 0.0
    %1069 = vmatpush1.msra.mxu0 %v913
    %1070 = vmatprep.subr.mxu0 0.0
    %1071 = vmatpush1.msra.mxu0 %v914
    %1072 = vmatprep.mubr.f32.mxu0 %v933
    %1073 = vmatmul.mubr.f32.gmra.mrb[0].mxu0 %v931
    %v1074 = vpop.f32.mrb[0].mxu0
    %v1075 = vadd.f32 %v1005, %v1074
    %v1076 = vpop.f32.mrb[0].mxu0
    %1077 = vdwg.mxu0
    %v1078 = vld [vmem:[%s4] sm:$0xff]
    %v1079 = vld [vmem:[%s4 + $0x8] sm:$0xff]
    %v1080 = vld [vmem:[%s4 + $0x10] sm:$0xff]
    %v1081 = vld [vmem:[%s4 + $0x18] sm:$0xff]
    %v1082 = vld [vmem:[%s4 + $0x20] sm:$0xff]
    %v1083 = vld [vmem:[%s4 + $0x28] sm:$0xff]
    %v1084 = vld [vmem:[%s4 + $0x30] sm:$0xff]
    %v1085 = vld [vmem:[%s4 + $0x38] sm:$0xff]
    %v1086 = vld [vmem:[%s4 + $0x40] sm:$0xff]
    %v1087 = vld [vmem:[%s4 + $0x48] sm:$0xff]
    %v1088 = vld [vmem:[%s4 + $0x50] sm:$0xff]
    %v1089 = vld [vmem:[%s4 + $0x58] sm:$0xff]
    %v1090 = vld [vmem:[%s4 + $0x60] sm:$0xff]
    %v1091 = vld [vmem:[%s4 + $0x68] sm:$0xff]
    %v1092 = vld [vmem:[%s4 + $0x70] sm:$0xff]
    %v1093 = vld [vmem:[%s4 + $0x78] sm:$0xff]
    %v1094 = vld [vmem:[%s4 + $0x80] sm:$0xff]
    %v1095 = vld [vmem:[%s4 + $0x88] sm:$0xff]
    %v1096 = vld [vmem:[%s4 + $0x90] sm:$0xff]
    %v1097 = vld [vmem:[%s4 + $0x98] sm:$0xff]
    %v1098 = vld [vmem:[%s4 + $0xa0] sm:$0xff]
    %v1099 = vld [vmem:[%s4 + $0xa8] sm:$0xff]
    %v1100 = vld [vmem:[%s4 + $0xb0] sm:$0xff]
    %v1101 = vld [vmem:[%s4 + $0xb8] sm:$0xff]
    %v1102 = vld [vmem:[%s4 + $0xc0] sm:$0xff]
    %v1103 = vld [vmem:[%s4 + $0xc8] sm:$0xff]
    %v1104 = vld [vmem:[%s4 + $0xd0] sm:$0xff]
    %v1105 = vld [vmem:[%s4 + $0xd8] sm:$0xff]
    %v1106 = vld [vmem:[%s4 + $0xe0] sm:$0xff]
    %v1107 = vld [vmem:[%s4 + $0xe8] sm:$0xff]
    %v1108 = vld [vmem:[%s4 + $0xf0] sm:$0xff]
    %v1109 = vld [vmem:[%s4 + $0xf8] sm:$0xff]
    %v1110 = vld [vmem:[%s4 + $0x100] sm:$0xff]
    %v1111 = vld [vmem:[%s4 + $0x108] sm:$0xff]
    %v1112 = vld [vmem:[%s4 + $0x110] sm:$0xff]
    %v1113 = vld [vmem:[%s4 + $0x118] sm:$0xff]
    %v1114 = vld [vmem:[%s4 + $0x120] sm:$0xff]
    %v1115 = vld [vmem:[%s4 + $0x128] sm:$0xff]
    %v1116 = vld [vmem:[%s4 + $0x130] sm:$0xff]
    %v1117 = vld [vmem:[%s4 + $0x138] sm:$0xff]
    %v1118 = vld [vmem:[%s4 + $0x140] sm:$0xff]
    %v1119 = vld [vmem:[%s4 + $0x148] sm:$0xff]
    %v1120 = vld [vmem:[%s4 + $0x150] sm:$0xff]
    %v1121 = vld [vmem:[%s4 + $0x158] sm:$0xff]
    %v1122 = vld [vmem:[%s4 + $0x160] sm:$0xff]
    %v1123 = vld [vmem:[%s4 + $0x168] sm:$0xff]
    %v1124 = vld [vmem:[%s4 + $0x170] sm:$0xff]
    %v1125 = vld [vmem:[%s4 + $0x178] sm:$0xff]
    %v1126 = vld [vmem:[%s4 + $0x180] sm:$0xff]
    %v1127 = vld [vmem:[%s4 + $0x188] sm:$0xff]
    %v1128 = vld [vmem:[%s4 + $0x190] sm:$0xff]
    %v1129 = vld [vmem:[%s4 + $0x198] sm:$0xff]
    %v1130 = vld [vmem:[%s4 + $0x1a0] sm:$0xff]
    %v1131 = vld [vmem:[%s4 + $0x1a8] sm:$0xff]
    %v1132 = vld [vmem:[%s4 + $0x1b0] sm:$0xff]
    %v1133 = vld [vmem:[%s4 + $0x1b8] sm:$0xff]
    %v1134 = vld [vmem:[%s4 + $0x1c0] sm:$0xff]
    %v1135 = vld [vmem:[%s4 + $0x1c8] sm:$0xff]
    %v1136 = vld [vmem:[%s4 + $0x1d0] sm:$0xff]
    %v1137 = vld [vmem:[%s4 + $0x1d8] sm:$0xff]
    %v1138 = vld [vmem:[%s4 + $0x1e0] sm:$0xff]
    %v1139 = vld [vmem:[%s4 + $0x1e8] sm:$0xff]
    %v1140 = vld [vmem:[%s4 + $0x1f0] sm:$0xff]
    %v1141 = vld [vmem:[%s4 + $0x1f8] sm:$0xff]
    %v1142 = vld [vmem:[%s4 + $0x200] sm:$0xff]
    %v1143 = vld [vmem:[%s4 + $0x208] sm:$0xff]
    %v1144 = vld [vmem:[%s4 + $0x210] sm:$0xff]
    %v1145 = vld [vmem:[%s4 + $0x218] sm:$0xff]
    %v1146 = vld [vmem:[%s4 + $0x220] sm:$0xff]
    %v1147 = vld [vmem:[%s4 + $0x228] sm:$0xff]
    %v1148 = vld [vmem:[%s4 + $0x230] sm:$0xff]
    %v1149 = vld [vmem:[%s4 + $0x238] sm:$0xff]
    %v1150 = vld [vmem:[%s4 + $0x240] sm:$0xff]
    %v1151 = vld [vmem:[%s4 + $0x248] sm:$0xff]
    %v1152 = vld [vmem:[%s4 + $0x250] sm:$0xff]
    %v1153 = vld [vmem:[%s4 + $0x258] sm:$0xff]
    %v1154 = vld [vmem:[%s4 + $0x260] sm:$0xff]
    %v1155 = vld [vmem:[%s4 + $0x268] sm:$0xff]
    %v1156 = vld [vmem:[%s4 + $0x270] sm:$0xff]
    %v1157 = vld [vmem:[%s4 + $0x278] sm:$0xff]
    %v1158 = vld [vmem:[%s4 + $0x280] sm:$0xff]
    %v1159 = vld [vmem:[%s4 + $0x288] sm:$0xff]
    %v1160 = vld [vmem:[%s4 + $0x290] sm:$0xff]
    %v1161 = vld [vmem:[%s4 + $0x298] sm:$0xff]
    %v1162 = vld [vmem:[%s4 + $0x2a0] sm:$0xff]
    %v1163 = vld [vmem:[%s4 + $0x2a8] sm:$0xff]
    %v1164 = vld [vmem:[%s4 + $0x2b0] sm:$0xff]
    %v1165 = vld [vmem:[%s4 + $0x2b8] sm:$0xff]
    %v1166 = vld [vmem:[%s4 + $0x2c0] sm:$0xff]
    %v1167 = vld [vmem:[%s4 + $0x2c8] sm:$0xff]
    %v1168 = vld [vmem:[%s4 + $0x2d0] sm:$0xff]
    %v1169 = vld [vmem:[%s4 + $0x2d8] sm:$0xff]
    %v1170 = vld [vmem:[%s4 + $0x2e0] sm:$0xff]
    %v1171 = vld [vmem:[%s4 + $0x2e8] sm:$0xff]
    %v1172 = vld [vmem:[%s4 + $0x2f0] sm:$0xff]
    %v1173 = vld [vmem:[%s4 + $0x2f8] sm:$0xff]
    %v1174 = vld [vmem:[%s4 + $0x300] sm:$0xff]
    %v1175 = vld [vmem:[%s4 + $0x308] sm:$0xff]
    %v1176 = vld [vmem:[%s4 + $0x310] sm:$0xff]
    %v1177 = vld [vmem:[%s4 + $0x318] sm:$0xff]
    %v1178 = vld [vmem:[%s4 + $0x320] sm:$0xff]
    %v1179 = vld [vmem:[%s4 + $0x328] sm:$0xff]
    %v1180 = vld [vmem:[%s4 + $0x330] sm:$0xff]
    %v1181 = vld [vmem:[%s4 + $0x338] sm:$0xff]
    %v1182 = vld [vmem:[%s4 + $0x340] sm:$0xff]
    %v1183 = vld [vmem:[%s4 + $0x348] sm:$0xff]
    %v1184 = vld [vmem:[%s4 + $0x350] sm:$0xff]
    %v1185 = vld [vmem:[%s4 + $0x358] sm:$0xff]
    %v1186 = vld [vmem:[%s4 + $0x360] sm:$0xff]
    %v1187 = vld [vmem:[%s4 + $0x368] sm:$0xff]
    %v1188 = vld [vmem:[%s4 + $0x370] sm:$0xff]
    %v1189 = vld [vmem:[%s4 + $0x378] sm:$0xff]
    %v1190 = vld [vmem:[%s4 + $0x380] sm:$0xff]
    %v1191 = vld [vmem:[%s4 + $0x388] sm:$0xff]
    %v1192 = vld [vmem:[%s4 + $0x390] sm:$0xff]
    %v1193 = vld [vmem:[%s4 + $0x398] sm:$0xff]
    %v1194 = vld [vmem:[%s4 + $0x3a0] sm:$0xff]
    %v1195 = vld [vmem:[%s4 + $0x3a8] sm:$0xff]
    %v1196 = vld [vmem:[%s4 + $0x3b0] sm:$0xff]
    %v1197 = vld [vmem:[%s4 + $0x3b8] sm:$0xff]
    %v1198 = vld [vmem:[%s4 + $0x3c0] sm:$0xff]
    %v1199 = vld [vmem:[%s4 + $0x3c8] sm:$0xff]
    %v1200 = vld [vmem:[%s4 + $0x3d0] sm:$0xff]
    %v1201 = vld [vmem:[%s4 + $0x3d8] sm:$0xff]
    %v1202 = vld [vmem:[%s4 + $0x3e0] sm:$0xff]
    %v1203 = vld [vmem:[%s4 + $0x3e8] sm:$0xff]
    %v1204 = vld [vmem:[%s4 + $0x3f0] sm:$0xff]
    %v1205 = vld [vmem:[%s4 + $0x3f8] sm:$0xff]
    %v1206 = vld [vmem:[%s5] sm:$0xff]
    %v1208 = vlaneseq
    %v1209 = vshrl.u32 %v1208, 7
    %v1210 = vsub.s32 0, %v1209
    %v1211 = vrot.slane %v1206, %v1210
    %v1212 = vlaneseq
    %v1213 = vshrl.u32 %v1212, 7
    %v1214 = vsub.s32 1, %v1213
    %v1215 = vrot.slane %v1206, %v1214
    %v1216 = vlaneseq
    %v1217 = vshrl.u32 %v1216, 7
    %v1218 = vsub.s32 2, %v1217
    %v1219 = vrot.slane %v1206, %v1218
    %v1220 = vlaneseq
    %v1221 = vshrl.u32 %v1220, 7
    %v1222 = vsub.s32 3, %v1221
    %v1223 = vrot.slane %v1206, %v1222
    %v1224 = vlaneseq
    %v1225 = vshrl.u32 %v1224, 7
    %v1226 = vsub.s32 4, %v1225
    %v1227 = vrot.slane %v1206, %v1226
    %v1228 = vlaneseq
    %v1229 = vshrl.u32 %v1228, 7
    %v1230 = vsub.s32 5, %v1229
    %v1231 = vrot.slane %v1206, %v1230
    %v1232 = vlaneseq
    %v1233 = vshrl.u32 %v1232, 7
    %v1234 = vsub.s32 6, %v1233
    %v1235 = vrot.slane %v1206, %v1234
    %v1236 = vlaneseq
    %v1237 = vshrl.u32 %v1236, 7
    %v1238 = vsub.s32 7, %v1237
    %v1239 = vrot.slane %v1206, %v1238
    %1248 = vmatprep.subr.mxu0 %v1079
    %1249 = vmatpush1.msra.mxu0 %v1078
    %1250 = vmatprep.subr.mxu0 %v1087
    %1251 = vmatpush1.msra.mxu0 %v1086
    %1252 = vmatprep.subr.mxu0 %v1095
    %1253 = vmatpush1.msra.mxu0 %v1094
    %1254 = vmatprep.subr.mxu0 %v1103
    %1255 = vmatpush1.msra.mxu0 %v1102
    %1256 = vmatprep.subr.mxu0 %v1111
    %1257 = vmatpush1.msra.mxu0 %v1110
    %1258 = vmatprep.subr.mxu0 %v1119
    %1259 = vmatpush1.msra.mxu0 %v1118
    %1260 = vmatprep.subr.mxu0 %v1127
    %1261 = vmatpush1.msra.mxu0 %v1126
    %1262 = vmatprep.subr.mxu0 %v1135
    %1263 = vmatpush1.msra.mxu0 %v1134
    %1264 = vmatprep.subr.mxu0 %v1143
    %1265 = vmatpush1.msra.mxu0 %v1142
    %1266 = vmatprep.subr.mxu0 %v1151
    %1267 = vmatpush1.msra.mxu0 %v1150
    %1268 = vmatprep.subr.mxu0 %v1159
    %1269 = vmatpush1.msra.mxu0 %v1158
    %1270 = vmatprep.subr.mxu0 %v1167
    %1271 = vmatpush1.msra.mxu0 %v1166
    %1272 = vmatprep.subr.mxu0 %v1175
    %1273 = vmatpush1.msra.mxu0 %v1174
    %1274 = vmatprep.subr.mxu0 %v1183
    %1275 = vmatpush1.msra.mxu0 %v1182
    %1276 = vmatprep.subr.mxu0 %v1191
    %1277 = vmatpush1.msra.mxu0 %v1190
    %1278 = vmatprep.subr.mxu0 %v1199
    %1279 = vmatpush1.msra.mxu0 %v1198
    %1280 = vmatprep.subr.mxu0 0.0
    %1281 = vmatpush1.msra.mxu0 0.0
    %1282 = vmatprep.subr.mxu0 0.0
    %1283 = vmatpush1.msra.mxu0 0.0
    %1284 = vmatprep.subr.mxu0 0.0
    %1285 = vmatpush1.msra.mxu0 0.0
    %1286 = vmatprep.subr.mxu0 0.0
    %1287 = vmatpush1.msra.mxu0 0.0
    %1288 = vmatprep.subr.mxu0 0.0
    %1289 = vmatpush1.msra.mxu0 0.0
    %1290 = vmatprep.subr.mxu0 0.0
    %1291 = vmatpush1.msra.mxu0 0.0
    %1292 = vmatprep.subr.mxu0 0.0
    %1293 = vmatpush1.msra.mxu0 0.0
    %1294 = vmatprep.subr.mxu0 0.0
    %1295 = vmatpush1.msra.mxu0 0.0
    %1296 = vmatprep.subr.mxu0 0.0
    %1297 = vmatpush1.msra.mxu0 0.0
    %1298 = vmatprep.subr.mxu0 0.0
    %1299 = vmatpush1.msra.mxu0 0.0
    %1300 = vmatprep.subr.mxu0 0.0
    %1301 = vmatpush1.msra.mxu0 0.0
    %1302 = vmatprep.subr.mxu0 0.0
    %1303 = vmatpush1.msra.mxu0 0.0
    %1304 = vmatprep.subr.mxu0 0.0
    %1305 = vmatpush1.msra.mxu0 0.0
    %1306 = vmatprep.subr.mxu0 0.0
    %1307 = vmatpush1.msra.mxu0 0.0
    %1308 = vmatprep.subr.mxu0 0.0
    %1309 = vmatpush1.msra.mxu0 0.0
    %1310 = vmatprep.subr.mxu0 0.0
    %1311 = vmatpush1.msra.mxu0 0.0
    %1312 = vmatprep.mubr.f32.mxu0 0.0
    %1313 = vmatmul.mubr.f32.gmra.mrb[0].mxu0 %v1075
    %v1314 = vpop.f32.mrb[0].mxu0
    %v1315 = vadd.f32 %v1211, %v1314
    %v1316 = vpop.f32.mrb[0].mxu0
    %v1317 = vadd.f32 %v1215, %v1316
    %1318 = vdwg.mxu0
    %1319 = vmatprep.subr.mxu0 %v1081
    %1320 = vmatpush1.msra.mxu0 %v1080
    %1321 = vmatprep.subr.mxu0 %v1089
    %1322 = vmatpush1.msra.mxu0 %v1088
    %1323 = vmatprep.subr.mxu0 %v1097
    %1324 = vmatpush1.msra.mxu0 %v1096
    %1325 = vmatprep.subr.mxu0 %v1105
    %1326 = vmatpush1.msra.mxu0 %v1104
    %1327 = vmatprep.subr.mxu0 %v1113
    %1328 = vmatpush1.msra.mxu0 %v1112
    %1329 = vmatprep.subr.mxu0 %v1121
    %1330 = vmatpush1.msra.mxu0 %v1120
    %1331 = vmatprep.subr.mxu0 %v1129
    %1332 = vmatpush1.msra.mxu0 %v1128
    %1333 = vmatprep.subr.mxu0 %v1137
    %1334 = vmatpush1.msra.mxu0 %v1136
    %1335 = vmatprep.subr.mxu0 %v1145
    %1336 = vmatpush1.msra.mxu0 %v1144
    %1337 = vmatprep.subr.mxu0 %v1153
    %1338 = vmatpush1.msra.mxu0 %v1152
    %1339 = vmatprep.subr.mxu0 %v1161
    %1340 = vmatpush1.msra.mxu0 %v1160
    %1341 = vmatprep.subr.mxu0 %v1169
    %1342 = vmatpush1.msra.mxu0 %v1168
    %1343 = vmatprep.subr.mxu0 %v1177
    %1344 = vmatpush1.msra.mxu0 %v1176
    %1345 = vmatprep.subr.mxu0 %v1185
    %1346 = vmatpush1.msra.mxu0 %v1184
    %1347 = vmatprep.subr.mxu0 %v1193
    %1348 = vmatpush1.msra.mxu0 %v1192
    %1349 = vmatprep.subr.mxu0 %v1201
    %1350 = vmatpush1.msra.mxu0 %v1200
    %1351 = vmatprep.subr.mxu0 0.0
    %1352 = vmatpush1.msra.mxu0 0.0
    %1353 = vmatprep.subr.mxu0 0.0
    %1354 = vmatpush1.msra.mxu0 0.0
    %1355 = vmatprep.subr.mxu0 0.0
    %1356 = vmatpush1.msra.mxu0 0.0
    %1357 = vmatprep.subr.mxu0 0.0
    %1358 = vmatpush1.msra.mxu0 0.0
    %1359 = vmatprep.subr.mxu0 0.0
    %1360 = vmatpush1.msra.mxu0 0.0
    %1361 = vmatprep.subr.mxu0 0.0
    %1362 = vmatpush1.msra.mxu0 0.0
    %1363 = vmatprep.subr.mxu0 0.0
    %1364 = vmatpush1.msra.mxu0 0.0
    %1365 = vmatprep.subr.mxu0 0.0
    %1366 = vmatpush1.msra.mxu0 0.0
    %1367 = vmatprep.subr.mxu0 0.0
    %1368 = vmatpush1.msra.mxu0 0.0
    %1369 = vmatprep.subr.mxu0 0.0
    %1370 = vmatpush1.msra.mxu0 0.0
    %1371 = vmatprep.subr.mxu0 0.0
    %1372 = vmatpush1.msra.mxu0 0.0
    %1373 = vmatprep.subr.mxu0 0.0
    %1374 = vmatpush1.msra.mxu0 0.0
    %1375 = vmatprep.subr.mxu0 0.0
    %1376 = vmatpush1.msra.mxu0 0.0
    %1377 = vmatprep.subr.mxu0 0.0
    %1378 = vmatpush1.msra.mxu0 0.0
    %1379 = vmatprep.subr.mxu0 0.0
    %1380 = vmatpush1.msra.mxu0 0.0
    %1381 = vmatprep.subr.mxu0 0.0
    %1382 = vmatpush1.msra.mxu0 0.0
    %1383 = vmatprep.mubr.f32.mxu0 0.0
    %1384 = vmatmul.mubr.f32.gmra.mrb[0].mxu0 %v1075
    %v1385 = vpop.f32.mrb[0].mxu0
    %v1386 = vadd.f32 %v1219, %v1385
    %v1387 = vpop.f32.mrb[0].mxu0
    %v1388 = vadd.f32 %v1223, %v1387
    %1389 = vdwg.mxu0
    %1390 = vmatprep.subr.mxu0 %v1083
    %1391 = vmatpush1.msra.mxu0 %v1082
    %1392 = vmatprep.subr.mxu0 %v1091
    %1393 = vmatpush1.msra.mxu0 %v1090
    %1394 = vmatprep.subr.mxu0 %v1099
    %1395 = vmatpush1.msra.mxu0 %v1098
    %1396 = vmatprep.subr.mxu0 %v1107
    %1397 = vmatpush1.msra.mxu0 %v1106
    %1398 = vmatprep.subr.mxu0 %v1115
    %1399 = vmatpush1.msra.mxu0 %v1114
    %1400 = vmatprep.subr.mxu0 %v1123
    %1401 = vmatpush1.msra.mxu0 %v1122
    %1402 = vmatprep.subr.mxu0 %v1131
    %1403 = vmatpush1.msra.mxu0 %v1130
    %1404 = vmatprep.subr.mxu0 %v1139
    %1405 = vmatpush1.msra.mxu0 %v1138
    %1406 = vmatprep.subr.mxu0 %v1147
    %1407 = vmatpush1.msra.mxu0 %v1146
    %1408 = vmatprep.subr.mxu0 %v1155
    %1409 = vmatpush1.msra.mxu0 %v1154
    %1410 = vmatprep.subr.mxu0 %v1163
    %1411 = vmatpush1.msra.mxu0 %v1162
    %1412 = vmatprep.subr.mxu0 %v1171
    %1413 = vmatpush1.msra.mxu0 %v1170
    %1414 = vmatprep.subr.mxu0 %v1179
    %1415 = vmatpush1.msra.mxu0 %v1178
    %1416 = vmatprep.subr.mxu0 %v1187
    %1417 = vmatpush1.msra.mxu0 %v1186
    %1418 = vmatprep.subr.mxu0 %v1195
    %1419 = vmatpush1.msra.mxu0 %v1194
    %1420 = vmatprep.subr.mxu0 %v1203
    %1421 = vmatpush1.msra.mxu0 %v1202
    %1422 = vmatprep.subr.mxu0 0.0
    %1423 = vmatpush1.msra.mxu0 0.0
    %1424 = vmatprep.subr.mxu0 0.0
    %1425 = vmatpush1.msra.mxu0 0.0
    %1426 = vmatprep.subr.mxu0 0.0
    %1427 = vmatpush1.msra.mxu0 0.0
    %1428 = vmatprep.subr.mxu0 0.0
    %1429 = vmatpush1.msra.mxu0 0.0
    %1430 = vmatprep.subr.mxu0 0.0
    %1431 = vmatpush1.msra.mxu0 0.0
    %1432 = vmatprep.subr.mxu0 0.0
    %1433 = vmatpush1.msra.mxu0 0.0
    %1434 = vmatprep.subr.mxu0 0.0
    %1435 = vmatpush1.msra.mxu0 0.0
    %1436 = vmatprep.subr.mxu0 0.0
    %1437 = vmatpush1.msra.mxu0 0.0
    %1438 = vmatprep.subr.mxu0 0.0
    %1439 = vmatpush1.msra.mxu0 0.0
    %1440 = vmatprep.subr.mxu0 0.0
    %1441 = vmatpush1.msra.mxu0 0.0
    %1442 = vmatprep.subr.mxu0 0.0
    %1443 = vmatpush1.msra.mxu0 0.0
    %1444 = vmatprep.subr.mxu0 0.0
    %1445 = vmatpush1.msra.mxu0 0.0
    %1446 = vmatprep.subr.mxu0 0.0
    %1447 = vmatpush1.msra.mxu0 0.0
    %1448 = vmatprep.subr.mxu0 0.0
    %1449 = vmatpush1.msra.mxu0 0.0
    %1450 = vmatprep.subr.mxu0 0.0
    %1451 = vmatpush1.msra.mxu0 0.0
    %1452 = vmatprep.subr.mxu0 0.0
    %1453 = vmatpush1.msra.mxu0 0.0
    %1454 = vmatprep.mubr.f32.mxu0 0.0
    %1455 = vmatmul.mubr.f32.gmra.mrb[0].mxu0 %v1075
    %v1456 = vpop.f32.mrb[0].mxu0
    %v1457 = vadd.f32 %v1227, %v1456
    %v1458 = vpop.f32.mrb[0].mxu0
    %v1459 = vadd.f32 %v1231, %v1458
    %1460 = vdwg.mxu0
    %1461 = vmatprep.subr.mxu0 %v1085
    %1462 = vmatpush1.msra.mxu0 %v1084
    %1463 = vmatprep.subr.mxu0 %v1093
    %1464 = vmatpush1.msra.mxu0 %v1092
    %1465 = vmatprep.subr.mxu0 %v1101
    %1466 = vmatpush1.msra.mxu0 %v1100
    %1467 = vmatprep.subr.mxu0 %v1109
    %1468 = vmatpush1.msra.mxu0 %v1108
    %1469 = vmatprep.subr.mxu0 %v1117
    %1470 = vmatpush1.msra.mxu0 %v1116
    %1471 = vmatprep.subr.mxu0 %v1125
    %1472 = vmatpush1.msra.mxu0 %v1124
    %1473 = vmatprep.subr.mxu0 %v1133
    %1474 = vmatpush1.msra.mxu0 %v1132
    %1475 = vmatprep.subr.mxu0 %v1141
    %1476 = vmatpush1.msra.mxu0 %v1140
    %1477 = vmatprep.subr.mxu0 %v1149
    %1478 = vmatpush1.msra.mxu0 %v1148
    %1479 = vmatprep.subr.mxu0 %v1157
    %1480 = vmatpush1.msra.mxu0 %v1156
    %1481 = vmatprep.subr.mxu0 %v1165
    %1482 = vmatpush1.msra.mxu0 %v1164
    %1483 = vmatprep.subr.mxu0 %v1173
    %1484 = vmatpush1.msra.mxu0 %v1172
    %1485 = vmatprep.subr.mxu0 %v1181
    %1486 = vmatpush1.msra.mxu0 %v1180
    %1487 = vmatprep.subr.mxu0 %v1189
    %1488 = vmatpush1.msra.mxu0 %v1188
    %1489 = vmatprep.subr.mxu0 %v1197
    %1490 = vmatpush1.msra.mxu0 %v1196
    %1491 = vmatprep.subr.mxu0 %v1205
    %1492 = vmatpush1.msra.mxu0 %v1204
    %1493 = vmatprep.subr.mxu0 0.0
    %1494 = vmatpush1.msra.mxu0 0.0
    %1495 = vmatprep.subr.mxu0 0.0
    %1496 = vmatpush1.msra.mxu0 0.0
    %1497 = vmatprep.subr.mxu0 0.0
    %1498 = vmatpush1.msra.mxu0 0.0
    %1499 = vmatprep.subr.mxu0 0.0
    %1500 = vmatpush1.msra.mxu0 0.0
    %1501 = vmatprep.subr.mxu0 0.0
    %1502 = vmatpush1.msra.mxu0 0.0
    %1503 = vmatprep.subr.mxu0 0.0
    %1504 = vmatpush1.msra.mxu0 0.0
    %1505 = vmatprep.subr.mxu0 0.0
    %1506 = vmatpush1.msra.mxu0 0.0
    %1507 = vmatprep.subr.mxu0 0.0
    %1508 = vmatpush1.msra.mxu0 0.0
    %1509 = vmatprep.subr.mxu0 0.0
    %1510 = vmatpush1.msra.mxu0 0.0
    %1511 = vmatprep.subr.mxu0 0.0
    %1512 = vmatpush1.msra.mxu0 0.0
    %1513 = vmatprep.subr.mxu0 0.0
    %1514 = vmatpush1.msra.mxu0 0.0
    %1515 = vmatprep.subr.mxu0 0.0
    %1516 = vmatpush1.msra.mxu0 0.0
    %1517 = vmatprep.subr.mxu0 0.0
    %1518 = vmatpush1.msra.mxu0 0.0
    %1519 = vmatprep.subr.mxu0 0.0
    %1520 = vmatpush1.msra.mxu0 0.0
    %1521 = vmatprep.subr.mxu0 0.0
    %1522 = vmatpush1.msra.mxu0 0.0
    %1523 = vmatprep.subr.mxu0 0.0
    %1524 = vmatpush1.msra.mxu0 0.0
    %1525 = vmatprep.mubr.f32.mxu0 0.0
    %1526 = vmatmul.mubr.f32.gmra.mrb[0].mxu0 %v1075
    %v1527 = vpop.f32.mrb[0].mxu0
    %v1528 = vadd.f32 %v1235, %v1527
    %v1529 = vpop.f32.mrb[0].mxu0
    %v1530 = vadd.f32 %v1239, %v1529
    %1531 = vdwg.mxu0
    %v1532 = vld [vmem:[%s6] sm:$0xff]
    %v1533 = vld [vmem:[%s6 + $0x8] sm:$0xff]
    %v1534 = vld [vmem:[%s6 + $0x10] sm:$0xff]
    %v1535 = vld [vmem:[%s6 + $0x18] sm:$0xff]
    %v1536 = vld [vmem:[%s6 + $0x20] sm:$0xff]
    %v1537 = vld [vmem:[%s6 + $0x28] sm:$0xff]
    %v1538 = vld [vmem:[%s6 + $0x30] sm:$0xff]
    %v1539 = vld [vmem:[%s6 + $0x38] sm:$0xff]
    %v1540 = vld [vmem:[%s6 + $0x40] sm:$0xff]
    %v1541 = vld [vmem:[%s6 + $0x48] sm:$0xff]
    %v1542 = vld [vmem:[%s6 + $0x50] sm:$0xff]
    %v1543 = vld [vmem:[%s6 + $0x58] sm:$0xff]
    %v1544 = vld [vmem:[%s6 + $0x60] sm:$0xff]
    %v1545 = vld [vmem:[%s6 + $0x68] sm:$0xff]
    %v1546 = vld [vmem:[%s6 + $0x70] sm:$0xff]
    %v1547 = vld [vmem:[%s6 + $0x78] sm:$0xff]
    %v1548 = vld [vmem:[%s6 + $0x80] sm:$0xff]
    %v1549 = vld [vmem:[%s6 + $0x88] sm:$0xff]
    %v1550 = vld [vmem:[%s6 + $0x90] sm:$0xff]
    %v1551 = vld [vmem:[%s6 + $0x98] sm:$0xff]
    %v1552 = vld [vmem:[%s6 + $0xa0] sm:$0xff]
    %v1553 = vld [vmem:[%s6 + $0xa8] sm:$0xff]
    %v1554 = vld [vmem:[%s6 + $0xb0] sm:$0xff]
    %v1555 = vld [vmem:[%s6 + $0xb8] sm:$0xff]
    %v1556 = vld [vmem:[%s6 + $0xc0] sm:$0xff]
    %v1557 = vld [vmem:[%s6 + $0xc8] sm:$0xff]
    %v1558 = vld [vmem:[%s6 + $0xd0] sm:$0xff]
    %v1559 = vld [vmem:[%s6 + $0xd8] sm:$0xff]
    %v1560 = vld [vmem:[%s6 + $0xe0] sm:$0xff]
    %v1561 = vld [vmem:[%s6 + $0xe8] sm:$0xff]
    %v1562 = vld [vmem:[%s6 + $0xf0] sm:$0xff]
    %v1563 = vld [vmem:[%s6 + $0xf8] sm:$0xff]
    %v1564 = vld [vmem:[%s6 + $0x100] sm:$0xff]
    %v1565 = vld [vmem:[%s6 + $0x108] sm:$0xff]
    %v1566 = vld [vmem:[%s6 + $0x110] sm:$0xff]
    %v1567 = vld [vmem:[%s6 + $0x118] sm:$0xff]
    %v1568 = vld [vmem:[%s6 + $0x120] sm:$0xff]
    %v1569 = vld [vmem:[%s6 + $0x128] sm:$0xff]
    %v1570 = vld [vmem:[%s6 + $0x130] sm:$0xff]
    %v1571 = vld [vmem:[%s6 + $0x138] sm:$0xff]
    %v1572 = vld [vmem:[%s6 + $0x140] sm:$0xff]
    %v1573 = vld [vmem:[%s6 + $0x148] sm:$0xff]
    %v1574 = vld [vmem:[%s6 + $0x150] sm:$0xff]
    %v1575 = vld [vmem:[%s6 + $0x158] sm:$0xff]
    %v1576 = vld [vmem:[%s6 + $0x160] sm:$0xff]
    %v1577 = vld [vmem:[%s6 + $0x168] sm:$0xff]
    %v1578 = vld [vmem:[%s6 + $0x170] sm:$0xff]
    %v1579 = vld [vmem:[%s6 + $0x178] sm:$0xff]
    %v1580 = vld [vmem:[%s6 + $0x180] sm:$0xff]
    %v1581 = vld [vmem:[%s6 + $0x188] sm:$0xff]
    %v1582 = vld [vmem:[%s6 + $0x190] sm:$0xff]
    %v1583 = vld [vmem:[%s6 + $0x198] sm:$0xff]
    %v1584 = vld [vmem:[%s6 + $0x1a0] sm:$0xff]
    %v1585 = vld [vmem:[%s6 + $0x1a8] sm:$0xff]
    %v1586 = vld [vmem:[%s6 + $0x1b0] sm:$0xff]
    %v1587 = vld [vmem:[%s6 + $0x1b8] sm:$0xff]
    %v1588 = vld [vmem:[%s6 + $0x1c0] sm:$0xff]
    %v1589 = vld [vmem:[%s6 + $0x1c8] sm:$0xff]
    %v1590 = vld [vmem:[%s6 + $0x1d0] sm:$0xff]
    %v1591 = vld [vmem:[%s6 + $0x1d8] sm:$0xff]
    %v1592 = vld [vmem:[%s6 + $0x1e0] sm:$0xff]
    %v1593 = vld [vmem:[%s6 + $0x1e8] sm:$0xff]
    %v1594 = vld [vmem:[%s6 + $0x1f0] sm:$0xff]
    %v1595 = vld [vmem:[%s6 + $0x1f8] sm:$0xff]
    %v1596 = vld [vmem:[%s6 + $0x200] sm:$0xff]
    %v1597 = vld [vmem:[%s6 + $0x208] sm:$0xff]
    %v1598 = vld [vmem:[%s6 + $0x210] sm:$0xff]
    %v1599 = vld [vmem:[%s6 + $0x218] sm:$0xff]
    %v1600 = vld [vmem:[%s6 + $0x220] sm:$0xff]
    %v1601 = vld [vmem:[%s6 + $0x228] sm:$0xff]
    %v1602 = vld [vmem:[%s6 + $0x230] sm:$0xff]
    %v1603 = vld [vmem:[%s6 + $0x238] sm:$0xff]
    %v1604 = vld [vmem:[%s6 + $0x240] sm:$0xff]
    %v1605 = vld [vmem:[%s6 + $0x248] sm:$0xff]
    %v1606 = vld [vmem:[%s6 + $0x250] sm:$0xff]
    %v1607 = vld [vmem:[%s6 + $0x258] sm:$0xff]
    %v1608 = vld [vmem:[%s6 + $0x260] sm:$0xff]
    %v1609 = vld [vmem:[%s6 + $0x268] sm:$0xff]
    %v1610 = vld [vmem:[%s6 + $0x270] sm:$0xff]
    %v1611 = vld [vmem:[%s6 + $0x278] sm:$0xff]
    %v1612 = vld [vmem:[%s6 + $0x280] sm:$0xff]
    %v1613 = vld [vmem:[%s6 + $0x288] sm:$0xff]
    %v1614 = vld [vmem:[%s6 + $0x290] sm:$0xff]
    %v1615 = vld [vmem:[%s6 + $0x298] sm:$0xff]
    %v1616 = vld [vmem:[%s6 + $0x2a0] sm:$0xff]
    %v1617 = vld [vmem:[%s6 + $0x2a8] sm:$0xff]
    %v1618 = vld [vmem:[%s6 + $0x2b0] sm:$0xff]
    %v1619 = vld [vmem:[%s6 + $0x2b8] sm:$0xff]
    %v1620 = vld [vmem:[%s6 + $0x2c0] sm:$0xff]
    %v1621 = vld [vmem:[%s6 + $0x2c8] sm:$0xff]
    %v1622 = vld [vmem:[%s6 + $0x2d0] sm:$0xff]
    %v1623 = vld [vmem:[%s6 + $0x2d8] sm:$0xff]
    %v1624 = vld [vmem:[%s6 + $0x2e0] sm:$0xff]
    %v1625 = vld [vmem:[%s6 + $0x2e8] sm:$0xff]
    %v1626 = vld [vmem:[%s6 + $0x2f0] sm:$0xff]
    %v1627 = vld [vmem:[%s6 + $0x2f8] sm:$0xff]
    %v1628 = vld [vmem:[%s6 + $0x300] sm:$0xff]
    %v1629 = vld [vmem:[%s6 + $0x308] sm:$0xff]
    %v1630 = vld [vmem:[%s6 + $0x310] sm:$0xff]
    %v1631 = vld [vmem:[%s6 + $0x318] sm:$0xff]
    %v1632 = vld [vmem:[%s6 + $0x320] sm:$0xff]
    %v1633 = vld [vmem:[%s6 + $0x328] sm:$0xff]
    %v1634 = vld [vmem:[%s6 + $0x330] sm:$0xff]
    %v1635 = vld [vmem:[%s6 + $0x338] sm:$0xff]
    %v1636 = vld [vmem:[%s6 + $0x340] sm:$0xff]
    %v1637 = vld [vmem:[%s6 + $0x348] sm:$0xff]
    %v1638 = vld [vmem:[%s6 + $0x350] sm:$0xff]
    %v1639 = vld [vmem:[%s6 + $0x358] sm:$0xff]
    %v1640 = vld [vmem:[%s6 + $0x360] sm:$0xff]
    %v1641 = vld [vmem:[%s6 + $0x368] sm:$0xff]
    %v1642 = vld [vmem:[%s6 + $0x370] sm:$0xff]
    %v1643 = vld [vmem:[%s6 + $0x378] sm:$0xff]
    %v1644 = vld [vmem:[%s6 + $0x380] sm:$0xff]
    %v1645 = vld [vmem:[%s6 + $0x388] sm:$0xff]
    %v1646 = vld [vmem:[%s6 + $0x390] sm:$0xff]
    %v1647 = vld [vmem:[%s6 + $0x398] sm:$0xff]
    %v1648 = vld [vmem:[%s6 + $0x3a0] sm:$0xff]
    %v1649 = vld [vmem:[%s6 + $0x3a8] sm:$0xff]
    %v1650 = vld [vmem:[%s6 + $0x3b0] sm:$0xff]
    %v1651 = vld [vmem:[%s6 + $0x3b8] sm:$0xff]
    %v1652 = vld [vmem:[%s6 + $0x3c0] sm:$0xff]
    %v1653 = vld [vmem:[%s6 + $0x3c8] sm:$0xff]
    %v1654 = vld [vmem:[%s6 + $0x3d0] sm:$0xff]
    %v1655 = vld [vmem:[%s6 + $0x3d8] sm:$0xff]
    %v1656 = vld [vmem:[%s6 + $0x3e0] sm:$0xff]
    %v1657 = vld [vmem:[%s6 + $0x3e8] sm:$0xff]
    %v1658 = vld [vmem:[%s6 + $0x3f0] sm:$0xff]
    %v1659 = vld [vmem:[%s6 + $0x3f8] sm:$0xff]
    %v1660 = vld [vmem:[%s6 + $0x400] sm:$0xff]
    %v1661 = vld [vmem:[%s6 + $0x408] sm:$0xff]
    %v1662 = vld [vmem:[%s6 + $0x410] sm:$0xff]
    %v1663 = vld [vmem:[%s6 + $0x418] sm:$0xff]
    %v1664 = vld [vmem:[%s6 + $0x420] sm:$0xff]
    %v1665 = vld [vmem:[%s6 + $0x428] sm:$0xff]
    %v1666 = vld [vmem:[%s6 + $0x430] sm:$0xff]
    %v1667 = vld [vmem:[%s6 + $0x438] sm:$0xff]
    %v1668 = vld [vmem:[%s6 + $0x440] sm:$0xff]
    %v1669 = vld [vmem:[%s6 + $0x448] sm:$0xff]
    %v1670 = vld [vmem:[%s6 + $0x450] sm:$0xff]
    %v1671 = vld [vmem:[%s6 + $0x458] sm:$0xff]
    %v1672 = vld [vmem:[%s6 + $0x460] sm:$0xff]
    %v1673 = vld [vmem:[%s6 + $0x468] sm:$0xff]
    %v1674 = vld [vmem:[%s6 + $0x470] sm:$0xff]
    %v1675 = vld [vmem:[%s6 + $0x478] sm:$0xff]
    %v1676 = vld [vmem:[%s6 + $0x480] sm:$0xff]
    %v1677 = vld [vmem:[%s6 + $0x488] sm:$0xff]
    %v1678 = vld [vmem:[%s6 + $0x490] sm:$0xff]
    %v1679 = vld [vmem:[%s6 + $0x498] sm:$0xff]
    %v1680 = vld [vmem:[%s6 + $0x4a0] sm:$0xff]
    %v1681 = vld [vmem:[%s6 + $0x4a8] sm:$0xff]
    %v1682 = vld [vmem:[%s6 + $0x4b0] sm:$0xff]
    %v1683 = vld [vmem:[%s6 + $0x4b8] sm:$0xff]
    %v1684 = vld [vmem:[%s6 + $0x4c0] sm:$0xff]
    %v1685 = vld [vmem:[%s6 + $0x4c8] sm:$0xff]
    %v1686 = vld [vmem:[%s6 + $0x4d0] sm:$0xff]
    %v1687 = vld [vmem:[%s6 + $0x4d8] sm:$0xff]
    %v1688 = vld [vmem:[%s6 + $0x4e0] sm:$0xff]
    %v1689 = vld [vmem:[%s6 + $0x4e8] sm:$0xff]
    %v1690 = vld [vmem:[%s6 + $0x4f0] sm:$0xff]
    %v1691 = vld [vmem:[%s6 + $0x4f8] sm:$0xff]
    %v1692 = vld [vmem:[%s6 + $0x500] sm:$0xff]
    %v1693 = vld [vmem:[%s6 + $0x508] sm:$0xff]
    %v1694 = vld [vmem:[%s6 + $0x510] sm:$0xff]
    %v1695 = vld [vmem:[%s6 + $0x518] sm:$0xff]
    %v1696 = vld [vmem:[%s6 + $0x520] sm:$0xff]
    %v1697 = vld [vmem:[%s6 + $0x528] sm:$0xff]
    %v1698 = vld [vmem:[%s6 + $0x530] sm:$0xff]
    %v1699 = vld [vmem:[%s6 + $0x538] sm:$0xff]
    %v1700 = vld [vmem:[%s6 + $0x540] sm:$0xff]
    %v1701 = vld [vmem:[%s6 + $0x548] sm:$0xff]
    %v1702 = vld [vmem:[%s6 + $0x550] sm:$0xff]
    %v1703 = vld [vmem:[%s6 + $0x558] sm:$0xff]
    %v1704 = vld [vmem:[%s6 + $0x560] sm:$0xff]
    %v1705 = vld [vmem:[%s6 + $0x568] sm:$0xff]
    %v1706 = vld [vmem:[%s6 + $0x570] sm:$0xff]
    %v1707 = vld [vmem:[%s6 + $0x578] sm:$0xff]
    %v1708 = vld [vmem:[%s6 + $0x580] sm:$0xff]
    %v1709 = vld [vmem:[%s6 + $0x588] sm:$0xff]
    %v1710 = vld [vmem:[%s6 + $0x590] sm:$0xff]
    %v1711 = vld [vmem:[%s6 + $0x598] sm:$0xff]
    %v1712 = vld [vmem:[%s6 + $0x5a0] sm:$0xff]
    %v1713 = vld [vmem:[%s6 + $0x5a8] sm:$0xff]
    %v1714 = vld [vmem:[%s6 + $0x5b0] sm:$0xff]
    %v1715 = vld [vmem:[%s6 + $0x5b8] sm:$0xff]
    %v1716 = vld [vmem:[%s6 + $0x5c0] sm:$0xff]
    %v1717 = vld [vmem:[%s6 + $0x5c8] sm:$0xff]
    %v1718 = vld [vmem:[%s6 + $0x5d0] sm:$0xff]
    %v1719 = vld [vmem:[%s6 + $0x5d8] sm:$0xff]
    %v1720 = vld [vmem:[%s6 + $0x5e0] sm:$0xff]
    %v1721 = vld [vmem:[%s6 + $0x5e8] sm:$0xff]
    %v1722 = vld [vmem:[%s6 + $0x5f0] sm:$0xff]
    %v1723 = vld [vmem:[%s6 + $0x5f8] sm:$0xff]
    %v1724 = vld [vmem:[%s6 + $0x600] sm:$0xff]
    %v1725 = vld [vmem:[%s6 + $0x608] sm:$0xff]
    %v1726 = vld [vmem:[%s6 + $0x610] sm:$0xff]
    %v1727 = vld [vmem:[%s6 + $0x618] sm:$0xff]
    %v1728 = vld [vmem:[%s6 + $0x620] sm:$0xff]
    %v1729 = vld [vmem:[%s6 + $0x628] sm:$0xff]
    %v1730 = vld [vmem:[%s6 + $0x630] sm:$0xff]
    %v1731 = vld [vmem:[%s6 + $0x638] sm:$0xff]
    %v1732 = vld [vmem:[%s6 + $0x640] sm:$0xff]
    %v1733 = vld [vmem:[%s6 + $0x648] sm:$0xff]
    %v1734 = vld [vmem:[%s6 + $0x650] sm:$0xff]
    %v1735 = vld [vmem:[%s6 + $0x658] sm:$0xff]
    %v1736 = vld [vmem:[%s6 + $0x660] sm:$0xff]
    %v1737 = vld [vmem:[%s6 + $0x668] sm:$0xff]
    %v1738 = vld [vmem:[%s6 + $0x670] sm:$0xff]
    %v1739 = vld [vmem:[%s6 + $0x678] sm:$0xff]
    %v1740 = vld [vmem:[%s6 + $0x680] sm:$0xff]
    %v1741 = vld [vmem:[%s6 + $0x688] sm:$0xff]
    %v1742 = vld [vmem:[%s6 + $0x690] sm:$0xff]
    %v1743 = vld [vmem:[%s6 + $0x698] sm:$0xff]
    %v1744 = vld [vmem:[%s6 + $0x6a0] sm:$0xff]
    %v1745 = vld [vmem:[%s6 + $0x6a8] sm:$0xff]
    %v1746 = vld [vmem:[%s6 + $0x6b0] sm:$0xff]
    %v1747 = vld [vmem:[%s6 + $0x6b8] sm:$0xff]
    %v1748 = vld [vmem:[%s6 + $0x6c0] sm:$0xff]
    %v1749 = vld [vmem:[%s6 + $0x6c8] sm:$0xff]
    %v1750 = vld [vmem:[%s6 + $0x6d0] sm:$0xff]
    %v1751 = vld [vmem:[%s6 + $0x6d8] sm:$0xff]
    %v1752 = vld [vmem:[%s6 + $0x6e0] sm:$0xff]
    %v1753 = vld [vmem:[%s6 + $0x6e8] sm:$0xff]
    %v1754 = vld [vmem:[%s6 + $0x6f0] sm:$0xff]
    %v1755 = vld [vmem:[%s6 + $0x6f8] sm:$0xff]
    %v1756 = vld [vmem:[%s6 + $0x700] sm:$0xff]
    %v1757 = vld [vmem:[%s6 + $0x708] sm:$0xff]
    %v1758 = vld [vmem:[%s6 + $0x710] sm:$0xff]
    %v1759 = vld [vmem:[%s6 + $0x718] sm:$0xff]
    %v1760 = vld [vmem:[%s6 + $0x720] sm:$0xff]
    %v1761 = vld [vmem:[%s6 + $0x728] sm:$0xff]
    %v1762 = vld [vmem:[%s6 + $0x730] sm:$0xff]
    %v1763 = vld [vmem:[%s6 + $0x738] sm:$0xff]
    %v1764 = vld [vmem:[%s6 + $0x740] sm:$0xff]
    %v1765 = vld [vmem:[%s6 + $0x748] sm:$0xff]
    %v1766 = vld [vmem:[%s6 + $0x750] sm:$0xff]
    %v1767 = vld [vmem:[%s6 + $0x758] sm:$0xff]
    %v1768 = vld [vmem:[%s6 + $0x760] sm:$0xff]
    %v1769 = vld [vmem:[%s6 + $0x768] sm:$0xff]
    %v1770 = vld [vmem:[%s6 + $0x770] sm:$0xff]
    %v1771 = vld [vmem:[%s6 + $0x778] sm:$0xff]
    %v1772 = vld [vmem:[%s6 + $0x780] sm:$0xff]
    %v1773 = vld [vmem:[%s6 + $0x788] sm:$0xff]
    %v1774 = vld [vmem:[%s6 + $0x790] sm:$0xff]
    %v1775 = vld [vmem:[%s6 + $0x798] sm:$0xff]
    %v1776 = vld [vmem:[%s6 + $0x7a0] sm:$0xff]
    %v1777 = vld [vmem:[%s6 + $0x7a8] sm:$0xff]
    %v1778 = vld [vmem:[%s6 + $0x7b0] sm:$0xff]
    %v1779 = vld [vmem:[%s6 + $0x7b8] sm:$0xff]
    %v1780 = vld [vmem:[%s6 + $0x7c0] sm:$0xff]
    %v1781 = vld [vmem:[%s6 + $0x7c8] sm:$0xff]
    %v1782 = vld [vmem:[%s6 + $0x7d0] sm:$0xff]
    %v1783 = vld [vmem:[%s6 + $0x7d8] sm:$0xff]
    %v1784 = vld [vmem:[%s6 + $0x7e0] sm:$0xff]
    %v1785 = vld [vmem:[%s6 + $0x7e8] sm:$0xff]
    %v1786 = vld [vmem:[%s6 + $0x7f0] sm:$0xff]
    %v1787 = vld [vmem:[%s6 + $0x7f8] sm:$0xff]
    %v1788 = vld [vmem:[%s6 + $0x800] sm:$0xff]
    %v1789 = vld [vmem:[%s6 + $0x808] sm:$0xff]
    %v1790 = vld [vmem:[%s6 + $0x810] sm:$0xff]
    %v1791 = vld [vmem:[%s6 + $0x818] sm:$0xff]
    %v1792 = vld [vmem:[%s6 + $0x820] sm:$0xff]
    %v1793 = vld [vmem:[%s6 + $0x828] sm:$0xff]
    %v1794 = vld [vmem:[%s6 + $0x830] sm:$0xff]
    %v1795 = vld [vmem:[%s6 + $0x838] sm:$0xff]
    %v1796 = vld [vmem:[%s6 + $0x840] sm:$0xff]
    %v1797 = vld [vmem:[%s6 + $0x848] sm:$0xff]
    %v1798 = vld [vmem:[%s6 + $0x850] sm:$0xff]
    %v1799 = vld [vmem:[%s6 + $0x858] sm:$0xff]
    %v1800 = vld [vmem:[%s6 + $0x860] sm:$0xff]
    %v1801 = vld [vmem:[%s6 + $0x868] sm:$0xff]
    %v1802 = vld [vmem:[%s6 + $0x870] sm:$0xff]
    %v1803 = vld [vmem:[%s6 + $0x878] sm:$0xff]
    %v1804 = vld [vmem:[%s6 + $0x880] sm:$0xff]
    %v1805 = vld [vmem:[%s6 + $0x888] sm:$0xff]
    %v1806 = vld [vmem:[%s6 + $0x890] sm:$0xff]
    %v1807 = vld [vmem:[%s6 + $0x898] sm:$0xff]
    %v1808 = vld [vmem:[%s6 + $0x8a0] sm:$0xff]
    %v1809 = vld [vmem:[%s6 + $0x8a8] sm:$0xff]
    %v1810 = vld [vmem:[%s6 + $0x8b0] sm:$0xff]
    %v1811 = vld [vmem:[%s6 + $0x8b8] sm:$0xff]
    %v1812 = vld [vmem:[%s6 + $0x8c0] sm:$0xff]
    %v1813 = vld [vmem:[%s6 + $0x8c8] sm:$0xff]
    %v1814 = vld [vmem:[%s6 + $0x8d0] sm:$0xff]
    %v1815 = vld [vmem:[%s6 + $0x8d8] sm:$0xff]
    %v1816 = vld [vmem:[%s6 + $0x8e0] sm:$0xff]
    %v1817 = vld [vmem:[%s6 + $0x8e8] sm:$0xff]
    %v1818 = vld [vmem:[%s6 + $0x8f0] sm:$0xff]
    %v1819 = vld [vmem:[%s6 + $0x8f8] sm:$0xff]
    %v1820 = vld [vmem:[%s6 + $0x900] sm:$0xff]
    %v1821 = vld [vmem:[%s6 + $0x908] sm:$0xff]
    %v1822 = vld [vmem:[%s6 + $0x910] sm:$0xff]
    %v1823 = vld [vmem:[%s6 + $0x918] sm:$0xff]
    %v1824 = vld [vmem:[%s6 + $0x920] sm:$0xff]
    %v1825 = vld [vmem:[%s6 + $0x928] sm:$0xff]
    %v1826 = vld [vmem:[%s6 + $0x930] sm:$0xff]
    %v1827 = vld [vmem:[%s6 + $0x938] sm:$0xff]
    %v1828 = vld [vmem:[%s6 + $0x940] sm:$0xff]
    %v1829 = vld [vmem:[%s6 + $0x948] sm:$0xff]
    %v1830 = vld [vmem:[%s6 + $0x950] sm:$0xff]
    %v1831 = vld [vmem:[%s6 + $0x958] sm:$0xff]
    %v1832 = vld [vmem:[%s6 + $0x960] sm:$0xff]
    %v1833 = vld [vmem:[%s6 + $0x968] sm:$0xff]
    %v1834 = vld [vmem:[%s6 + $0x970] sm:$0xff]
    %v1835 = vld [vmem:[%s6 + $0x978] sm:$0xff]
    %v1836 = vld [vmem:[%s6 + $0x980] sm:$0xff]
    %v1837 = vld [vmem:[%s6 + $0x988] sm:$0xff]
    %v1838 = vld [vmem:[%s6 + $0x990] sm:$0xff]
    %v1839 = vld [vmem:[%s6 + $0x998] sm:$0xff]
    %v1840 = vld [vmem:[%s6 + $0x9a0] sm:$0xff]
    %v1841 = vld [vmem:[%s6 + $0x9a8] sm:$0xff]
    %v1842 = vld [vmem:[%s6 + $0x9b0] sm:$0xff]
    %v1843 = vld [vmem:[%s6 + $0x9b8] sm:$0xff]
    %v1844 = vld [vmem:[%s6 + $0x9c0] sm:$0xff]
    %v1845 = vld [vmem:[%s6 + $0x9c8] sm:$0xff]
    %v1846 = vld [vmem:[%s6 + $0x9d0] sm:$0xff]
    %v1847 = vld [vmem:[%s6 + $0x9d8] sm:$0xff]
    %v1848 = vld [vmem:[%s6 + $0x9e0] sm:$0xff]
    %v1849 = vld [vmem:[%s6 + $0x9e8] sm:$0xff]
    %v1850 = vld [vmem:[%s6 + $0x9f0] sm:$0xff]
    %v1851 = vld [vmem:[%s6 + $0x9f8] sm:$0xff]
    %v1852 = vld [vmem:[%s6 + $0xa00] sm:$0xff]
    %v1853 = vld [vmem:[%s6 + $0xa08] sm:$0xff]
    %v1854 = vld [vmem:[%s6 + $0xa10] sm:$0xff]
    %v1855 = vld [vmem:[%s6 + $0xa18] sm:$0xff]
    %v1856 = vld [vmem:[%s6 + $0xa20] sm:$0xff]
    %v1857 = vld [vmem:[%s6 + $0xa28] sm:$0xff]
    %v1858 = vld [vmem:[%s6 + $0xa30] sm:$0xff]
    %v1859 = vld [vmem:[%s6 + $0xa38] sm:$0xff]
    %v1860 = vld [vmem:[%s6 + $0xa40] sm:$0xff]
    %v1861 = vld [vmem:[%s6 + $0xa48] sm:$0xff]
    %v1862 = vld [vmem:[%s6 + $0xa50] sm:$0xff]
    %v1863 = vld [vmem:[%s6 + $0xa58] sm:$0xff]
    %v1864 = vld [vmem:[%s6 + $0xa60] sm:$0xff]
    %v1865 = vld [vmem:[%s6 + $0xa68] sm:$0xff]
    %v1866 = vld [vmem:[%s6 + $0xa70] sm:$0xff]
    %v1867 = vld [vmem:[%s6 + $0xa78] sm:$0xff]
    %v1868 = vld [vmem:[%s6 + $0xa80] sm:$0xff]
    %v1869 = vld [vmem:[%s6 + $0xa88] sm:$0xff]
    %v1870 = vld [vmem:[%s6 + $0xa90] sm:$0xff]
    %v1871 = vld [vmem:[%s6 + $0xa98] sm:$0xff]
    %v1872 = vld [vmem:[%s6 + $0xaa0] sm:$0xff]
    %v1873 = vld [vmem:[%s6 + $0xaa8] sm:$0xff]
    %v1874 = vld [vmem:[%s6 + $0xab0] sm:$0xff]
    %v1875 = vld [vmem:[%s6 + $0xab8] sm:$0xff]
    %v1876 = vld [vmem:[%s6 + $0xac0] sm:$0xff]
    %v1877 = vld [vmem:[%s6 + $0xac8] sm:$0xff]
    %v1878 = vld [vmem:[%s6 + $0xad0] sm:$0xff]
    %v1879 = vld [vmem:[%s6 + $0xad8] sm:$0xff]
    %v1880 = vld [vmem:[%s6 + $0xae0] sm:$0xff]
    %v1881 = vld [vmem:[%s6 + $0xae8] sm:$0xff]
    %v1882 = vld [vmem:[%s6 + $0xaf0] sm:$0xff]
    %v1883 = vld [vmem:[%s6 + $0xaf8] sm:$0xff]
    %v1884 = vld [vmem:[%s6 + $0xb00] sm:$0xff]
    %v1885 = vld [vmem:[%s6 + $0xb08] sm:$0xff]
    %v1886 = vld [vmem:[%s6 + $0xb10] sm:$0xff]
    %v1887 = vld [vmem:[%s6 + $0xb18] sm:$0xff]
    %v1888 = vld [vmem:[%s6 + $0xb20] sm:$0xff]
    %v1889 = vld [vmem:[%s6 + $0xb28] sm:$0xff]
    %v1890 = vld [vmem:[%s6 + $0xb30] sm:$0xff]
    %v1891 = vld [vmem:[%s6 + $0xb38] sm:$0xff]
    %v1892 = vld [vmem:[%s6 + $0xb40] sm:$0xff]
    %v1893 = vld [vmem:[%s6 + $0xb48] sm:$0xff]
    %v1894 = vld [vmem:[%s6 + $0xb50] sm:$0xff]
    %v1895 = vld [vmem:[%s6 + $0xb58] sm:$0xff]
    %v1896 = vld [vmem:[%s6 + $0xb60] sm:$0xff]
    %v1897 = vld [vmem:[%s6 + $0xb68] sm:$0xff]
    %v1898 = vld [vmem:[%s6 + $0xb70] sm:$0xff]
    %v1899 = vld [vmem:[%s6 + $0xb78] sm:$0xff]
    %v1900 = vld [vmem:[%s6 + $0xb80] sm:$0xff]
    %v1901 = vld [vmem:[%s6 + $0xb88] sm:$0xff]
    %v1902 = vld [vmem:[%s6 + $0xb90] sm:$0xff]
    %v1903 = vld [vmem:[%s6 + $0xb98] sm:$0xff]
    %v1904 = vld [vmem:[%s6 + $0xba0] sm:$0xff]
    %v1905 = vld [vmem:[%s6 + $0xba8] sm:$0xff]
    %v1906 = vld [vmem:[%s6 + $0xbb0] sm:$0xff]
    %v1907 = vld [vmem:[%s6 + $0xbb8] sm:$0xff]
    %v1908 = vld [vmem:[%s6 + $0xbc0] sm:$0xff]
    %v1909 = vld [vmem:[%s6 + $0xbc8] sm:$0xff]
    %v1910 = vld [vmem:[%s6 + $0xbd0] sm:$0xff]
    %v1911 = vld [vmem:[%s6 + $0xbd8] sm:$0xff]
    %v1912 = vld [vmem:[%s6 + $0xbe0] sm:$0xff]
    %v1913 = vld [vmem:[%s6 + $0xbe8] sm:$0xff]
    %v1914 = vld [vmem:[%s6 + $0xbf0] sm:$0xff]
    %v1915 = vld [vmem:[%s6 + $0xbf8] sm:$0xff]
    %v1916 = vld [vmem:[%s6 + $0xc00] sm:$0xff]
    %v1917 = vld [vmem:[%s6 + $0xc08] sm:$0xff]
    %v1918 = vld [vmem:[%s6 + $0xc10] sm:$0xff]
    %v1919 = vld [vmem:[%s6 + $0xc18] sm:$0xff]
    %v1920 = vld [vmem:[%s6 + $0xc20] sm:$0xff]
    %v1921 = vld [vmem:[%s6 + $0xc28] sm:$0xff]
    %v1922 = vld [vmem:[%s6 + $0xc30] sm:$0xff]
    %v1923 = vld [vmem:[%s6 + $0xc38] sm:$0xff]
    %v1924 = vld [vmem:[%s6 + $0xc40] sm:$0xff]
    %v1925 = vld [vmem:[%s6 + $0xc48] sm:$0xff]
    %v1926 = vld [vmem:[%s6 + $0xc50] sm:$0xff]
    %v1927 = vld [vmem:[%s6 + $0xc58] sm:$0xff]
    %v1928 = vld [vmem:[%s6 + $0xc60] sm:$0xff]
    %v1929 = vld [vmem:[%s6 + $0xc68] sm:$0xff]
    %v1930 = vld [vmem:[%s6 + $0xc70] sm:$0xff]
    %v1931 = vld [vmem:[%s6 + $0xc78] sm:$0xff]
    %v1932 = vld [vmem:[%s6 + $0xc80] sm:$0xff]
    %v1933 = vld [vmem:[%s6 + $0xc88] sm:$0xff]
    %v1934 = vld [vmem:[%s6 + $0xc90] sm:$0xff]
    %v1935 = vld [vmem:[%s6 + $0xc98] sm:$0xff]
    %v1936 = vld [vmem:[%s6 + $0xca0] sm:$0xff]
    %v1937 = vld [vmem:[%s6 + $0xca8] sm:$0xff]
    %v1938 = vld [vmem:[%s6 + $0xcb0] sm:$0xff]
    %v1939 = vld [vmem:[%s6 + $0xcb8] sm:$0xff]
    %v1940 = vld [vmem:[%s6 + $0xcc0] sm:$0xff]
    %v1941 = vld [vmem:[%s6 + $0xcc8] sm:$0xff]
    %v1942 = vld [vmem:[%s6 + $0xcd0] sm:$0xff]
    %v1943 = vld [vmem:[%s6 + $0xcd8] sm:$0xff]
    %v1944 = vld [vmem:[%s6 + $0xce0] sm:$0xff]
    %v1945 = vld [vmem:[%s6 + $0xce8] sm:$0xff]
    %v1946 = vld [vmem:[%s6 + $0xcf0] sm:$0xff]
    %v1947 = vld [vmem:[%s6 + $0xcf8] sm:$0xff]
    %v1948 = vld [vmem:[%s6 + $0xd00] sm:$0xff]
    %v1949 = vld [vmem:[%s6 + $0xd08] sm:$0xff]
    %v1950 = vld [vmem:[%s6 + $0xd10] sm:$0xff]
    %v1951 = vld [vmem:[%s6 + $0xd18] sm:$0xff]
    %v1952 = vld [vmem:[%s6 + $0xd20] sm:$0xff]
    %v1953 = vld [vmem:[%s6 + $0xd28] sm:$0xff]
    %v1954 = vld [vmem:[%s6 + $0xd30] sm:$0xff]
    %v1955 = vld [vmem:[%s6 + $0xd38] sm:$0xff]
    %v1956 = vld [vmem:[%s6 + $0xd40] sm:$0xff]
    %v1957 = vld [vmem:[%s6 + $0xd48] sm:$0xff]
    %v1958 = vld [vmem:[%s6 + $0xd50] sm:$0xff]
    %v1959 = vld [vmem:[%s6 + $0xd58] sm:$0xff]
    %v1960 = vld [vmem:[%s6 + $0xd60] sm:$0xff]
    %v1961 = vld [vmem:[%s6 + $0xd68] sm:$0xff]
    %v1962 = vld [vmem:[%s6 + $0xd70] sm:$0xff]
    %v1963 = vld [vmem:[%s6 + $0xd78] sm:$0xff]
    %v1964 = vld [vmem:[%s6 + $0xd80] sm:$0xff]
    %v1965 = vld [vmem:[%s6 + $0xd88] sm:$0xff]
    %v1966 = vld [vmem:[%s6 + $0xd90] sm:$0xff]
    %v1967 = vld [vmem:[%s6 + $0xd98] sm:$0xff]
    %v1968 = vld [vmem:[%s6 + $0xda0] sm:$0xff]
    %v1969 = vld [vmem:[%s6 + $0xda8] sm:$0xff]
    %v1970 = vld [vmem:[%s6 + $0xdb0] sm:$0xff]
    %v1971 = vld [vmem:[%s6 + $0xdb8] sm:$0xff]
    %v1972 = vld [vmem:[%s6 + $0xdc0] sm:$0xff]
    %v1973 = vld [vmem:[%s6 + $0xdc8] sm:$0xff]
    %v1974 = vld [vmem:[%s6 + $0xdd0] sm:$0xff]
    %v1975 = vld [vmem:[%s6 + $0xdd8] sm:$0xff]
    %v1976 = vld [vmem:[%s6 + $0xde0] sm:$0xff]
    %v1977 = vld [vmem:[%s6 + $0xde8] sm:$0xff]
    %v1978 = vld [vmem:[%s6 + $0xdf0] sm:$0xff]
    %v1979 = vld [vmem:[%s6 + $0xdf8] sm:$0xff]
    %v1980 = vld [vmem:[%s6 + $0xe00] sm:$0xff]
    %v1981 = vld [vmem:[%s6 + $0xe08] sm:$0xff]
    %v1982 = vld [vmem:[%s6 + $0xe10] sm:$0xff]
    %v1983 = vld [vmem:[%s6 + $0xe18] sm:$0xff]
    %v1984 = vld [vmem:[%s6 + $0xe20] sm:$0xff]
    %v1985 = vld [vmem:[%s6 + $0xe28] sm:$0xff]
    %v1986 = vld [vmem:[%s6 + $0xe30] sm:$0xff]
    %v1987 = vld [vmem:[%s6 + $0xe38] sm:$0xff]
    %v1988 = vld [vmem:[%s6 + $0xe40] sm:$0xff]
    %v1989 = vld [vmem:[%s6 + $0xe48] sm:$0xff]
    %v1990 = vld [vmem:[%s6 + $0xe50] sm:$0xff]
    %v1991 = vld [vmem:[%s6 + $0xe58] sm:$0xff]
    %v1992 = vld [vmem:[%s6 + $0xe60] sm:$0xff]
    %v1993 = vld [vmem:[%s6 + $0xe68] sm:$0xff]
    %v1994 = vld [vmem:[%s6 + $0xe70] sm:$0xff]
    %v1995 = vld [vmem:[%s6 + $0xe78] sm:$0xff]
    %v1996 = vld [vmem:[%s6 + $0xe80] sm:$0xff]
    %v1997 = vld [vmem:[%s6 + $0xe88] sm:$0xff]
    %v1998 = vld [vmem:[%s6 + $0xe90] sm:$0xff]
    %v1999 = vld [vmem:[%s6 + $0xe98] sm:$0xff]
    %v2000 = vld [vmem:[%s6 + $0xea0] sm:$0xff]
    %v2001 = vld [vmem:[%s6 + $0xea8] sm:$0xff]
    %v2002 = vld [vmem:[%s6 + $0xeb0] sm:$0xff]
    %v2003 = vld [vmem:[%s6 + $0xeb8] sm:$0xff]
    %v2004 = vld [vmem:[%s6 + $0xec0] sm:$0xff]
    %v2005 = vld [vmem:[%s6 + $0xec8] sm:$0xff]
    %v2006 = vld [vmem:[%s6 + $0xed0] sm:$0xff]
    %v2007 = vld [vmem:[%s6 + $0xed8] sm:$0xff]
    %v2008 = vld [vmem:[%s6 + $0xee0] sm:$0xff]
    %v2009 = vld [vmem:[%s6 + $0xee8] sm:$0xff]
    %v2010 = vld [vmem:[%s6 + $0xef0] sm:$0xff]
    %v2011 = vld [vmem:[%s6 + $0xef8] sm:$0xff]
    %v2012 = vld [vmem:[%s6 + $0xf00] sm:$0xff]
    %v2013 = vld [vmem:[%s6 + $0xf08] sm:$0xff]
    %v2014 = vld [vmem:[%s6 + $0xf10] sm:$0xff]
    %v2015 = vld [vmem:[%s6 + $0xf18] sm:$0xff]
    %v2016 = vld [vmem:[%s6 + $0xf20] sm:$0xff]
    %v2017 = vld [vmem:[%s6 + $0xf28] sm:$0xff]
    %v2018 = vld [vmem:[%s6 + $0xf30] sm:$0xff]
    %v2019 = vld [vmem:[%s6 + $0xf38] sm:$0xff]
    %v2020 = vld [vmem:[%s6 + $0xf40] sm:$0xff]
    %v2021 = vld [vmem:[%s6 + $0xf48] sm:$0xff]
    %v2022 = vld [vmem:[%s6 + $0xf50] sm:$0xff]
    %v2023 = vld [vmem:[%s6 + $0xf58] sm:$0xff]
    %v2024 = vld [vmem:[%s6 + $0xf60] sm:$0xff]
    %v2025 = vld [vmem:[%s6 + $0xf68] sm:$0xff]
    %v2026 = vld [vmem:[%s6 + $0xf70] sm:$0xff]
    %v2027 = vld [vmem:[%s6 + $0xf78] sm:$0xff]
    %v2028 = vld [vmem:[%s6 + $0xf80] sm:$0xff]
    %v2029 = vld [vmem:[%s6 + $0xf88] sm:$0xff]
    %v2030 = vld [vmem:[%s6 + $0xf90] sm:$0xff]
    %v2031 = vld [vmem:[%s6 + $0xf98] sm:$0xff]
    %v2032 = vld [vmem:[%s6 + $0xfa0] sm:$0xff]
    %v2033 = vld [vmem:[%s6 + $0xfa8] sm:$0xff]
    %v2034 = vld [vmem:[%s6 + $0xfb0] sm:$0xff]
    %v2035 = vld [vmem:[%s6 + $0xfb8] sm:$0xff]
    %v2036 = vld [vmem:[%s6 + $0xfc0] sm:$0xff]
    %v2037 = vld [vmem:[%s6 + $0xfc8] sm:$0xff]
    %v2038 = vld [vmem:[%s6 + $0xfd0] sm:$0xff]
    %v2039 = vld [vmem:[%s6 + $0xfd8] sm:$0xff]
    %v2040 = vld [vmem:[%s6 + $0xfe0] sm:$0xff]
    %v2041 = vld [vmem:[%s6 + $0xfe8] sm:$0xff]
    %v2042 = vld [vmem:[%s6 + $0xff0] sm:$0xff]
    %v2043 = vld [vmem:[%s6 + $0xff8] sm:$0xff]
    %v2044 = vld [vmem:[%s7] sm:$0xf]
    %v2046 = vlaneseq
    %v2047 = vshrl.u32 %v2046, 7
    %v2048 = vsub.s32 0, %v2047
    %v2049 = vrot.slane %v2044, %v2048
    %v2050 = vlaneseq
    %v2051 = vshrl.u32 %v2050, 7
    %v2052 = vsub.s32 1, %v2051
    %v2053 = vrot.slane %v2044, %v2052
    %v2054 = vlaneseq
    %v2055 = vshrl.u32 %v2054, 7
    %v2056 = vsub.s32 2, %v2055
    %v2057 = vrot.slane %v2044, %v2056
    %v2058 = vlaneseq
    %v2059 = vshrl.u32 %v2058, 7
    %v2060 = vsub.s32 3, %v2059
    %v2061 = vrot.slane %v2044, %v2060
    %2066 = vmatprep.subr.mxu0 %v1533
    %2067 = vmatpush1.msra.mxu0 %v1532
    %2068 = vmatprep.subr.mxu0 %v1537
    %2069 = vmatpush1.msra.mxu0 %v1536
    %2070 = vmatprep.subr.mxu0 %v1541
    %2071 = vmatpush1.msra.mxu0 %v1540
    %2072 = vmatprep.subr.mxu0 %v1545
    %2073 = vmatpush1.msra.mxu0 %v1544
    %2074 = vmatprep.subr.mxu0 %v1549
    %2075 = vmatpush1.msra.mxu0 %v1548
    %2076 = vmatprep.subr.mxu0 %v1553
    %2077 = vmatpush1.msra.mxu0 %v1552
    %2078 = vmatprep.subr.mxu0 %v1557
    %2079 = vmatpush1.msra.mxu0 %v1556
    %2080 = vmatprep.subr.mxu0 %v1561
    %2081 = vmatpush1.msra.mxu0 %v1560
    %2082 = vmatprep.subr.mxu0 %v1565
    %2083 = vmatpush1.msra.mxu0 %v1564
    %2084 = vmatprep.subr.mxu0 %v1569
    %2085 = vmatpush1.msra.mxu0 %v1568
    %2086 = vmatprep.subr.mxu0 %v1573
    %2087 = vmatpush1.msra.mxu0 %v1572
    %2088 = vmatprep.subr.mxu0 %v1577
    %2089 = vmatpush1.msra.mxu0 %v1576
    %2090 = vmatprep.subr.mxu0 %v1581
    %2091 = vmatpush1.msra.mxu0 %v1580
    %2092 = vmatprep.subr.mxu0 %v1585
    %2093 = vmatpush1.msra.mxu0 %v1584
    %2094 = vmatprep.subr.mxu0 %v1589
    %2095 = vmatpush1.msra.mxu0 %v1588
    %2096 = vmatprep.subr.mxu0 %v1593
    %2097 = vmatpush1.msra.mxu0 %v1592
    %2098 = vmatprep.subr.mxu0 %v1597
    %2099 = vmatpush1.msra.mxu0 %v1596
    %2100 = vmatprep.subr.mxu0 %v1601
    %2101 = vmatpush1.msra.mxu0 %v1600
    %2102 = vmatprep.subr.mxu0 %v1605
    %2103 = vmatpush1.msra.mxu0 %v1604
    %2104 = vmatprep.subr.mxu0 %v1609
    %2105 = vmatpush1.msra.mxu0 %v1608
    %2106 = vmatprep.subr.mxu0 %v1613
    %2107 = vmatpush1.msra.mxu0 %v1612
    %2108 = vmatprep.subr.mxu0 %v1617
    %2109 = vmatpush1.msra.mxu0 %v1616
    %2110 = vmatprep.subr.mxu0 %v1621
    %2111 = vmatpush1.msra.mxu0 %v1620
    %2112 = vmatprep.subr.mxu0 %v1625
    %2113 = vmatpush1.msra.mxu0 %v1624
    %2114 = vmatprep.subr.mxu0 %v1629
    %2115 = vmatpush1.msra.mxu0 %v1628
    %2116 = vmatprep.subr.mxu0 %v1633
    %2117 = vmatpush1.msra.mxu0 %v1632
    %2118 = vmatprep.subr.mxu0 %v1637
    %2119 = vmatpush1.msra.mxu0 %v1636
    %2120 = vmatprep.subr.mxu0 %v1641
    %2121 = vmatpush1.msra.mxu0 %v1640
    %2122 = vmatprep.subr.mxu0 %v1645
    %2123 = vmatpush1.msra.mxu0 %v1644
    %2124 = vmatprep.subr.mxu0 %v1649
    %2125 = vmatpush1.msra.mxu0 %v1648
    %2126 = vmatprep.subr.mxu0 %v1653
    %2127 = vmatpush1.msra.mxu0 %v1652
    %2128 = vmatprep.subr.mxu0 %v1657
    %2129 = vmatpush1.msra.mxu0 %v1656
    %2130 = vmatprep.mubr.f32.mxu0 %v1317
    %2131 = vmatmul.mubr.f32.gmra.mrb[0].mxu0 %v1315
    %v2132 = vpop.f32.mrb[0].mxu0
    %v2133 = vadd.f32 %v2049, %v2132
    %v2134 = vpop.f32.mrb[0].mxu0
    %v2135 = vadd.f32 %v2053, %v2134
    %2136 = vdwg.mxu0
    %2137 = vmatprep.subr.mxu0 %v1661
    %2138 = vmatpush1.msra.mxu0 %v1660
    %2139 = vmatprep.subr.mxu0 %v1665
    %2140 = vmatpush1.msra.mxu0 %v1664
    %2141 = vmatprep.subr.mxu0 %v1669
    %2142 = vmatpush1.msra.mxu0 %v1668
    %2143 = vmatprep.subr.mxu0 %v1673
    %2144 = vmatpush1.msra.mxu0 %v1672
    %2145 = vmatprep.subr.mxu0 %v1677
    %2146 = vmatpush1.msra.mxu0 %v1676
    %2147 = vmatprep.subr.mxu0 %v1681
    %2148 = vmatpush1.msra.mxu0 %v1680
    %2149 = vmatprep.subr.mxu0 %v1685
    %2150 = vmatpush1.msra.mxu0 %v1684
    %2151 = vmatprep.subr.mxu0 %v1689
    %2152 = vmatpush1.msra.mxu0 %v1688
    %2153 = vmatprep.subr.mxu0 %v1693
    %2154 = vmatpush1.msra.mxu0 %v1692
    %2155 = vmatprep.subr.mxu0 %v1697
    %2156 = vmatpush1.msra.mxu0 %v1696
    %2157 = vmatprep.subr.mxu0 %v1701
    %2158 = vmatpush1.msra.mxu0 %v1700
    %2159 = vmatprep.subr.mxu0 %v1705
    %2160 = vmatpush1.msra.mxu0 %v1704
    %2161 = vmatprep.subr.mxu0 %v1709
    %2162 = vmatpush1.msra.mxu0 %v1708
    %2163 = vmatprep.subr.mxu0 %v1713
    %2164 = vmatpush1.msra.mxu0 %v1712
    %2165 = vmatprep.subr.mxu0 %v1717
    %2166 = vmatpush1.msra.mxu0 %v1716
    %2167 = vmatprep.subr.mxu0 %v1721
    %2168 = vmatpush1.msra.mxu0 %v1720
    %2169 = vmatprep.subr.mxu0 %v1725
    %2170 = vmatpush1.msra.mxu0 %v1724
    %2171 = vmatprep.subr.mxu0 %v1729
    %2172 = vmatpush1.msra.mxu0 %v1728
    %2173 = vmatprep.subr.mxu0 %v1733
    %2174 = vmatpush1.msra.mxu0 %v1732
    %2175 = vmatprep.subr.mxu0 %v1737
    %2176 = vmatpush1.msra.mxu0 %v1736
    %2177 = vmatprep.subr.mxu0 %v1741
    %2178 = vmatpush1.msra.mxu0 %v1740
    %2179 = vmatprep.subr.mxu0 %v1745
    %2180 = vmatpush1.msra.mxu0 %v1744
    %2181 = vmatprep.subr.mxu0 %v1749
    %2182 = vmatpush1.msra.mxu0 %v1748
    %2183 = vmatprep.subr.mxu0 %v1753
    %2184 = vmatpush1.msra.mxu0 %v1752
    %2185 = vmatprep.subr.mxu0 %v1757
    %2186 = vmatpush1.msra.mxu0 %v1756
    %2187 = vmatprep.subr.mxu0 %v1761
    %2188 = vmatpush1.msra.mxu0 %v1760
    %2189 = vmatprep.subr.mxu0 %v1765
    %2190 = vmatpush1.msra.mxu0 %v1764
    %2191 = vmatprep.subr.mxu0 %v1769
    %2192 = vmatpush1.msra.mxu0 %v1768
    %2193 = vmatprep.subr.mxu0 %v1773
    %2194 = vmatpush1.msra.mxu0 %v1772
    %2195 = vmatprep.subr.mxu0 %v1777
    %2196 = vmatpush1.msra.mxu0 %v1776
    %2197 = vmatprep.subr.mxu0 %v1781
    %2198 = vmatpush1.msra.mxu0 %v1780
    %2199 = vmatprep.subr.mxu0 %v1785
    %2200 = vmatpush1.msra.mxu0 %v1784
    %2201 = vmatprep.mubr.f32.mxu0 %v1388
    %2202 = vmatmul.mubr.f32.gmra.mrb[0].mxu0 %v1386
    %v2203 = vpop.f32.mrb[0].mxu0
    %v2204 = vadd.f32 %v2133, %v2203
    %v2205 = vpop.f32.mrb[0].mxu0
    %v2206 = vadd.f32 %v2135, %v2205
    %2207 = vdwg.mxu0
    %2208 = vmatprep.subr.mxu0 %v1789
    %2209 = vmatpush1.msra.mxu0 %v1788
    %2210 = vmatprep.subr.mxu0 %v1793
    %2211 = vmatpush1.msra.mxu0 %v1792
    %2212 = vmatprep.subr.mxu0 %v1797
    %2213 = vmatpush1.msra.mxu0 %v1796
    %2214 = vmatprep.subr.mxu0 %v1801
    %2215 = vmatpush1.msra.mxu0 %v1800
    %2216 = vmatprep.subr.mxu0 %v1805
    %2217 = vmatpush1.msra.mxu0 %v1804
    %2218 = vmatprep.subr.mxu0 %v1809
    %2219 = vmatpush1.msra.mxu0 %v1808
    %2220 = vmatprep.subr.mxu0 %v1813
    %2221 = vmatpush1.msra.mxu0 %v1812
    %2222 = vmatprep.subr.mxu0 %v1817
    %2223 = vmatpush1.msra.mxu0 %v1816
    %2224 = vmatprep.subr.mxu0 %v1821
    %2225 = vmatpush1.msra.mxu0 %v1820
    %2226 = vmatprep.subr.mxu0 %v1825
    %2227 = vmatpush1.msra.mxu0 %v1824
    %2228 = vmatprep.subr.mxu0 %v1829
    %2229 = vmatpush1.msra.mxu0 %v1828
    %2230 = vmatprep.subr.mxu0 %v1833
    %2231 = vmatpush1.msra.mxu0 %v1832
    %2232 = vmatprep.subr.mxu0 %v1837
    %2233 = vmatpush1.msra.mxu0 %v1836
    %2234 = vmatprep.subr.mxu0 %v1841
    %2235 = vmatpush1.msra.mxu0 %v1840
    %2236 = vmatprep.subr.mxu0 %v1845
    %2237 = vmatpush1.msra.mxu0 %v1844
    %2238 = vmatprep.subr.mxu0 %v1849
    %2239 = vmatpush1.msra.mxu0 %v1848
    %2240 = vmatprep.subr.mxu0 %v1853
    %2241 = vmatpush1.msra.mxu0 %v1852
    %2242 = vmatprep.subr.mxu0 %v1857
    %2243 = vmatpush1.msra.mxu0 %v1856
    %2244 = vmatprep.subr.mxu0 %v1861
    %2245 = vmatpush1.msra.mxu0 %v1860
    %2246 = vmatprep.subr.mxu0 %v1865
    %2247 = vmatpush1.msra.mxu0 %v1864
    %2248 = vmatprep.subr.mxu0 %v1869
    %2249 = vmatpush1.msra.mxu0 %v1868
    %2250 = vmatprep.subr.mxu0 %v1873
    %2251 = vmatpush1.msra.mxu0 %v1872
    %2252 = vmatprep.subr.mxu0 %v1877
    %2253 = vmatpush1.msra.mxu0 %v1876
    %2254 = vmatprep.subr.mxu0 %v1881
    %2255 = vmatpush1.msra.mxu0 %v1880
    %2256 = vmatprep.subr.mxu0 %v1885
    %2257 = vmatpush1.msra.mxu0 %v1884
    %2258 = vmatprep.subr.mxu0 %v1889
    %2259 = vmatpush1.msra.mxu0 %v1888
    %2260 = vmatprep.subr.mxu0 %v1893
    %2261 = vmatpush1.msra.mxu0 %v1892
    %2262 = vmatprep.subr.mxu0 %v1897
    %2263 = vmatpush1.msra.mxu0 %v1896
    %2264 = vmatprep.subr.mxu0 %v1901
    %2265 = vmatpush1.msra.mxu0 %v1900
    %2266 = vmatprep.subr.mxu0 %v1905
    %2267 = vmatpush1.msra.mxu0 %v1904
    %2268 = vmatprep.subr.mxu0 %v1909
    %2269 = vmatpush1.msra.mxu0 %v1908
    %2270 = vmatprep.subr.mxu0 %v1913
    %2271 = vmatpush1.msra.mxu0 %v1912
    %2272 = vmatprep.mubr.f32.mxu0 %v1459
    %2273 = vmatmul.mubr.f32.gmra.mrb[0].mxu0 %v1457
    %v2274 = vpop.f32.mrb[0].mxu0
    %v2275 = vadd.f32 %v2204, %v2274
    %v2276 = vpop.f32.mrb[0].mxu0
    %v2277 = vadd.f32 %v2206, %v2276
    %2278 = vdwg.mxu0
    %2279 = vmatprep.subr.mxu0 %v1917
    %2280 = vmatpush1.msra.mxu0 %v1916
    %2281 = vmatprep.subr.mxu0 %v1921
    %2282 = vmatpush1.msra.mxu0 %v1920
    %2283 = vmatprep.subr.mxu0 %v1925
    %2284 = vmatpush1.msra.mxu0 %v1924
    %2285 = vmatprep.subr.mxu0 %v1929
    %2286 = vmatpush1.msra.mxu0 %v1928
    %2287 = vmatprep.subr.mxu0 %v1933
    %2288 = vmatpush1.msra.mxu0 %v1932
    %2289 = vmatprep.subr.mxu0 %v1937
    %2290 = vmatpush1.msra.mxu0 %v1936
    %2291 = vmatprep.subr.mxu0 %v1941
    %2292 = vmatpush1.msra.mxu0 %v1940
    %2293 = vmatprep.subr.mxu0 %v1945
    %2294 = vmatpush1.msra.mxu0 %v1944
    %2295 = vmatprep.subr.mxu0 %v1949
    %2296 = vmatpush1.msra.mxu0 %v1948
    %2297 = vmatprep.subr.mxu0 %v1953
    %2298 = vmatpush1.msra.mxu0 %v1952
    %2299 = vmatprep.subr.mxu0 %v1957
    %2300 = vmatpush1.msra.mxu0 %v1956
    %2301 = vmatprep.subr.mxu0 %v1961
    %2302 = vmatpush1.msra.mxu0 %v1960
    %2303 = vmatprep.subr.mxu0 %v1965
    %2304 = vmatpush1.msra.mxu0 %v1964
    %2305 = vmatprep.subr.mxu0 %v1969
    %2306 = vmatpush1.msra.mxu0 %v1968
    %2307 = vmatprep.subr.mxu0 %v1973
    %2308 = vmatpush1.msra.mxu0 %v1972
    %2309 = vmatprep.subr.mxu0 %v1977
    %2310 = vmatpush1.msra.mxu0 %v1976
    %2311 = vmatprep.subr.mxu0 %v1981
    %2312 = vmatpush1.msra.mxu0 %v1980
    %2313 = vmatprep.subr.mxu0 %v1985
    %2314 = vmatpush1.msra.mxu0 %v1984
    %2315 = vmatprep.subr.mxu0 %v1989
    %2316 = vmatpush1.msra.mxu0 %v1988
    %2317 = vmatprep.subr.mxu0 %v1993
    %2318 = vmatpush1.msra.mxu0 %v1992
    %2319 = vmatprep.subr.mxu0 %v1997
    %2320 = vmatpush1.msra.mxu0 %v1996
    %2321 = vmatprep.subr.mxu0 %v2001
    %2322 = vmatpush1.msra.mxu0 %v2000
    %2323 = vmatprep.subr.mxu0 %v2005
    %2324 = vmatpush1.msra.mxu0 %v2004
    %2325 = vmatprep.subr.mxu0 %v2009
    %2326 = vmatpush1.msra.mxu0 %v2008
    %2327 = vmatprep.subr.mxu0 %v2013
    %2328 = vmatpush1.msra.mxu0 %v2012
    %2329 = vmatprep.subr.mxu0 %v2017
    %2330 = vmatpush1.msra.mxu0 %v2016
    %2331 = vmatprep.subr.mxu0 %v2021
    %2332 = vmatpush1.msra.mxu0 %v2020
    %2333 = vmatprep.subr.mxu0 %v2025
    %2334 = vmatpush1.msra.mxu0 %v2024
    %2335 = vmatprep.subr.mxu0 %v2029
    %2336 = vmatpush1.msra.mxu0 %v2028
    %2337 = vmatprep.subr.mxu0 %v2033
    %2338 = vmatpush1.msra.mxu0 %v2032
    %2339 = vmatprep.subr.mxu0 %v2037
    %2340 = vmatpush1.msra.mxu0 %v2036
    %2341 = vmatprep.subr.mxu0 %v2041
    %2342 = vmatpush1.msra.mxu0 %v2040
    %2343 = vmatprep.mubr.f32.mxu0 %v1530
    %2344 = vmatmul.mubr.f32.gmra.mrb[0].mxu0 %v1528
    %v2345 = vpop.f32.mrb[0].mxu0
    %v2346 = vadd.f32 %v2275, %v2345
    %v2347 = vpop.f32.mrb[0].mxu0
    %v2348 = vadd.f32 %v2277, %v2347
    %2349 = vdwg.mxu0
    %2350 = vmatprep.subr.mxu0 %v1535
    %2351 = vmatpush1.msra.mxu0 %v1534
    %2352 = vmatprep.subr.mxu0 %v1539
    %2353 = vmatpush1.msra.mxu0 %v1538
    %2354 = vmatprep.subr.mxu0 %v1543
    %2355 = vmatpush1.msra.mxu0 %v1542
    %2356 = vmatprep.subr.mxu0 %v1547
    %2357 = vmatpush1.msra.mxu0 %v1546
    %2358 = vmatprep.subr.mxu0 %v1551
    %2359 = vmatpush1.msra.mxu0 %v1550
    %2360 = vmatprep.subr.mxu0 %v1555
    %2361 = vmatpush1.msra.mxu0 %v1554
    %2362 = vmatprep.subr.mxu0 %v1559
    %2363 = vmatpush1.msra.mxu0 %v1558
    %2364 = vmatprep.subr.mxu0 %v1563
    %2365 = vmatpush1.msra.mxu0 %v1562
    %2366 = vmatprep.subr.mxu0 %v1567
    %2367 = vmatpush1.msra.mxu0 %v1566
    %2368 = vmatprep.subr.mxu0 %v1571
    %2369 = vmatpush1.msra.mxu0 %v1570
    %2370 = vmatprep.subr.mxu0 %v1575
    %2371 = vmatpush1.msra.mxu0 %v1574
    %2372 = vmatprep.subr.mxu0 %v1579
    %2373 = vmatpush1.msra.mxu0 %v1578
    %2374 = vmatprep.subr.mxu0 %v1583
    %2375 = vmatpush1.msra.mxu0 %v1582
    %2376 = vmatprep.subr.mxu0 %v1587
    %2377 = vmatpush1.msra.mxu0 %v1586
    %2378 = vmatprep.subr.mxu0 %v1591
    %2379 = vmatpush1.msra.mxu0 %v1590
    %2380 = vmatprep.subr.mxu0 %v1595
    %2381 = vmatpush1.msra.mxu0 %v1594
    %2382 = vmatprep.subr.mxu0 %v1599
    %2383 = vmatpush1.msra.mxu0 %v1598
    %2384 = vmatprep.subr.mxu0 %v1603
    %2385 = vmatpush1.msra.mxu0 %v1602
    %2386 = vmatprep.subr.mxu0 %v1607
    %2387 = vmatpush1.msra.mxu0 %v1606
    %2388 = vmatprep.subr.mxu0 %v1611
    %2389 = vmatpush1.msra.mxu0 %v1610
    %2390 = vmatprep.subr.mxu0 %v1615
    %2391 = vmatpush1.msra.mxu0 %v1614
    %2392 = vmatprep.subr.mxu0 %v1619
    %2393 = vmatpush1.msra.mxu0 %v1618
    %2394 = vmatprep.subr.mxu0 %v1623
    %2395 = vmatpush1.msra.mxu0 %v1622
    %2396 = vmatprep.subr.mxu0 %v1627
    %2397 = vmatpush1.msra.mxu0 %v1626
    %2398 = vmatprep.subr.mxu0 %v1631
    %2399 = vmatpush1.msra.mxu0 %v1630
    %2400 = vmatprep.subr.mxu0 %v1635
    %2401 = vmatpush1.msra.mxu0 %v1634
    %2402 = vmatprep.subr.mxu0 %v1639
    %2403 = vmatpush1.msra.mxu0 %v1638
    %2404 = vmatprep.subr.mxu0 %v1643
    %2405 = vmatpush1.msra.mxu0 %v1642
    %2406 = vmatprep.subr.mxu0 %v1647
    %2407 = vmatpush1.msra.mxu0 %v1646
    %2408 = vmatprep.subr.mxu0 %v1651
    %2409 = vmatpush1.msra.mxu0 %v1650
    %2410 = vmatprep.subr.mxu0 %v1655
    %2411 = vmatpush1.msra.mxu0 %v1654
    %2412 = vmatprep.subr.mxu0 %v1659
    %2413 = vmatpush1.msra.mxu0 %v1658
    %2414 = vmatprep.mubr.f32.mxu0 %v1317
    %2415 = vmatmul.mubr.f32.gmra.mrb[0].mxu0 %v1315
    %v2416 = vpop.f32.mrb[0].mxu0
    %v2417 = vadd.f32 %v2057, %v2416
    %v2418 = vpop.f32.mrb[0].mxu0
    %v2419 = vadd.f32 %v2061, %v2418
    %2420 = vdwg.mxu0
    %2421 = vmatprep.subr.mxu0 %v1663
    %2422 = vmatpush1.msra.mxu0 %v1662
    %2423 = vmatprep.subr.mxu0 %v1667
    %2424 = vmatpush1.msra.mxu0 %v1666
    %2425 = vmatprep.subr.mxu0 %v1671
    %2426 = vmatpush1.msra.mxu0 %v1670
    %2427 = vmatprep.subr.mxu0 %v1675
    %2428 = vmatpush1.msra.mxu0 %v1674
    %2429 = vmatprep.subr.mxu0 %v1679
    %2430 = vmatpush1.msra.mxu0 %v1678
    %2431 = vmatprep.subr.mxu0 %v1683
    %2432 = vmatpush1.msra.mxu0 %v1682
    %2433 = vmatprep.subr.mxu0 %v1687
    %2434 = vmatpush1.msra.mxu0 %v1686
    %2435 = vmatprep.subr.mxu0 %v1691
    %2436 = vmatpush1.msra.mxu0 %v1690
    %2437 = vmatprep.subr.mxu0 %v1695
    %2438 = vmatpush1.msra.mxu0 %v1694
    %2439 = vmatprep.subr.mxu0 %v1699
    %2440 = vmatpush1.msra.mxu0 %v1698
    %2441 = vmatprep.subr.mxu0 %v1703
    %2442 = vmatpush1.msra.mxu0 %v1702
    %2443 = vmatprep.subr.mxu0 %v1707
    %2444 = vmatpush1.msra.mxu0 %v1706
    %2445 = vmatprep.subr.mxu0 %v1711
    %2446 = vmatpush1.msra.mxu0 %v1710
    %2447 = vmatprep.subr.mxu0 %v1715
    %2448 = vmatpush1.msra.mxu0 %v1714
    %2449 = vmatprep.subr.mxu0 %v1719
    %2450 = vmatpush1.msra.mxu0 %v1718
    %2451 = vmatprep.subr.mxu0 %v1723
    %2452 = vmatpush1.msra.mxu0 %v1722
    %2453 = vmatprep.subr.mxu0 %v1727
    %2454 = vmatpush1.msra.mxu0 %v1726
    %2455 = vmatprep.subr.mxu0 %v1731
    %2456 = vmatpush1.msra.mxu0 %v1730
    %2457 = vmatprep.subr.mxu0 %v1735
    %2458 = vmatpush1.msra.mxu0 %v1734
    %2459 = vmatprep.subr.mxu0 %v1739
    %2460 = vmatpush1.msra.mxu0 %v1738
    %2461 = vmatprep.subr.mxu0 %v1743
    %2462 = vmatpush1.msra.mxu0 %v1742
    %2463 = vmatprep.subr.mxu0 %v1747
    %2464 = vmatpush1.msra.mxu0 %v1746
    %2465 = vmatprep.subr.mxu0 %v1751
    %2466 = vmatpush1.msra.mxu0 %v1750
    %2467 = vmatprep.subr.mxu0 %v1755
    %2468 = vmatpush1.msra.mxu0 %v1754
    %2469 = vmatprep.subr.mxu0 %v1759
    %2470 = vmatpush1.msra.mxu0 %v1758
    %2471 = vmatprep.subr.mxu0 %v1763
    %2472 = vmatpush1.msra.mxu0 %v1762
    %2473 = vmatprep.subr.mxu0 %v1767
    %2474 = vmatpush1.msra.mxu0 %v1766
    %2475 = vmatprep.subr.mxu0 %v1771
    %2476 = vmatpush1.msra.mxu0 %v1770
    %2477 = vmatprep.subr.mxu0 %v1775
    %2478 = vmatpush1.msra.mxu0 %v1774
    %2479 = vmatprep.subr.mxu0 %v1779
    %2480 = vmatpush1.msra.mxu0 %v1778
    %2481 = vmatprep.subr.mxu0 %v1783
    %2482 = vmatpush1.msra.mxu0 %v1782
    %2483 = vmatprep.subr.mxu0 %v1787
    %2484 = vmatpush1.msra.mxu0 %v1786
    %2485 = vmatprep.mubr.f32.mxu0 %v1388
    %2486 = vmatmul.mubr.f32.gmra.mrb[0].mxu0 %v1386
    %v2487 = vpop.f32.mrb[0].mxu0
    %v2488 = vadd.f32 %v2417, %v2487
    %v2489 = vpop.f32.mrb[0].mxu0
    %v2490 = vadd.f32 %v2419, %v2489
    %2491 = vdwg.mxu0
    %2492 = vmatprep.subr.mxu0 %v1791
    %2493 = vmatpush1.msra.mxu0 %v1790
    %2494 = vmatprep.subr.mxu0 %v1795
    %2495 = vmatpush1.msra.mxu0 %v1794
    %2496 = vmatprep.subr.mxu0 %v1799
    %2497 = vmatpush1.msra.mxu0 %v1798
    %2498 = vmatprep.subr.mxu0 %v1803
    %2499 = vmatpush1.msra.mxu0 %v1802
    %2500 = vmatprep.subr.mxu0 %v1807
    %2501 = vmatpush1.msra.mxu0 %v1806
    %2502 = vmatprep.subr.mxu0 %v1811
    %2503 = vmatpush1.msra.mxu0 %v1810
    %2504 = vmatprep.subr.mxu0 %v1815
    %2505 = vmatpush1.msra.mxu0 %v1814
    %2506 = vmatprep.subr.mxu0 %v1819
    %2507 = vmatpush1.msra.mxu0 %v1818
    %2508 = vmatprep.subr.mxu0 %v1823
    %2509 = vmatpush1.msra.mxu0 %v1822
    %2510 = vmatprep.subr.mxu0 %v1827
    %2511 = vmatpush1.msra.mxu0 %v1826
    %2512 = vmatprep.subr.mxu0 %v1831
    %2513 = vmatpush1.msra.mxu0 %v1830
    %2514 = vmatprep.subr.mxu0 %v1835
    %2515 = vmatpush1.msra.mxu0 %v1834
    %2516 = vmatprep.subr.mxu0 %v1839
    %2517 = vmatpush1.msra.mxu0 %v1838
    %2518 = vmatprep.subr.mxu0 %v1843
    %2519 = vmatpush1.msra.mxu0 %v1842
    %2520 = vmatprep.subr.mxu0 %v1847
    %2521 = vmatpush1.msra.mxu0 %v1846
    %2522 = vmatprep.subr.mxu0 %v1851
    %2523 = vmatpush1.msra.mxu0 %v1850
    %2524 = vmatprep.subr.mxu0 %v1855
    %2525 = vmatpush1.msra.mxu0 %v1854
    %2526 = vmatprep.subr.mxu0 %v1859
    %2527 = vmatpush1.msra.mxu0 %v1858
    %2528 = vmatprep.subr.mxu0 %v1863
    %2529 = vmatpush1.msra.mxu0 %v1862
    %2530 = vmatprep.subr.mxu0 %v1867
    %2531 = vmatpush1.msra.mxu0 %v1866
    %2532 = vmatprep.subr.mxu0 %v1871
    %2533 = vmatpush1.msra.mxu0 %v1870
    %2534 = vmatprep.subr.mxu0 %v1875
    %2535 = vmatpush1.msra.mxu0 %v1874
    %2536 = vmatprep.subr.mxu0 %v1879
    %2537 = vmatpush1.msra.mxu0 %v1878
    %2538 = vmatprep.subr.mxu0 %v1883
    %2539 = vmatpush1.msra.mxu0 %v1882
    %2540 = vmatprep.subr.mxu0 %v1887
    %2541 = vmatpush1.msra.mxu0 %v1886
    %2542 = vmatprep.subr.mxu0 %v1891
    %2543 = vmatpush1.msra.mxu0 %v1890
    %2544 = vmatprep.subr.mxu0 %v1895
    %2545 = vmatpush1.msra.mxu0 %v1894
    %2546 = vmatprep.subr.mxu0 %v1899
    %2547 = vmatpush1.msra.mxu0 %v1898
    %2548 = vmatprep.subr.mxu0 %v1903
    %2549 = vmatpush1.msra.mxu0 %v1902
    %2550 = vmatprep.subr.mxu0 %v1907
    %2551 = vmatpush1.msra.mxu0 %v1906
    %2552 = vmatprep.subr.mxu0 %v1911
    %2553 = vmatpush1.msra.mxu0 %v1910
    %2554 = vmatprep.subr.mxu0 %v1915
    %2555 = vmatpush1.msra.mxu0 %v1914
    %2556 = vmatprep.mubr.f32.mxu0 %v1459
    %2557 = vmatmul.mubr.f32.gmra.mrb[0].mxu0 %v1457
    %v2558 = vpop.f32.mrb[0].mxu0
    %v2559 = vadd.f32 %v2488, %v2558
    %v2560 = vpop.f32.mrb[0].mxu0
    %v2561 = vadd.f32 %v2490, %v2560
    %2562 = vdwg.mxu0
    %2563 = vmatprep.subr.mxu0 %v1919
    %2564 = vmatpush1.msra.mxu0 %v1918
    %2565 = vmatprep.subr.mxu0 %v1923
    %2566 = vmatpush1.msra.mxu0 %v1922
    %2567 = vmatprep.subr.mxu0 %v1927
    %2568 = vmatpush1.msra.mxu0 %v1926
    %2569 = vmatprep.subr.mxu0 %v1931
    %2570 = vmatpush1.msra.mxu0 %v1930
    %2571 = vmatprep.subr.mxu0 %v1935
    %2572 = vmatpush1.msra.mxu0 %v1934
    %2573 = vmatprep.subr.mxu0 %v1939
    %2574 = vmatpush1.msra.mxu0 %v1938
    %2575 = vmatprep.subr.mxu0 %v1943
    %2576 = vmatpush1.msra.mxu0 %v1942
    %2577 = vmatprep.subr.mxu0 %v1947
    %2578 = vmatpush1.msra.mxu0 %v1946
    %2579 = vmatprep.subr.mxu0 %v1951
    %2580 = vmatpush1.msra.mxu0 %v1950
    %2581 = vmatprep.subr.mxu0 %v1955
    %2582 = vmatpush1.msra.mxu0 %v1954
    %2583 = vmatprep.subr.mxu0 %v1959
    %2584 = vmatpush1.msra.mxu0 %v1958
    %2585 = vmatprep.subr.mxu0 %v1963
    %2586 = vmatpush1.msra.mxu0 %v1962
    %2587 = vmatprep.subr.mxu0 %v1967
    %2588 = vmatpush1.msra.mxu0 %v1966
    %2589 = vmatprep.subr.mxu0 %v1971
    %2590 = vmatpush1.msra.mxu0 %v1970
    %2591 = vmatprep.subr.mxu0 %v1975
    %2592 = vmatpush1.msra.mxu0 %v1974
    %2593 = vmatprep.subr.mxu0 %v1979
    %2594 = vmatpush1.msra.mxu0 %v1978
    %2595 = vmatprep.subr.mxu0 %v1983
    %2596 = vmatpush1.msra.mxu0 %v1982
    %2597 = vmatprep.subr.mxu0 %v1987
    %2598 = vmatpush1.msra.mxu0 %v1986
    %2599 = vmatprep.subr.mxu0 %v1991
    %2600 = vmatpush1.msra.mxu0 %v1990
    %2601 = vmatprep.subr.mxu0 %v1995
    %2602 = vmatpush1.msra.mxu0 %v1994
    %2603 = vmatprep.subr.mxu0 %v1999
    %2604 = vmatpush1.msra.mxu0 %v1998
    %2605 = vmatprep.subr.mxu0 %v2003
    %2606 = vmatpush1.msra.mxu0 %v2002
    %2607 = vmatprep.subr.mxu0 %v2007
    %2608 = vmatpush1.msra.mxu0 %v2006
    %2609 = vmatprep.subr.mxu0 %v2011
    %2610 = vmatpush1.msra.mxu0 %v2010
    %2611 = vmatprep.subr.mxu0 %v2015
    %2612 = vmatpush1.msra.mxu0 %v2014
    %2613 = vmatprep.subr.mxu0 %v2019
    %2614 = vmatpush1.msra.mxu0 %v2018
    %2615 = vmatprep.subr.mxu0 %v2023
    %2616 = vmatpush1.msra.mxu0 %v2022
    %2617 = vmatprep.subr.mxu0 %v2027
    %2618 = vmatpush1.msra.mxu0 %v2026
    %2619 = vmatprep.subr.mxu0 %v2031
    %2620 = vmatpush1.msra.mxu0 %v2030
    %2621 = vmatprep.subr.mxu0 %v2035
    %2622 = vmatpush1.msra.mxu0 %v2034
    %2623 = vmatprep.subr.mxu0 %v2039
    %2624 = vmatpush1.msra.mxu0 %v2038
    %2625 = vmatprep.subr.mxu0 %v2043
    %2626 = vmatpush1.msra.mxu0 %v2042
    %2627 = vmatprep.mubr.f32.mxu0 %v1530
    %2628 = vmatmul.mubr.f32.gmra.mrb[0].mxu0 %v1528
    %v2629 = vpop.f32.mrb[0].mxu0
    %v2630 = vadd.f32 %v2559, %v2629
    %v2631 = vpop.f32.mrb[0].mxu0
    %v2632 = vadd.f32 %v2561, %v2631
    %2633 = vdwg.mxu0
    %v2634 = vmax.f32 %v2346, 0.0
    %v2635 = vmax.f32 %v2348, 0.0
    %v2636 = vmax.f32 %v2630, 0.0
    %v2637 = vmax.f32 %v2632, 0.0
    %v2638 = vld [vmem:[%s8] sm:$0xff]
    %v2639 = vld [vmem:[%s8 + $0x8] sm:$0xff]
    %v2640 = vld [vmem:[%s8 + $0x10] sm:$0xff]
    %v2641 = vld [vmem:[%s8 + $0x18] sm:$0xff]
    %v2642 = vld [vmem:[%s8 + $0x20] sm:$0xff]
    %v2643 = vld [vmem:[%s8 + $0x28] sm:$0xff]
    %v2644 = vld [vmem:[%s8 + $0x30] sm:$0xff]
    %v2645 = vld [vmem:[%s8 + $0x38] sm:$0xff]
    %v2646 = vld [vmem:[%s8 + $0x40] sm:$0xff]
    %v2647 = vld [vmem:[%s8 + $0x48] sm:$0xff]
    %v2648 = vld [vmem:[%s8 + $0x50] sm:$0xff]
    %v2649 = vld [vmem:[%s8 + $0x58] sm:$0xff]
    %v2650 = vld [vmem:[%s8 + $0x60] sm:$0xff]
    %v2651 = vld [vmem:[%s8 + $0x68] sm:$0xff]
    %v2652 = vld [vmem:[%s8 + $0x70] sm:$0xff]
    %v2653 = vld [vmem:[%s8 + $0x78] sm:$0xff]
    %v2654 = vld [vmem:[%s8 + $0x80] sm:$0xff]
    %v2655 = vld [vmem:[%s8 + $0x88] sm:$0xff]
    %v2656 = vld [vmem:[%s8 + $0x90] sm:$0xff]
    %v2657 = vld [vmem:[%s8 + $0x98] sm:$0xff]
    %v2658 = vld [vmem:[%s8 + $0xa0] sm:$0xff]
    %v2659 = vld [vmem:[%s8 + $0xa8] sm:$0xff]
    %v2660 = vld [vmem:[%s8 + $0xb0] sm:$0xff]
    %v2661 = vld [vmem:[%s8 + $0xb8] sm:$0xff]
    %v2662 = vld [vmem:[%s8 + $0xc0] sm:$0xff]
    %v2663 = vld [vmem:[%s8 + $0xc8] sm:$0xff]
    %v2664 = vld [vmem:[%s8 + $0xd0] sm:$0xff]
    %v2665 = vld [vmem:[%s8 + $0xd8] sm:$0xff]
    %v2666 = vld [vmem:[%s8 + $0xe0] sm:$0xff]
    %v2667 = vld [vmem:[%s8 + $0xe8] sm:$0xff]
    %v2668 = vld [vmem:[%s8 + $0xf0] sm:$0xff]
    %v2669 = vld [vmem:[%s8 + $0xf8] sm:$0xff]
    %v2670 = vld [vmem:[%s8 + $0x100] sm:$0xff]
    %v2671 = vld [vmem:[%s8 + $0x108] sm:$0xff]
    %v2672 = vld [vmem:[%s8 + $0x110] sm:$0xff]
    %v2673 = vld [vmem:[%s8 + $0x118] sm:$0xff]
    %v2674 = vld [vmem:[%s8 + $0x120] sm:$0xff]
    %v2675 = vld [vmem:[%s8 + $0x128] sm:$0xff]
    %v2676 = vld [vmem:[%s8 + $0x130] sm:$0xff]
    %v2677 = vld [vmem:[%s8 + $0x138] sm:$0xff]
    %v2678 = vld [vmem:[%s8 + $0x140] sm:$0xff]
    %v2679 = vld [vmem:[%s8 + $0x148] sm:$0xff]
    %v2680 = vld [vmem:[%s8 + $0x150] sm:$0xff]
    %v2681 = vld [vmem:[%s8 + $0x158] sm:$0xff]
    %v2682 = vld [vmem:[%s8 + $0x160] sm:$0xff]
    %v2683 = vld [vmem:[%s8 + $0x168] sm:$0xff]
    %v2684 = vld [vmem:[%s8 + $0x170] sm:$0xff]
    %v2685 = vld [vmem:[%s8 + $0x178] sm:$0xff]
    %v2686 = vld [vmem:[%s8 + $0x180] sm:$0xff]
    %v2687 = vld [vmem:[%s8 + $0x188] sm:$0xff]
    %v2688 = vld [vmem:[%s8 + $0x190] sm:$0xff]
    %v2689 = vld [vmem:[%s8 + $0x198] sm:$0xff]
    %v2690 = vld [vmem:[%s8 + $0x1a0] sm:$0xff]
    %v2691 = vld [vmem:[%s8 + $0x1a8] sm:$0xff]
    %v2692 = vld [vmem:[%s8 + $0x1b0] sm:$0xff]
    %v2693 = vld [vmem:[%s8 + $0x1b8] sm:$0xff]
    %v2694 = vld [vmem:[%s8 + $0x1c0] sm:$0xff]
    %v2695 = vld [vmem:[%s8 + $0x1c8] sm:$0xff]
    %v2696 = vld [vmem:[%s8 + $0x1d0] sm:$0xff]
    %v2697 = vld [vmem:[%s8 + $0x1d8] sm:$0xff]
    %v2698 = vld [vmem:[%s8 + $0x1e0] sm:$0xff]
    %v2699 = vld [vmem:[%s8 + $0x1e8] sm:$0xff]
    %v2700 = vld [vmem:[%s8 + $0x1f0] sm:$0xff]
    %v2701 = vld [vmem:[%s8 + $0x1f8] sm:$0xff]
    %v2702 = vld [vmem:[%s9] sm:$0x1]
    %v2704 = vlaneseq
    %v2705 = vshrl.u32 %v2704, 7
    %v2706 = vsub.s32 0, %v2705
    %v2707 = vrot.slane %v2702, %v2706
    %2709 = vmatprep.subr.mxu0 0.0
    %2710 = vmatpush1.msra.mxu0 %v2638
    %2711 = vmatprep.subr.mxu0 0.0
    %2712 = vmatpush1.msra.mxu0 %v2639
    %2713 = vmatprep.subr.mxu0 0.0
    %2714 = vmatpush1.msra.mxu0 %v2640
    %2715 = vmatprep.subr.mxu0 0.0
    %2716 = vmatpush1.msra.mxu0 %v2641
    %2717 = vmatprep.subr.mxu0 0.0
    %2718 = vmatpush1.msra.mxu0 %v2642
    %2719 = vmatprep.subr.mxu0 0.0
    %2720 = vmatpush1.msra.mxu0 %v2643
    %2721 = vmatprep.subr.mxu0 0.0
    %2722 = vmatpush1.msra.mxu0 %v2644
    %2723 = vmatprep.subr.mxu0 0.0
    %2724 = vmatpush1.msra.mxu0 %v2645
    %2725 = vmatprep.subr.mxu0 0.0
    %2726 = vmatpush1.msra.mxu0 %v2646
    %2727 = vmatprep.subr.mxu0 0.0
    %2728 = vmatpush1.msra.mxu0 %v2647
    %2729 = vmatprep.subr.mxu0 0.0
    %2730 = vmatpush1.msra.mxu0 %v2648
    %2731 = vmatprep.subr.mxu0 0.0
    %2732 = vmatpush1.msra.mxu0 %v2649
    %2733 = vmatprep.subr.mxu0 0.0
    %2734 = vmatpush1.msra.mxu0 %v2650
    %2735 = vmatprep.subr.mxu0 0.0
    %2736 = vmatpush1.msra.mxu0 %v2651
    %2737 = vmatprep.subr.mxu0 0.0
    %2738 = vmatpush1.msra.mxu0 %v2652
    %2739 = vmatprep.subr.mxu0 0.0
    %2740 = vmatpush1.msra.mxu0 %v2653
    %2741 = vmatprep.subr.mxu0 0.0
    %2742 = vmatpush1.msra.mxu0 %v2654
    %2743 = vmatprep.subr.mxu0 0.0
    %2744 = vmatpush1.msra.mxu0 %v2655
    %2745 = vmatprep.subr.mxu0 0.0
    %2746 = vmatpush1.msra.mxu0 %v2656
    %2747 = vmatprep.subr.mxu0 0.0
    %2748 = vmatpush1.msra.mxu0 %v2657
    %2749 = vmatprep.subr.mxu0 0.0
    %2750 = vmatpush1.msra.mxu0 %v2658
    %2751 = vmatprep.subr.mxu0 0.0
    %2752 = vmatpush1.msra.mxu0 %v2659
    %2753 = vmatprep.subr.mxu0 0.0
    %2754 = vmatpush1.msra.mxu0 %v2660
    %2755 = vmatprep.subr.mxu0 0.0
    %2756 = vmatpush1.msra.mxu0 %v2661
    %2757 = vmatprep.subr.mxu0 0.0
    %2758 = vmatpush1.msra.mxu0 %v2662
    %2759 = vmatprep.subr.mxu0 0.0
    %2760 = vmatpush1.msra.mxu0 %v2663
    %2761 = vmatprep.subr.mxu0 0.0
    %2762 = vmatpush1.msra.mxu0 %v2664
    %2763 = vmatprep.subr.mxu0 0.0
    %2764 = vmatpush1.msra.mxu0 %v2665
    %2765 = vmatprep.subr.mxu0 0.0
    %2766 = vmatpush1.msra.mxu0 %v2666
    %2767 = vmatprep.subr.mxu0 0.0
    %2768 = vmatpush1.msra.mxu0 %v2667
    %2769 = vmatprep.subr.mxu0 0.0
    %2770 = vmatpush1.msra.mxu0 %v2668
    %2771 = vmatprep.subr.mxu0 0.0
    %2772 = vmatpush1.msra.mxu0 %v2669
    %2773 = vmatprep.mubr.f32.mxu0 %v2635
    %2774 = vmatmul.mubr.f32.gmra.mrb[0].mxu0 %v2634
    %v2775 = vpop.f32.mrb[0].mxu0
    %v2776 = vadd.f32 %v2707, %v2775
    %v2777 = vpop.f32.mrb[0].mxu0
    %2778 = vdwg.mxu0
    %2779 = vmatprep.subr.mxu0 0.0
    %2780 = vmatpush1.msra.mxu0 %v2670
    %2781 = vmatprep.subr.mxu0 0.0
    %2782 = vmatpush1.msra.mxu0 %v2671
    %2783 = vmatprep.subr.mxu0 0.0
    %2784 = vmatpush1.msra.mxu0 %v2672
    %2785 = vmatprep.subr.mxu0 0.0
    %2786 = vmatpush1.msra.mxu0 %v2673
    %2787 = vmatprep.subr.mxu0 0.0
    %2788 = vmatpush1.msra.mxu0 %v2674
    %2789 = vmatprep.subr.mxu0 0.0
    %2790 = vmatpush1.msra.mxu0 %v2675
    %2791 = vmatprep.subr.mxu0 0.0
    %2792 = vmatpush1.msra.mxu0 %v2676
    %2793 = vmatprep.subr.mxu0 0.0
    %2794 = vmatpush1.msra.mxu0 %v2677
    %2795 = vmatprep.subr.mxu0 0.0
    %2796 = vmatpush1.msra.mxu0 %v2678
    %2797 = vmatprep.subr.mxu0 0.0
    %2798 = vmatpush1.msra.mxu0 %v2679
    %2799 = vmatprep.subr.mxu0 0.0
    %2800 = vmatpush1.msra.mxu0 %v2680
    %2801 = vmatprep.subr.mxu0 0.0
    %2802 = vmatpush1.msra.mxu0 %v2681
    %2803 = vmatprep.subr.mxu0 0.0
    %2804 = vmatpush1.msra.mxu0 %v2682
    %2805 = vmatprep.subr.mxu0 0.0
    %2806 = vmatpush1.msra.mxu0 %v2683
    %2807 = vmatprep.subr.mxu0 0.0
    %2808 = vmatpush1.msra.mxu0 %v2684
    %2809 = vmatprep.subr.mxu0 0.0
    %2810 = vmatpush1.msra.mxu0 %v2685
    %2811 = vmatprep.subr.mxu0 0.0
    %2812 = vmatpush1.msra.mxu0 %v2686
    %2813 = vmatprep.subr.mxu0 0.0
    %2814 = vmatpush1.msra.mxu0 %v2687
    %2815 = vmatprep.subr.mxu0 0.0
    %2816 = vmatpush1.msra.mxu0 %v2688
    %2817 = vmatprep.subr.mxu0 0.0
    %2818 = vmatpush1.msra.mxu0 %v2689
    %2819 = vmatprep.subr.mxu0 0.0
    %2820 = vmatpush1.msra.mxu0 %v2690
    %2821 = vmatprep.subr.mxu0 0.0
    %2822 = vmatpush1.msra.mxu0 %v2691
    %2823 = vmatprep.subr.mxu0 0.0
    %2824 = vmatpush1.msra.mxu0 %v2692
    %2825 = vmatprep.subr.mxu0 0.0
    %2826 = vmatpush1.msra.mxu0 %v2693
    %2827 = vmatprep.subr.mxu0 0.0
    %2828 = vmatpush1.msra.mxu0 %v2694
    %2829 = vmatprep.subr.mxu0 0.0
    %2830 = vmatpush1.msra.mxu0 %v2695
    %2831 = vmatprep.subr.mxu0 0.0
    %2832 = vmatpush1.msra.mxu0 %v2696
    %2833 = vmatprep.subr.mxu0 0.0
    %2834 = vmatpush1.msra.mxu0 %v2697
    %2835 = vmatprep.subr.mxu0 0.0
    %2836 = vmatpush1.msra.mxu0 %v2698
    %2837 = vmatprep.subr.mxu0 0.0
    %2838 = vmatpush1.msra.mxu0 %v2699
    %2839 = vmatprep.subr.mxu0 0.0
    %2840 = vmatpush1.msra.mxu0 %v2700
    %2841 = vmatprep.subr.mxu0 0.0
    %2842 = vmatpush1.msra.mxu0 %v2701
    %2843 = vmatprep.mubr.f32.mxu0 %v2637
    %2844 = vmatmul.mubr.f32.gmra.mrb[0].mxu0 %v2636
    %v2845 = vpop.f32.mrb[0].mxu0
    %v2846 = vadd.f32 %v2776, %v2845
    %v2847 = vpop.f32.mrb[0].mxu0
    %2848 = vdwg.mxu0
    %v2849 = vmax.f32 %v2846, 0.0
    %v2850 = vld [vmem:[%s10] sm:$0xff]
    %v2851 = vld [vmem:[%s10 + $0x8] sm:$0xff]
    %v2852 = vld [vmem:[%s10 + $0x10] sm:$0xff]
    %v2853 = vld [vmem:[%s10 + $0x18] sm:$0xff]
    %v2854 = vld [vmem:[%s10 + $0x20] sm:$0xff]
    %v2855 = vld [vmem:[%s10 + $0x28] sm:$0xff]
    %v2856 = vld [vmem:[%s10 + $0x30] sm:$0xff]
    %v2857 = vld [vmem:[%s10 + $0x38] sm:$0xff]
    %v2858 = vld [vmem:[%s10 + $0x40] sm:$0xff]
    %v2859 = vld [vmem:[%s10 + $0x48] sm:$0xff]
    %v2860 = vld [vmem:[%s10 + $0x50] sm:$0xff]
    %v2861 = vld [vmem:[%s10 + $0x58] sm:$0xff]
    %v2862 = vld [vmem:[%s10 + $0x60] sm:$0xff]
    %v2863 = vld [vmem:[%s10 + $0x68] sm:$0xff]
    %v2864 = vld [vmem:[%s10 + $0x70] sm:$0xff]
    %v2865 = vld [vmem:[%s10 + $0x78] sm:$0xff]
    %v2866 = vld [vmem:[%s11] sm:$0x1]
    %v2868 = vlaneseq
    %v2869 = vshrl.u32 %v2868, 7
    %v2870 = vsub.s32 0, %v2869
    %v2871 = vrot.slane %v2866, %v2870
    %2873 = vmatprep.subr.mxu0 0.0
    %2874 = vmatpush1.msra.mxu0 %v2850
    %2875 = vmatprep.subr.mxu0 0.0
    %2876 = vmatpush1.msra.mxu0 %v2851
    %2877 = vmatprep.subr.mxu0 0.0
    %2878 = vmatpush1.msra.mxu0 %v2852
    %2879 = vmatprep.subr.mxu0 0.0
    %2880 = vmatpush1.msra.mxu0 %v2853
    %2881 = vmatprep.subr.mxu0 0.0
    %2882 = vmatpush1.msra.mxu0 %v2854
    %2883 = vmatprep.subr.mxu0 0.0
    %2884 = vmatpush1.msra.mxu0 %v2855
    %2885 = vmatprep.subr.mxu0 0.0
    %2886 = vmatpush1.msra.mxu0 %v2856
    %2887 = vmatprep.subr.mxu0 0.0
    %2888 = vmatpush1.msra.mxu0 %v2857
    %2889 = vmatprep.subr.mxu0 0.0
    %2890 = vmatpush1.msra.mxu0 %v2858
    %2891 = vmatprep.subr.mxu0 0.0
    %2892 = vmatpush1.msra.mxu0 %v2859
    %2893 = vmatprep.subr.mxu0 0.0
    %2894 = vmatpush1.msra.mxu0 %v2860
    %2895 = vmatprep.subr.mxu0 0.0
    %2896 = vmatpush1.msra.mxu0 %v2861
    %2897 = vmatprep.subr.mxu0 0.0
    %2898 = vmatpush1.msra.mxu0 %v2862
    %2899 = vmatprep.subr.mxu0 0.0
    %2900 = vmatpush1.msra.mxu0 %v2863
    %2901 = vmatprep.subr.mxu0 0.0
    %2902 = vmatpush1.msra.mxu0 %v2864
    %2903 = vmatprep.subr.mxu0 0.0
    %2904 = vmatpush1.msra.mxu0 %v2865
    %2905 = vmatprep.subr.mxu0 0.0
    %2906 = vmatpush1.msra.mxu0 0.0
    %2907 = vmatprep.subr.mxu0 0.0
    %2908 = vmatpush1.msra.mxu0 0.0
    %2909 = vmatprep.subr.mxu0 0.0
    %2910 = vmatpush1.msra.mxu0 0.0
    %2911 = vmatprep.subr.mxu0 0.0
    %2912 = vmatpush1.msra.mxu0 0.0
    %2913 = vmatprep.subr.mxu0 0.0
    %2914 = vmatpush1.msra.mxu0 0.0
    %2915 = vmatprep.subr.mxu0 0.0
    %2916 = vmatpush1.msra.mxu0 0.0
    %2917 = vmatprep.subr.mxu0 0.0
    %2918 = vmatpush1.msra.mxu0 0.0
    %2919 = vmatprep.subr.mxu0 0.0
    %2920 = vmatpush1.msra.mxu0 0.0
    %2921 = vmatprep.subr.mxu0 0.0
    %2922 = vmatpush1.msra.mxu0 0.0
    %2923 = vmatprep.subr.mxu0 0.0
    %2924 = vmatpush1.msra.mxu0 0.0
    %2925 = vmatprep.subr.mxu0 0.0
    %2926 = vmatpush1.msra.mxu0 0.0
    %2927 = vmatprep.subr.mxu0 0.0
    %2928 = vmatpush1.msra.mxu0 0.0
    %2929 = vmatprep.subr.mxu0 0.0
    %2930 = vmatpush1.msra.mxu0 0.0
    %2931 = vmatprep.subr.mxu0 0.0
    %2932 = vmatpush1.msra.mxu0 0.0
    %2933 = vmatprep.subr.mxu0 0.0
    %2934 = vmatpush1.msra.mxu0 0.0
    %2935 = vmatprep.subr.mxu0 0.0
    %2936 = vmatpush1.msra.mxu0 0.0
    %2937 = vmatprep.mubr.f32.mxu0 0.0
    %2938 = vmatmul.mubr.f32.gmra.mrb[0].mxu0 %v2849
    %v2939 = vpop.f32.mrb[0].mxu0
    %v2940 = vadd.f32 %v2871, %v2939
    %v2941 = vpop.f32.mrb[0].mxu0
    %2942 = vdwg.mxu0
    %vm2943 = vcmask 132096
    %v2944 = vsel %vm2943, %v2940, -inf
    %2945 = vmax.xlane.f32.xlu0 %v2944
    %v2946 = vpop.xlane.xlu0 %2945
    %v2947 = vsub.f32 %v2940, %v2946
    %v2948 = vmul.f32 %v2947, 1.442695
    %v2949 = vpow.pop %v2948
    %v2950 = vsel %vm2943, %v2949, 0.0
    %2951 = vadd.xlane.f32.xlu0 %v2950
    %v2952 = vpop.xlane.xlu0 %2951
    %v2953 = vrcp.pop %v2952
    %v2954 = vmul.f32 %v2949, %v2953
    %2955 = vst.msk [vmem:[#allocation2] sm:$0x3] %vm2943, %v2954
    // Predicated region
    $region50: #{model_forward.1} parent=1 // pred_check
      _
    $region51: #{model_forward.1} parent=1 // pred_check_branch
      %2957 = sbr.rel (0) target = $region53
    $region52: #{model_forward.1} parent=1 // pred_region
      %s2959 = ssub.s32 32, 32
      %2960 = vsyncadd [#allocation3], %s2959
      %s2962 = sshll.u32 [#allocation2], 4
      %s2963 = int_to_ptr.vmem [resolvable:$true] %s2962
      %2965 = dma.vmem_to_hbm [thread:$0]  %s2963, 32, %s12, [#allocation3]
    $region53: #{model_forward.1} parent=1 // pred_fallthru
      _
    // Predicated region
    $region54: #{model_forward.1} parent=1 // pred_check
      _
    $region55: #{model_forward.1} parent=1 // pred_check_branch
      %2967 = sbr.rel (0) target = $region57
    $region56: #{model_forward.1} parent=1 // pred_region
      %2968 = dma.done [#allocation3], 32
    $region57: #{model_forward.1} parent=1 // pred_fallthru
      _
    %2969 = vsyncpa [#allocation3], 1

</llo_original>
